<compile_context>
chip_gen: v6e
topology: v6e:2x2x1
jax: 0.10.0
libtpu: 0.0.40
codegen_flags: <defaults>
</compile_context>

<pallas_src>
import jax
import jax.numpy as jnp
from jax.experimental import pallas as pl
from jax.experimental.pallas import tpu as pltpu

FEAT_DIM = 2048   # resnet50.fc.in_features
HIDDEN = 2048     # proj hidden width
PROJ_DIM = 512    # proj output width
TK = 512          # K-block for the (2048 x 2048) first proj matmul
FC_PAD = 128      # each fc head padded to a full 128-lane slab
N_HEADS = 2


def _nbytes(a):
    n = 1
    for d in a.shape:
        n *= int(d)
    return n * jnp.dtype(a.dtype).itemsize


def _compiler_params():
    # v7x has 64 MiB physical VMEM -> stay under 48 MiB; v5e/v6e have 128 MiB,
    # allow a deeper budget so the pipeliner has headroom.
    vmem_limit = 48 * 1024 * 1024
    try:
        info = pltpu.get_tpu_info()
        cap = getattr(info, "vmem_capacity_bytes", None)
        if cap:
            vmem_limit = min(100 * 1024 * 1024, int(cap) * 3 // 4)
    except Exception:
        pass
    return pltpu.CompilerParams(
        dimension_semantics=("parallel", "arbitrary"),
        vmem_limit_bytes=vmem_limit)


# ---------------------------------------------------------------------------
# Fused kernel: backbone stand-in + one proj head + one fc head + evidence
# grid = (head, k) : head is "parallel" (v7x megacore), k is the reduction
# over the 2048-wide input of the first proj layer ("arbitrary").
# ---------------------------------------------------------------------------
def _edl_kernel(x_ref, ws_ref, bs_ref,
                w12a_ref, s12a_ref, b12a_ref,
                wb_ref, sb_ref, bb_ref,
                wf_ref, bf_ref,
                out_ref,
                feat_sc, h_sc):
    k = pl.program_id(1)
    nk = pl.num_programs(1)

    @pl.when(k == 0)
    def _():
        # Backbone stand-in for `self.resnet(x).squeeze(2).squeeze(2)`:
        # global average pool over H*W + linear embedding into 2048 dims.
        x = x_ref[...].astype(jnp.float32)                    # (B, C, H*W)
        pooled = jnp.mean(x, axis=-1)                         # (B, C)
        feat = (jnp.dot(pooled, ws_ref[...],
                        preferred_element_type=jnp.float32) + bs_ref[...])
        feat_sc[...] = feat.astype(jnp.bfloat16)              # reused each k
        h_sc[...] = jnp.zeros_like(h_sc)

    # K-blocked first proj layer: int8 weight block -> bf16, f32 accumulate.
    start = pl.multiple_of(k * TK, TK)
    feat_blk = feat_sc[:, pl.ds(start, TK)]                   # (B, TK) bf16
    w_blk = w12a_ref[...].astype(jnp.float32).astype(jnp.bfloat16)
    h_sc[...] += jnp.dot(feat_blk, w_blk, preferred_element_type=jnp.float32)

    @pl.when(k == nk - 1)
    def _():
        # per-output-channel dequant scale + bias + ReLU, then the rest of the
        # head: (B,2048)@(2048,512) -> (B,512)@(512,128) -> exp(.)+1
        h = h_sc[...] * s12a_ref[...] + b12a_ref[...]          # (B, HIDDEN) f32
        h = jnp.maximum(h, 0.0).astype(jnp.bfloat16)
        wb = wb_ref[0].astype(jnp.float32).astype(jnp.bfloat16)
        p = jnp.dot(h, wb, preferred_element_type=jnp.float32)
        p = p * sb_ref[0] + bb_ref[0]                          # (B, PROJ) f32
        o = (jnp.dot(p.astype(jnp.bfloat16), wf_ref[0],
                     preferred_element_type=jnp.float32) + bf_ref[0])
        out_ref[...] = jnp.exp(o) + 1.0                        # (B, FC_PAD)


# ---------------------------------------------------------------------------
# pallas_call wrapper
# ---------------------------------------------------------------------------
def _edl_fused_call(x3, params):
    B, C, HW = x3.shape
    nk = FEAT_DIM // TK

    args = (x3, params["w_stem"], params["b_stem"],
            params["w12a_q"], params["s12a"], params["b12a"],
            params["wb_q"], params["sb"], params["bb"],
            params["wf"], params["bf"])

    in_specs = [
        pl.BlockSpec((B, C, HW), lambda hd, k: (0, 0, 0)),           # x (resident)
        pl.BlockSpec((C, FEAT_DIM), lambda hd, k: (0, 0)),           # w_stem
        pl.BlockSpec((1, FEAT_DIM), lambda hd, k: (0, 0)),           # b_stem
        pl.BlockSpec((TK, HIDDEN), lambda hd, k: (k, hd)),           # w12a int8 block
        pl.BlockSpec((1, HIDDEN), lambda hd, k: (0, hd)),            # s12a
        pl.BlockSpec((1, HIDDEN), lambda hd, k: (0, hd)),            # b12a
        pl.BlockSpec((1, HIDDEN, PROJ_DIM), lambda hd, k: (hd, 0, 0)),  # wb int8
        pl.BlockSpec((1, 1, PROJ_DIM), lambda hd, k: (hd, 0, 0)),    # sb
        pl.BlockSpec((1, 1, PROJ_DIM), lambda hd, k: (hd, 0, 0)),    # bb
        pl.BlockSpec((1, PROJ_DIM, FC_PAD), lambda hd, k: (hd, 0, 0)),  # wf bf16
        pl.BlockSpec((1, 1, FC_PAD), lambda hd, k: (hd, 0, 0)),      # bf
    ]
    out_spec = pl.BlockSpec((B, FC_PAD), lambda hd, k: (0, hd))

    flops = 2 * N_HEADS * B * (C * FEAT_DIM + FEAT_DIM * HIDDEN
                               + HIDDEN * PROJ_DIM + PROJ_DIM * FC_PAD)
    transcendentals = N_HEADS * B * FC_PAD
    bytes_accessed = sum(_nbytes(a) for a in args) + B * N_HEADS * FC_PAD * 4

    return pl.pallas_call(
        _edl_kernel,
        out_shape=jax.ShapeDtypeStruct((B, N_HEADS * FC_PAD), jnp.float32),
        grid_spec=pltpu.PrefetchScalarGridSpec(
            num_scalar_prefetch=0,
            grid=(N_HEADS, nk),
            in_specs=in_specs,
            out_specs=out_spec,
            scratch_shapes=[pltpu.VMEM((B, FEAT_DIM), jnp.bfloat16),   # feat
                            pltpu.VMEM((B, HIDDEN), jnp.float32)]),    # h acc
        compiler_params=_compiler_params(),
        cost_estimate=pl.CostEstimate(
            flops=int(flops),
            transcendentals=int(transcendentals),
            bytes_accessed=int(bytes_accessed)),
    )(*args)


# ---------------------------------------------------------------------------
# Parameter init (deterministic, PyTorch-nn.Linear-style uniform fan-in init),
# then fused / padded / quantized to the kernel's storage layout.
# ---------------------------------------------------------------------------
def _linear_init(key, fan_in, fan_out):
    kw, kb = jax.random.split(key)
    scale = 1.0 / float(fan_in) ** 0.5
    w = jax.random.uniform(kw, (fan_in, fan_out), jnp.float32, -scale, scale)
    b = jax.random.uniform(kb, (1, fan_out), jnp.float32, -scale, scale)
    return w, b


def _quantize_per_col(w):
    # Symmetric per-output-channel int8 quantization.  The scale is applied to
    # the f32 accumulator in the kernel, so the MXU only sees the raw codes.
    amax = jnp.max(jnp.abs(w), axis=-2, keepdims=True)
    scale = jnp.maximum(amax, 1e-8) / 127.0
    wq = jnp.clip(jnp.round(w / scale), -127, 127).astype(jnp.int8)
    return wq, scale.astype(jnp.float32)


def init_params(key, in_channels, n_classes):
    keys = jax.random.split(key, 7)
    w_stem, b_stem = _linear_init(keys[0], in_channels, FEAT_DIM)
    w_p1a, b_p1a = _linear_init(keys[1], FEAT_DIM, HIDDEN)
    w_p1b, b_p1b = _linear_init(keys[2], HIDDEN, PROJ_DIM)
    w_p2a, b_p2a = _linear_init(keys[3], FEAT_DIM, HIDDEN)
    w_p2b, b_p2b = _linear_init(keys[4], HIDDEN, PROJ_DIM)
    w_fc1, b_fc1 = _linear_init(keys[5], PROJ_DIM, 2 * n_classes)
    w_fc2, b_fc2 = _linear_init(keys[6], PROJ_DIM, 2 * n_classes)

    assert 2 * n_classes <= FC_PAD
    pad = FC_PAD - 2 * n_classes

    def pad_cols(a):
        return jnp.pad(a, ((0, 0), (0, pad)))

    # both proj first layers fused along N: (2048, 4096), int8 + per-col scale
    w12a = jnp.concatenate([w_p1a, w_p2a], axis=1)
    w12a_q, s12a = _quantize_per_col(w12a)
    b12a = jnp.concatenate([b_p1a, b_p2a], axis=1)

    # proj second layers stacked per head: (2, 2048, 512), int8 + scales
    wb = jnp.stack([w_p1b, w_p2b], axis=0)
    wb_q, sb = _quantize_per_col(wb)
    bb = jnp.stack([b_p1b, b_p2b], axis=0)

    # fc heads: tiny, keep bf16, pad to one full 128-lane slab each
    wf = jnp.stack([pad_cols(w_fc1), pad_cols(w_fc2)], axis=0).astype(jnp.bfloat16)
    bf = jnp.stack([pad_cols(b_fc1), pad_cols(b_fc2)], axis=0)

    kernel_params = {
        "w_stem": w_stem, "b_stem": b_stem,       # stem stays f32 (tiny)
        "w12a_q": w12a_q, "s12a": s12a, "b12a": b12a,
        "wb_q": wb_q, "sb": sb, "bb": bb,
        "wf": wf, "bf": bf,
    }
    ref_params = {
        "w_stem": w_stem, "b_stem": b_stem,
        "w_p1a": w_p1a, "b_p1a": b_p1a, "w_p1b": w_p1b, "b_p1b": b_p1b,
        "w_p2a": w_p2a, "b_p2a": b_p2a, "w_p2b": w_p2b, "b_p2b": b_p2b,
        "w_fc1": w_fc1, "b_fc1": b_fc1, "w_fc2": w_fc2, "b_fc2": b_fc2,
    }
    return kernel_params, ref_params


# ---------------------------------------------------------------------------
# Full forward (one fused Pallas kernel; split / un-pad in plain JAX)
# ---------------------------------------------------------------------------
def edl_forward(x, params, n_classes):
    B, C, H, W = x.shape
    x3 = x.reshape(B, C, H * W)            # free row-major view
    out = _edl_fused_call(x3, params)      # (B, 2 * FC_PAD)

    out1 = out[:, :2 * n_classes]                       # head 1 (un-padded)
    out2 = out[:, FC_PAD:FC_PAD + 2 * n_classes]        # head 2 (un-padded)
    return (out1[:, :n_classes], out1[:, n_classes:],
            out2[:, :n_classes], out2[:, n_classes:])


# Pure-JAX f32 reference (same math, no quantization) to gate the int8/bf16
# storage of the kernel weights.
def edl_reference(x, ref, n_classes):
    B, C, H, W = x.shape
    pooled = jnp.mean(x.reshape(B, C, H * W), axis=-1)
    feat = pooled @ ref["w_stem"] + ref["b_stem"]
    p1 = jnp.maximum(feat @ ref["w_p1a"] + ref["b_p1a"], 0.0) @ ref["w_p1b"] + ref["b_p1b"]
    p2 = jnp.maximum(feat @ ref["w_p2a"] + ref["b_p2a"], 0.0) @ ref["w_p2b"] + ref["b_p2b"]
    out1 = jnp.exp(p1 @ ref["w_fc1"] + ref["b_fc1"]) + 1.0
    out2 = jnp.exp(p2 @ ref["w_fc2"] + ref["b_fc2"]) + 1.0
    return (out1[:, :n_classes], out1[:, n_classes:],
            out2[:, :n_classes], out2[:, n_classes:])


if __name__ == "__main__":
    key = jax.random.PRNGKey(0)
    B, C, H, W = 2, 4, 16, 16
    n_classes = 4

    kx, kp = jax.random.split(key)
    x = jax.random.normal(kx, (B, C, H, W), jnp.float32)
    params, ref_params = init_params(kp, C, n_classes)

    outs = edl_forward(x, params, n_classes)
    outs = jax.block_until_ready(outs)
    alpha_in, beta_in, alpha_out, beta_out = outs

    assert alpha_in.shape == (B, n_classes)
    assert beta_in.shape == (B, n_classes)
    assert alpha_out.shape == (B, n_classes)
    assert beta_out.shape == (B, n_classes)
    # evidential outputs are exp(.) + 1, hence strictly > 1
    assert bool(jnp.all(alpha_in > 1.0)) and bool(jnp.all(beta_in > 1.0))
    assert bool(jnp.all(alpha_out > 1.0)) and bool(jnp.all(beta_out > 1.0))

    # int8-weight / bf16-activation kernel vs pure-JAX f32 reference
    refs = edl_reference(x, ref_params, n_classes)
    for got, want in zip(outs, refs):
        rel = jnp.max(jnp.abs(got - want) / jnp.maximum(jnp.abs(want), 1e-3))
        assert float(rel) < 0.05, f"quantized kernel diverged: rel_err={float(rel)}"

    print("KERNEL_OK")
</pallas_src>

<mosaic_0001>
module attributes {stable_mosaic.version = 11 : i64} {
  func.func @_edl_kernel(%arg0: i32, %arg1: i32, %arg2: memref<2x4x256xf32, #tpu.memory_space<vmem>>, %arg3: memref<4x2048xf32, #tpu.memory_space<vmem>>, %arg4: memref<1x2048xf32, #tpu.memory_space<vmem>>, %arg5: memref<512x2048xi8, #tpu.memory_space<vmem>>, %arg6: memref<1x2048xf32, #tpu.memory_space<vmem>>, %arg7: memref<1x2048xf32, #tpu.memory_space<vmem>>, %arg8: memref<1x2048x512xi8, #tpu.memory_space<vmem>>, %arg9: memref<1x1x512xf32, #tpu.memory_space<vmem>>, %arg10: memref<1x1x512xf32, #tpu.memory_space<vmem>>, %arg11: memref<1x512x128xbf16, #tpu.memory_space<vmem>>, %arg12: memref<1x1x128xf32, #tpu.memory_space<vmem>>, %arg13: memref<2x128xf32, #tpu.memory_space<vmem>>, %arg14: memref<2x2048xbf16, #tpu.memory_space<vmem>>, %arg15: memref<2x2048xf32, #tpu.memory_space<vmem>>) attributes {dimension_semantics = [#tpu.dimension_semantics<parallel>, #tpu.dimension_semantics<arbitrary>], iteration_bounds = array<i64: 2, 4>, scalar_prefetch = 0 : i64, scratch_operands = 2 : i64, tpu.core_type = #tpu.core_type<tc>, window_params = [{pipeline_mode = #tpu.pipeline_mode<synchronous>, transform_indices = @transform_0, window_bounds = array<i64: 2, 4, 256>}, {pipeline_mode = #tpu.pipeline_mode<synchronous>, transform_indices = @transform_1, window_bounds = array<i64: 4, 2048>}, {pipeline_mode = #tpu.pipeline_mode<synchronous>, transform_indices = @transform_2, window_bounds = array<i64: 1, 2048>}, {transform_indices = @transform_3, window_bounds = array<i64: 512, 2048>}, {transform_indices = @transform_4, window_bounds = array<i64: 1, 2048>}, {transform_indices = @transform_5, window_bounds = array<i64: 1, 2048>}, {transform_indices = @transform_6, window_bounds = array<i64: 1, 2048, 512>}, {transform_indices = @transform_7, window_bounds = array<i64: 1, 1, 512>}, {transform_indices = @transform_8, window_bounds = array<i64: 1, 1, 512>}, {transform_indices = @transform_9, window_bounds = array<i64: 1, 512, 128>}, {transform_indices = @transform_10, window_bounds = array<i64: 1, 1, 128>}, {transform_indices = @transform_11, window_bounds = array<i64: 2, 128>}]} {
    %c0_i32 = arith.constant 0 : i32
    %0 = arith.cmpi eq, %arg1, %c0_i32 : i32
    %1 = arith.extui %0 : i1 to i32
    %c0_i32_0 = arith.constant 0 : i32
    %2 = arith.cmpi ne, %1, %c0_i32_0 : i32
    scf.if %2 {
      %c0_8 = arith.constant 0 : index
      %c0_9 = arith.constant 0 : index
      %c0_10 = arith.constant 0 : index
      %17 = vector.load %arg2[%c0_8, %c0_9, %c0_10] : memref<2x4x256xf32, #tpu.memory_space<vmem>>, vector<2x4x256xf32>
      %cst_11 = arith.constant dense<0.000000e+00> : vector<2x4xf32>
      %18 = vector.multi_reduction <add>, %17, %cst_11 [2] : vector<2x4x256xf32> to vector<2x4xf32>
      %cst_12 = arith.constant 2.560000e+02 : f32
      %19 = vector.broadcast %cst_12 : f32 to vector<2x4xf32>
      %20 = arith.divf %18, %19 : vector<2x4xf32>
      %c0_13 = arith.constant 0 : index
      %c0_14 = arith.constant 0 : index
      %21 = vector.load %arg3[%c0_13, %c0_14] : memref<4x2048xf32, #tpu.memory_space<vmem>>, vector<4x2048xf32>
      %cst_15 = arith.constant dense<0.000000e+00> : vector<2x2048xf32>
      %22 = tpu.matmul %20, %21, %cst_15 {dimension_numbers = #tpu.dot_dimension_numbers<[1], [0], [0], [1], [0, 0, 1, 1], [], []>} : vector<2x4xf32>, vector<4x2048xf32>, vector<2x2048xf32> -> vector<2x2048xf32>
      %c0_16 = arith.constant 0 : index
      %c0_17 = arith.constant 0 : index
      %23 = vector.load %arg4[%c0_16, %c0_17] : memref<1x2048xf32, #tpu.memory_space<vmem>>, vector<1x2048xf32>
      %24 = vector.broadcast %23 : vector<1x2048xf32> to vector<2x2048xf32>
      %25 = arith.addf %22, %24 : vector<2x2048xf32>
      %26 = arith.truncf %25 : vector<2x2048xf32> to vector<2x2048xbf16>
      %c0_18 = arith.constant 0 : index
      %c0_19 = arith.constant 0 : index
      %27 = vector.load %arg14[%c0_18, %c0_19] : memref<2x2048xbf16, #tpu.memory_space<vmem>>, vector<2x2048xbf16>
      tpu.vector_store %arg14[%c0_18, %c0_19], %26 {strides = array<i32>} : memref<2x2048xbf16, #tpu.memory_space<vmem>>, vector<2x2048xbf16>,
      %cst_20 = arith.constant 0.000000e+00 : f32
      %28 = vector.broadcast %cst_20 : f32 to vector<2x2048xf32>
      %c0_21 = arith.constant 0 : index
      %c0_22 = arith.constant 0 : index
      %29 = vector.load %arg15[%c0_21, %c0_22] : memref<2x2048xf32, #tpu.memory_space<vmem>>, vector<2x2048xf32>
      tpu.vector_store %arg15[%c0_21, %c0_22], %28 {strides = array<i32>} : memref<2x2048xf32, #tpu.memory_space<vmem>>, vector<2x2048xf32>,
    } else {
    }
    %c512_i32 = arith.constant 512 : i32
    %3 = arith.muli %arg1, %c512_i32 : i32
    %4 = tpu.assume_multiple %3, 512 : i32
    %c0 = arith.constant 0 : index
    %5 = arith.index_cast %4 : i32 to index
    %6 = vector.load %arg14[%c0, %5] : memref<2x2048xbf16, #tpu.memory_space<vmem>>, vector<2x512xbf16>
    %c0_1 = arith.constant 0 : index
    %c0_2 = arith.constant 0 : index
    %7 = vector.load %arg5[%c0_1, %c0_2] : memref<512x2048xi8, #tpu.memory_space<vmem>>, vector<512x2048xi8>
    %8 = arith.sitofp %7 : vector<512x2048xi8> to vector<512x2048xf32>
    %9 = arith.truncf %8 : vector<512x2048xf32> to vector<512x2048xbf16>
    %c0_3 = arith.constant 0 : index
    %c0_4 = arith.constant 0 : index
    %10 = vector.load %arg15[%c0_3, %c0_4] : memref<2x2048xf32, #tpu.memory_space<vmem>>, vector<2x2048xf32>
    %cst = arith.constant dense<0.000000e+00> : vector<2x2048xf32>
    %11 = tpu.matmul %6, %9, %cst {dimension_numbers = #tpu.dot_dimension_numbers<[1], [0], [0], [1], [0, 0, 1, 1], [], []>} : vector<2x512xbf16>, vector<512x2048xbf16>, vector<2x2048xf32> -> vector<2x2048xf32>
    %12 = arith.addf %10, %11 : vector<2x2048xf32>
    %c0_5 = arith.constant 0 : index
    %c0_6 = arith.constant 0 : index
    %13 = vector.load %arg15[%c0_5, %c0_6] : memref<2x2048xf32, #tpu.memory_space<vmem>>, vector<2x2048xf32>
    tpu.vector_store %arg15[%c0_5, %c0_6], %12 {strides = array<i32>} : memref<2x2048xf32, #tpu.memory_space<vmem>>, vector<2x2048xf32>,
    %c3_i32 = arith.constant 3 : i32
    %14 = arith.cmpi eq, %arg1, %c3_i32 : i32
    %15 = arith.extui %14 : i1 to i32
    %c0_i32_7 = arith.constant 0 : i32
    %16 = arith.cmpi ne, %15, %c0_i32_7 : i32
    scf.if %16 {
      %c0_8 = arith.constant 0 : index
      %c0_9 = arith.constant 0 : index
      %17 = vector.load %arg15[%c0_8, %c0_9] : memref<2x2048xf32, #tpu.memory_space<vmem>>, vector<2x2048xf32>
      %c0_10 = arith.constant 0 : index
      %c0_11 = arith.constant 0 : index
      %18 = vector.load %arg6[%c0_10, %c0_11] : memref<1x2048xf32, #tpu.memory_space<vmem>>, vector<1x2048xf32>
      %19 = vector.broadcast %18 : vector<1x2048xf32> to vector<2x2048xf32>
      %20 = arith.mulf %17, %19 : vector<2x2048xf32>
      %c0_12 = arith.constant 0 : index
      %c0_13 = arith.constant 0 : index
      %21 = vector.load %arg7[%c0_12, %c0_13] : memref<1x2048xf32, #tpu.memory_space<vmem>>, vector<1x2048xf32>
      %22 = vector.broadcast %21 : vector<1x2048xf32> to vector<2x2048xf32>
      %23 = arith.addf %20, %22 : vector<2x2048xf32>
      %cst_14 = arith.constant 0.000000e+00 : f32
      %24 = vector.broadcast %cst_14 : f32 to vector<2x2048xf32>
      %25 = arith.maximumf %23, %24 : vector<2x2048xf32>
      %26 = arith.truncf %25 : vector<2x2048xf32> to vector<2x2048xbf16>
      %c0_15 = arith.constant 0 : index
      %c0_16 = arith.constant 0 : index
      %c0_17 = arith.constant 0 : index
      %27 = vector.load %arg8[%c0_15, %c0_16, %c0_17] : memref<1x2048x512xi8, #tpu.memory_space<vmem>>, vector<1x2048x512xi8>
      %28 = vector.shape_cast %27 : vector<1x2048x512xi8> to vector<2048x512xi8>
      %29 = arith.sitofp %28 : vector<2048x512xi8> to vector<2048x512xf32>
      %30 = arith.truncf %29 : vector<2048x512xf32> to vector<2048x512xbf16>
      %cst_18 = arith.constant dense<0.000000e+00> : vector<2x512xf32>
      %31 = tpu.matmul %26, %30, %cst_18 {dimension_numbers = #tpu.dot_dimension_numbers<[1], [0], [0], [1], [0, 0, 1, 1], [], []>} : vector<2x2048xbf16>, vector<2048x512xbf16>, vector<2x512xf32> -> vector<2x512xf32>
      %c0_19 = arith.constant 0 : index
      %c0_20 = arith.constant 0 : index
      %c0_21 = arith.constant 0 : index
      %32 = vector.load %arg9[%c0_19, %c0_20, %c0_21] : memref<1x1x512xf32, #tpu.memory_space<vmem>>, vector<1x1x512xf32>
      %33 = vector.shape_cast %32 : vector<1x1x512xf32> to vector<1x512xf32>
      %34 = vector.broadcast %33 : vector<1x512xf32> to vector<2x512xf32>
      %35 = arith.mulf %31, %34 : vector<2x512xf32>
      %c0_22 = arith.constant 0 : index
      %c0_23 = arith.constant 0 : index
      %c0_24 = arith.constant 0 : index
      %36 = vector.load %arg10[%c0_22, %c0_23, %c0_24] : memref<1x1x512xf32, #tpu.memory_space<vmem>>, vector<1x1x512xf32>
      %37 = vector.shape_cast %36 : vector<1x1x512xf32> to vector<1x512xf32>
      %38 = vector.broadcast %37 : vector<1x512xf32> to vector<2x512xf32>
      %39 = arith.addf %35, %38 : vector<2x512xf32>
      %40 = arith.truncf %39 : vector<2x512xf32> to vector<2x512xbf16>
      %c0_25 = arith.constant 0 : index
      %c0_26 = arith.constant 0 : index
      %c0_27 = arith.constant 0 : index
      %41 = vector.load %arg11[%c0_25, %c0_26, %c0_27] : memref<1x512x128xbf16, #tpu.memory_space<vmem>>, vector<1x512x128xbf16>
      %42 = vector.shape_cast %41 : vector<1x512x128xbf16> to vector<512x128xbf16>
      %cst_28 = arith.constant dense<0.000000e+00> : vector<2x128xf32>
      %43 = tpu.matmul %40, %42, %cst_28 {dimension_numbers = #tpu.dot_dimension_numbers<[1], [0], [0], [1], [0, 0, 1, 1], [], []>} : vector<2x512xbf16>, vector<512x128xbf16>, vector<2x128xf32> -> vector<2x128xf32>
      %c0_29 = arith.constant 0 : index
      %c0_30 = arith.constant 0 : index
      %c0_31 = arith.constant 0 : index
      %44 = vector.load %arg12[%c0_29, %c0_30, %c0_31] : memref<1x1x128xf32, #tpu.memory_space<vmem>>, vector<1x1x128xf32>
      %45 = vector.shape_cast %44 : vector<1x1x128xf32> to vector<1x128xf32>
      %46 = vector.broadcast %45 : vector<1x128xf32> to vector<2x128xf32>
      %47 = arith.addf %43, %46 : vector<2x128xf32>
      %48 = math.exp %47 : vector<2x128xf32>
      %cst_32 = arith.constant 1.000000e+00 : f32
      %49 = vector.broadcast %cst_32 : f32 to vector<2x128xf32>
      %50 = arith.addf %48, %49 : vector<2x128xf32>
      %c0_33 = arith.constant 0 : index
      %c0_34 = arith.constant 0 : index
      %51 = vector.load %arg13[%c0_33, %c0_34] : memref<2x128xf32, #tpu.memory_space<vmem>>, vector<2x128xf32>
      tpu.vector_store %arg13[%c0_33, %c0_34], %50 {strides = array<i32>} : memref<2x128xf32, #tpu.memory_space<vmem>>, vector<2x128xf32>,
    } else {
    }
    return
  }
  func.func @transform_0(%arg0: i32, %arg1: i32) -> (i32, i32, i32) {
    %c0_i32 = arith.constant 0 : i32
    %c0_i32_0 = arith.constant 0 : i32
    %c0_i32_1 = arith.constant 0 : i32
    %c0_i32_2 = arith.constant 0 : i32
    return %c0_i32, %c0_i32_0, %c0_i32_1 : i32, i32, i32
  }
  func.func @transform_1(%arg0: i32, %arg1: i32) -> (i32, i32) {
    %c0_i32 = arith.constant 0 : i32
    %c0_i32_0 = arith.constant 0 : i32
    %c0_i32_1 = arith.constant 0 : i32
    return %c0_i32, %c0_i32_0 : i32, i32
  }
  func.func @transform_2(%arg0: i32, %arg1: i32) -> (i32, i32) {
    %c0_i32 = arith.constant 0 : i32
    %c0_i32_0 = arith.constant 0 : i32
    %c0_i32_1 = arith.constant 0 : i32
    return %c0_i32, %c0_i32_0 : i32, i32
  }
  func.func @transform_3(%arg0: i32, %arg1: i32) -> (i32, i32) {
    %c0_i32 = arith.constant 0 : i32
    return %arg1, %arg0 : i32, i32
  }
  func.func @transform_4(%arg0: i32, %arg1: i32) -> (i32, i32) {
    %c0_i32 = arith.constant 0 : i32
    %c0_i32_0 = arith.constant 0 : i32
    return %c0_i32, %arg0 : i32, i32
  }
  func.func @transform_5(%arg0: i32, %arg1: i32) -> (i32, i32) {
    %c0_i32 = arith.constant 0 : i32
    %c0_i32_0 = arith.constant 0 : i32
    return %c0_i32, %arg0 : i32, i32
  }
  func.func @transform_6(%arg0: i32, %arg1: i32) -> (i32, i32, i32) {
    %c0_i32 = arith.constant 0 : i32
    %c0_i32_0 = arith.constant 0 : i32
    %c0_i32_1 = arith.constant 0 : i32
    return %arg0, %c0_i32, %c0_i32_0 : i32, i32, i32
  }
  func.func @transform_7(%arg0: i32, %arg1: i32) -> (i32, i32, i32) {
    %c0_i32 = arith.constant 0 : i32
    %c0_i32_0 = arith.constant 0 : i32
    %c0_i32_1 = arith.constant 0 : i32
    return %arg0, %c0_i32, %c0_i32_0 : i32, i32, i32
  }
  func.func @transform_8(%arg0: i32, %arg1: i32) -> (i32, i32, i32) {
    %c0_i32 = arith.constant 0 : i32
    %c0_i32_0 = arith.constant 0 : i32
    %c0_i32_1 = arith.constant 0 : i32
    return %arg0, %c0_i32, %c0_i32_0 : i32, i32, i32
  }
  func.func @transform_9(%arg0: i32, %arg1: i32) -> (i32, i32, i32) {
    %c0_i32 = arith.constant 0 : i32
    %c0_i32_0 = arith.constant 0 : i32
    %c0_i32_1 = arith.constant 0 : i32
    return %arg0, %c0_i32, %c0_i32_0 : i32, i32, i32
  }
  func.func @transform_10(%arg0: i32, %arg1: i32) -> (i32, i32, i32) {
    %c0_i32 = arith.constant 0 : i32
    %c0_i32_0 = arith.constant 0 : i32
    %c0_i32_1 = arith.constant 0 : i32
    return %arg0, %c0_i32, %c0_i32_0 : i32, i32, i32
  }
  func.func @transform_11(%arg0: i32, %arg1: i32) -> (i32, i32) {
    %c0_i32 = arith.constant 0 : i32
    %c0_i32_0 = arith.constant 0 : i32
    return %c0_i32, %arg0 : i32, i32
  }
}

</mosaic_0001>

<llo_original>
// kernel: tpu_custom_call.1
$region0: #{tpu_custom_call.1}
  #allocation0 [shape = 'u32[]', space=smem, size = 0x4, offset = 0x4, fixed_abs, tag = 'smem constant byte address 0x4 - core index']
  #allocation1 [shape = 'u32[144,128]{1,0:T(1,128)}', space=vmem, size = 0x12000, scoped, tag = 'internal scratch']
  #allocation2 [shape = 'bf16[2,2048]{1,0:T(2,128)(2,1)}', space=vmem, size = 0x2000, scoped, tag = 'scratch operand']
  #allocation3 [shape = 'f32[2,2048]{1,0:T(2,128)}', space=vmem, size = 0x4000, scoped, tag = 'scratch operand']
  %s0 = inlined_call_operand.hbm [shape: f32[2,4,256], index: 0, kind: input, shape index: {}]
  %s1 = inlined_call_operand.hbm [shape: f32[4,2048], index: 1, kind: input, shape index: {}]
  %s2 = inlined_call_operand.hbm [shape: f32[1,2048], index: 2, kind: input, shape index: {}]
  %s3 = inlined_call_operand.hbm [shape: s8[2048,4096], index: 3, kind: input, shape index: {}]
  %s4 = inlined_call_operand.hbm [shape: f32[1,4096], index: 4, kind: input, shape index: {}]
  %s5 = inlined_call_operand.hbm [shape: f32[1,4096], index: 5, kind: input, shape index: {}]
  %s6 = inlined_call_operand.hbm [shape: s8[2,2048,512], index: 6, kind: input, shape index: {}]
  %s7 = inlined_call_operand.hbm [shape: f32[2,1,512], index: 7, kind: input, shape index: {}]
  %s8 = inlined_call_operand.hbm [shape: f32[2,1,512], index: 8, kind: input, shape index: {}]
  %s9 = inlined_call_operand.hbm [shape: bf16[2,512,128], index: 9, kind: input, shape index: {}]
  %s10 = inlined_call_operand.hbm [shape: f32[2,1,128], index: 10, kind: input, shape index: {}]
  %s11 = inlined_call_operand.hbm [shape: f32[2,256], index: 11, kind: output, shape index: {}]
  %s12 = sld [smem:[#allocation0]]
  $region129: #{tpu_custom_call.1} parent=0
    _
  %s14 = ssub.s32 1, %s12
  %s15 = scalar_select 0, %s14, %s12
  $region1: #{tpu_custom_call.1} parent=0
    #allocation4 [shape = 'u8[8192]{0}', space=vmem, size = 0x2000, scoped, tag = 'input window, operand 0, single buffered']
    #allocation5 [shape = 's32[2]{0}', space=sflag, size = 0x8, scoped, tag = 'scoped memory for tpu_custom_call.1']
    #allocation6 [shape = 's32[2]{0}', space=sflag, size = 0x8, scoped, tag = 'scoped memory for tpu_custom_call.1']
    #allocation7 [shape = 'u8[32768]{0}', space=vmem, size = 0x8000, scoped, tag = 'input window, operand 1, single buffered']
    #allocation8 [shape = 's32[1]{0}', space=sflag, size = 0x4, scoped, tag = 'scoped memory for tpu_custom_call.1']
    #allocation9 [shape = 'u8[8192]{0}', space=vmem, size = 0x2000, scoped, tag = 'input window, operand 2, single buffered']
    #allocation10 [shape = 'u8[2097152]{0}', space=vmem, size = 0x200000, scoped, tag = 'input window, operand 3']
    #allocation11 [shape = 's32[2]{0}', space=sflag, size = 0x8, scoped, tag = 'scoped memory for tpu_custom_call.1']
    #allocation12 [shape = 'u8[16384]{0}', space=vmem, size = 0x4000, scoped, tag = 'input window, operand 4']
    #allocation13 [shape = 'u8[16384]{0}', space=vmem, size = 0x4000, scoped, tag = 'input window, operand 5']
    #allocation14 [shape = 's32[2]{0}', space=sflag, size = 0x8, scoped, tag = 'scoped memory for tpu_custom_call.1']
    #allocation15 [shape = 'u8[2097152]{0}', space=vmem, size = 0x200000, scoped, tag = 'input window, operand 6']
    #allocation16 [shape = 'u8[4096]{0}', space=vmem, size = 0x1000, scoped, tag = 'input window, operand 7']
    #allocation17 [shape = 's32[2]{0}', space=sflag, size = 0x8, scoped, tag = 'scoped memory for tpu_custom_call.1']
    #allocation18 [shape = 'u8[4096]{0}', space=vmem, size = 0x1000, scoped, tag = 'input window, operand 8']
    #allocation19 [shape = 'u8[262144]{0}', space=vmem, size = 0x40000, scoped, tag = 'input window, operand 9']
    #allocation20 [shape = 's32[2]{0}', space=sflag, size = 0x8, scoped, tag = 'scoped memory for tpu_custom_call.1']
    #allocation21 [shape = 'u8[1024]{0}', space=vmem, size = 0x400, scoped, tag = 'input window, operand 10']
    #allocation22 [shape = 'u8[2048]{0}', space=vmem, size = 0x800, scoped, tag = 'output window, operand 0']
    %16 = vsyncpa [#allocation5], 0
    %17 = vsyncpa [#allocation8], 0
    %18 = vsyncpa [#allocation11], 0
    %s19 = scalar_lea.sflag [#allocation11], 1
    %20 = vsyncpa %s19, 0
    %21 = vsyncpa [#allocation14], 0
    %s22 = scalar_lea.sflag [#allocation14], 1
    %23 = vsyncpa %s22, 0
    %24 = vsyncpa [#allocation17], 0
    %s25 = scalar_lea.sflag [#allocation17], 1
    %26 = vsyncpa %s25, 0
    %27 = vsyncpa [#allocation20], 0
    %s28 = scalar_lea.sflag [#allocation20], 1
    %29 = vsyncpa %s28, 0
    %30 = vsyncpa [#allocation6], 0
    %s31 = scalar_lea.sflag [#allocation6], 1
    %32 = vsyncpa %s31, 0
    loop: start=0, step=1, limit=10
    $region2: #{tpu_custom_call.1} parent=1 // loop_pre_header
      _
    $region3: #{tpu_custom_call.1} parent=1 // loop_header
      %s34 = sphi 0, %s38
      %p35 = scmp.ge.s32.totalorder %s34, 10
      %s41 = sphi 0, %s53
      %s42 = sphi 0, %s49
      %s43 = sphi 0, %s41
      %s44 = sphi 0, %s42
      %s45 = sphi 0, %s43
      %s46 = sphi 0, %s44
      %s54 = sphi 0, %s54
      %s56 = sphi 0, %s54
      %s57 = sphi 0, %s56
      %s71 = sphi 0, %s57
      %s75 = sphi 0, %s75
      %s77 = sphi 0, %s75
      %s78 = sphi 0, %s77
      %s92 = sphi 0, %s78
      %s96 = sphi 0, %s96
      %s98 = sphi 0, %s96
      %s99 = sphi 0, %s98
      %s113 = sphi 0, %s99
      %s121 = sphi 0, %s123
      %s124 = sphi 0, %s121
      %s125 = sphi 0, %s124
      %s141 = sphi 0, %s125
      %s147 = sphi 0, %s149
      %s150 = sphi 0, %s147
      %s151 = sphi 0, %s150
      %s167 = sphi 0, %s151
      %s173 = sphi 0, %s175
      %s176 = sphi 0, %s173
      %s177 = sphi 0, %s176
      %s193 = sphi 0, %s177
      %s199 = sphi 0, %s201
      %s202 = sphi 0, %s199
      %s203 = sphi 0, %s202
      %s219 = sphi 0, %s203
      %s225 = sphi 0, %s227
      %s228 = sphi 0, %s225
      %s229 = sphi 0, %s228
      %s245 = sphi 0, %s229
      %s251 = sphi 0, %s253
      %s254 = sphi 0, %s251
      %s255 = sphi 0, %s254
      %s271 = sphi 0, %s255
      %s277 = sphi 0, %s279
      %s280 = sphi 0, %s277
      %s281 = sphi 0, %s280
      %s297 = sphi 0, %s281
      %s303 = sphi 0, %s305
      %s306 = sphi 0, %s303
      %s307 = sphi 0, %s306
      %s323 = sphi 0, %s307
      %s329 = sphi 0, %s331
      %s332 = sphi 0, %s329
      %s333 = sphi 0, %s332
      %s349 = sphi 0, %s333
    $region4: #{tpu_custom_call.1} parent=1 // loop_header_branch
      %37 = sbr.rel (%p35) target = $region8
    $region5: #{tpu_custom_call.1} parent=1 // loop_body
      %s39 = ssub.s32 %s34, 1
      %s40 = ssub.s32 %s34, 2
      %s47 = sadd.s32 1, %s42
      %p48 = scmp.ge.s32.totalorder %s47, 4
      %s49 = scalar_select %p48, 0, %s47
      %s50 = sadd.s32 1, %s41
      %s51 = scalar_select %p48, %s50, %s41
      %p52 = scmp.ge.s32.totalorder %s51, 2
      %s53 = scalar_select %p52, 0, %s51
      %s55 = sadd.s32 %s54, 1
      %p58 = scmp.eq.s32.totalorder %s34, 7
      %p59 = scmp.ne.s32.totalorder %s54, %s56
      %p60 = scmp.eq.s32.totalorder %s34, 0
      %p61 = por %p59, %p60
      %p62 = scmp.ne.s32.totalorder %s54, %s56
      %p63 = scmp.eq.s32.totalorder %s39, 7
      %p64 = por %p62, %p63
      %p65 = scmp.ne.s32.totalorder %s56, %s57
      %p66 = scmp.eq.s32.totalorder %s39, 0
      %p67 = por %p65, %p66
      %p68 = scmp.ne.s32.totalorder %s56, %s57
      %p69 = scmp.eq.s32.totalorder %s40, 7
      %p70 = por %p68, %p69
      %p72 = scmp.ne.s32.totalorder %s57, %s71
      %p73 = scmp.eq.s32.totalorder %s40, 0
      %p74 = por %p72, %p73
      %s76 = sadd.s32 %s75, 1
      %p79 = scmp.eq.s32.totalorder %s34, 7
      %p80 = scmp.ne.s32.totalorder %s75, %s77
      %p81 = scmp.eq.s32.totalorder %s34, 0
      %p82 = por %p80, %p81
      %p83 = scmp.ne.s32.totalorder %s75, %s77
      %p84 = scmp.eq.s32.totalorder %s39, 7
      %p85 = por %p83, %p84
      %p86 = scmp.ne.s32.totalorder %s77, %s78
      %p87 = scmp.eq.s32.totalorder %s39, 0
      %p88 = por %p86, %p87
      %p89 = scmp.ne.s32.totalorder %s77, %s78
      %p90 = scmp.eq.s32.totalorder %s40, 7
      %p91 = por %p89, %p90
      %p93 = scmp.ne.s32.totalorder %s78, %s92
      %p94 = scmp.eq.s32.totalorder %s40, 0
      %p95 = por %p93, %p94
      %s97 = sadd.s32 %s96, 1
      %p100 = scmp.eq.s32.totalorder %s34, 7
      %p101 = scmp.ne.s32.totalorder %s96, %s98
      %p102 = scmp.eq.s32.totalorder %s34, 0
      %p103 = por %p101, %p102
      %p104 = scmp.ne.s32.totalorder %s96, %s98
      %p105 = scmp.eq.s32.totalorder %s39, 7
      %p106 = por %p104, %p105
      %p107 = scmp.ne.s32.totalorder %s98, %s99
      %p108 = scmp.eq.s32.totalorder %s39, 0
      %p109 = por %p107, %p108
      %p110 = scmp.ne.s32.totalorder %s98, %s99
      %p111 = scmp.eq.s32.totalorder %s40, 7
      %p112 = por %p110, %p111
      %p114 = scmp.ne.s32.totalorder %s99, %s113
      %p115 = scmp.eq.s32.totalorder %s40, 0
      %p116 = por %p114, %p115
      %s117 = ssub.s32 %s42, %s49
      %s118 = ssub.s32 %s41, %s53
      %s119 = sor.u32 %s117, %s118
      %p120 = scmp.eq.s32.totalorder %s119, 0
      %s122 = sadd.s32 %s121, 1
      %s123 = scalar_select %p120, %s121, %s122
      %p126 = pneg %p120
      %p127 = scmp.eq.s32.totalorder %s34, 7
      %p128 = por %p126, %p127
      %p129 = scmp.ne.s32.totalorder %s121, %s124
      %p130 = scmp.eq.s32.totalorder %s34, 0
      %p131 = por %p129, %p130
      %p132 = scmp.ne.s32.totalorder %s121, %s124
      %p133 = scmp.eq.s32.totalorder %s39, 7
      %p134 = por %p132, %p133
      %p135 = scmp.ne.s32.totalorder %s124, %s125
      %p136 = scmp.eq.s32.totalorder %s39, 0
      %p137 = por %p135, %p136
      %p138 = scmp.ne.s32.totalorder %s124, %s125
      %p139 = scmp.eq.s32.totalorder %s40, 7
      %p140 = por %p138, %p139
      %p142 = scmp.ne.s32.totalorder %s125, %s141
      %p143 = scmp.eq.s32.totalorder %s40, 0
      %p144 = por %p142, %p143
      %s145 = ssub.s32 %s41, %s53
      %p146 = scmp.eq.s32.totalorder %s145, 0
      %s148 = sadd.s32 %s147, 1
      %s149 = scalar_select %p146, %s147, %s148
      %p152 = pneg %p146
      %p153 = scmp.eq.s32.totalorder %s34, 7
      %p154 = por %p152, %p153
      %p155 = scmp.ne.s32.totalorder %s147, %s150
      %p156 = scmp.eq.s32.totalorder %s34, 0
      %p157 = por %p155, %p156
      %p158 = scmp.ne.s32.totalorder %s147, %s150
      %p159 = scmp.eq.s32.totalorder %s39, 7
      %p160 = por %p158, %p159
      %p161 = scmp.ne.s32.totalorder %s150, %s151
      %p162 = scmp.eq.s32.totalorder %s39, 0
      %p163 = por %p161, %p162
      %p164 = scmp.ne.s32.totalorder %s150, %s151
      %p165 = scmp.eq.s32.totalorder %s40, 7
      %p166 = por %p164, %p165
      %p168 = scmp.ne.s32.totalorder %s151, %s167
      %p169 = scmp.eq.s32.totalorder %s40, 0
      %p170 = por %p168, %p169
      %s171 = ssub.s32 %s41, %s53
      %p172 = scmp.eq.s32.totalorder %s171, 0
      %s174 = sadd.s32 %s173, 1
      %s175 = scalar_select %p172, %s173, %s174
      %p178 = pneg %p172
      %p179 = scmp.eq.s32.totalorder %s34, 7
      %p180 = por %p178, %p179
      %p181 = scmp.ne.s32.totalorder %s173, %s176
      %p182 = scmp.eq.s32.totalorder %s34, 0
      %p183 = por %p181, %p182
      %p184 = scmp.ne.s32.totalorder %s173, %s176
      %p185 = scmp.eq.s32.totalorder %s39, 7
      %p186 = por %p184, %p185
      %p187 = scmp.ne.s32.totalorder %s176, %s177
      %p188 = scmp.eq.s32.totalorder %s39, 0
      %p189 = por %p187, %p188
      %p190 = scmp.ne.s32.totalorder %s176, %s177
      %p191 = scmp.eq.s32.totalorder %s40, 7
      %p192 = por %p190, %p191
      %p194 = scmp.ne.s32.totalorder %s177, %s193
      %p195 = scmp.eq.s32.totalorder %s40, 0
      %p196 = por %p194, %p195
      %s197 = ssub.s32 %s41, %s53
      %p198 = scmp.eq.s32.totalorder %s197, 0
      %s200 = sadd.s32 %s199, 1
      %s201 = scalar_select %p198, %s199, %s200
      %p204 = pneg %p198
      %p205 = scmp.eq.s32.totalorder %s34, 7
      %p206 = por %p204, %p205
      %p207 = scmp.ne.s32.totalorder %s199, %s202
      %p208 = scmp.eq.s32.totalorder %s34, 0
      %p209 = por %p207, %p208
      %p210 = scmp.ne.s32.totalorder %s199, %s202
      %p211 = scmp.eq.s32.totalorder %s39, 7
      %p212 = por %p210, %p211
      %p213 = scmp.ne.s32.totalorder %s202, %s203
      %p214 = scmp.eq.s32.totalorder %s39, 0
      %p215 = por %p213, %p214
      %p216 = scmp.ne.s32.totalorder %s202, %s203
      %p217 = scmp.eq.s32.totalorder %s40, 7
      %p218 = por %p216, %p217
      %p220 = scmp.ne.s32.totalorder %s203, %s219
      %p221 = scmp.eq.s32.totalorder %s40, 0
      %p222 = por %p220, %p221
      %s223 = ssub.s32 %s41, %s53
      %p224 = scmp.eq.s32.totalorder %s223, 0
      %s226 = sadd.s32 %s225, 1
      %s227 = scalar_select %p224, %s225, %s226
      %p230 = pneg %p224
      %p231 = scmp.eq.s32.totalorder %s34, 7
      %p232 = por %p230, %p231
      %p233 = scmp.ne.s32.totalorder %s225, %s228
      %p234 = scmp.eq.s32.totalorder %s34, 0
      %p235 = por %p233, %p234
      %p236 = scmp.ne.s32.totalorder %s225, %s228
      %p237 = scmp.eq.s32.totalorder %s39, 7
      %p238 = por %p236, %p237
      %p239 = scmp.ne.s32.totalorder %s228, %s229
      %p240 = scmp.eq.s32.totalorder %s39, 0
      %p241 = por %p239, %p240
      %p242 = scmp.ne.s32.totalorder %s228, %s229
      %p243 = scmp.eq.s32.totalorder %s40, 7
      %p244 = por %p242, %p243
      %p246 = scmp.ne.s32.totalorder %s229, %s245
      %p247 = scmp.eq.s32.totalorder %s40, 0
      %p248 = por %p246, %p247
      %s249 = ssub.s32 %s41, %s53
      %p250 = scmp.eq.s32.totalorder %s249, 0
      %s252 = sadd.s32 %s251, 1
      %s253 = scalar_select %p250, %s251, %s252
      %p256 = pneg %p250
      %p257 = scmp.eq.s32.totalorder %s34, 7
      %p258 = por %p256, %p257
      %p259 = scmp.ne.s32.totalorder %s251, %s254
      %p260 = scmp.eq.s32.totalorder %s34, 0
      %p261 = por %p259, %p260
      %p262 = scmp.ne.s32.totalorder %s251, %s254
      %p263 = scmp.eq.s32.totalorder %s39, 7
      %p264 = por %p262, %p263
      %p265 = scmp.ne.s32.totalorder %s254, %s255
      %p266 = scmp.eq.s32.totalorder %s39, 0
      %p267 = por %p265, %p266
      %p268 = scmp.ne.s32.totalorder %s254, %s255
      %p269 = scmp.eq.s32.totalorder %s40, 7
      %p270 = por %p268, %p269
      %p272 = scmp.ne.s32.totalorder %s255, %s271
      %p273 = scmp.eq.s32.totalorder %s40, 0
      %p274 = por %p272, %p273
      %s275 = ssub.s32 %s41, %s53
      %p276 = scmp.eq.s32.totalorder %s275, 0
      %s278 = sadd.s32 %s277, 1
      %s279 = scalar_select %p276, %s277, %s278
      %p282 = pneg %p276
      %p283 = scmp.eq.s32.totalorder %s34, 7
      %p284 = por %p282, %p283
      %p285 = scmp.ne.s32.totalorder %s277, %s280
      %p286 = scmp.eq.s32.totalorder %s34, 0
      %p287 = por %p285, %p286
      %p288 = scmp.ne.s32.totalorder %s277, %s280
      %p289 = scmp.eq.s32.totalorder %s39, 7
      %p290 = por %p288, %p289
      %p291 = scmp.ne.s32.totalorder %s280, %s281
      %p292 = scmp.eq.s32.totalorder %s39, 0
      %p293 = por %p291, %p292
      %p294 = scmp.ne.s32.totalorder %s280, %s281
      %p295 = scmp.eq.s32.totalorder %s40, 7
      %p296 = por %p294, %p295
      %p298 = scmp.ne.s32.totalorder %s281, %s297
      %p299 = scmp.eq.s32.totalorder %s40, 0
      %p300 = por %p298, %p299
      %s301 = ssub.s32 %s41, %s53
      %p302 = scmp.eq.s32.totalorder %s301, 0
      %s304 = sadd.s32 %s303, 1
      %s305 = scalar_select %p302, %s303, %s304
      %p308 = pneg %p302
      %p309 = scmp.eq.s32.totalorder %s34, 7
      %p310 = por %p308, %p309
      %p311 = scmp.ne.s32.totalorder %s303, %s306
      %p312 = scmp.eq.s32.totalorder %s34, 0
      %p313 = por %p311, %p312
      %p314 = scmp.ne.s32.totalorder %s303, %s306
      %p315 = scmp.eq.s32.totalorder %s39, 7
      %p316 = por %p314, %p315
      %p317 = scmp.ne.s32.totalorder %s306, %s307
      %p318 = scmp.eq.s32.totalorder %s39, 0
      %p319 = por %p317, %p318
      %p320 = scmp.ne.s32.totalorder %s306, %s307
      %p321 = scmp.eq.s32.totalorder %s40, 7
      %p322 = por %p320, %p321
      %p324 = scmp.ne.s32.totalorder %s307, %s323
      %p325 = scmp.eq.s32.totalorder %s40, 0
      %p326 = por %p324, %p325
      %s327 = ssub.s32 %s41, %s53
      %p328 = scmp.eq.s32.totalorder %s327, 0
      %s330 = sadd.s32 %s329, 1
      %s331 = scalar_select %p328, %s329, %s330
      %p334 = pneg %p328
      %p335 = scmp.eq.s32.totalorder %s34, 7
      %p336 = por %p334, %p335
      %p337 = scmp.ne.s32.totalorder %s329, %s332
      %p338 = scmp.eq.s32.totalorder %s34, 0
      %p339 = por %p337, %p338
      %p340 = scmp.ne.s32.totalorder %s329, %s332
      %p341 = scmp.eq.s32.totalorder %s39, 7
      %p342 = por %p340, %p341
      %p343 = scmp.ne.s32.totalorder %s332, %s333
      %p344 = scmp.eq.s32.totalorder %s39, 0
      %p345 = por %p343, %p344
      %p346 = scmp.ne.s32.totalorder %s332, %s333
      %p347 = scmp.eq.s32.totalorder %s40, 7
      %p348 = por %p346, %p347
      %p350 = scmp.ne.s32.totalorder %s333, %s349
      %p351 = scmp.eq.s32.totalorder %s40, 0
      %p352 = por %p350, %p351
      %p353 = scmp.le.s32.totalorder 1, %s34
      %p354 = scmp.lt.s32.totalorder %s34, 9
      %p355 = pnand %p353, %p354
      %p356 = pneg %p355
      // Predicated region
      $region9: #{tpu_custom_call.1} parent=5 // pred_check
        _
      $region10: #{tpu_custom_call.1} parent=5 // pred_check_branch
        %358 = sbr.rel (%p355) target = $region12
      $region11: #{tpu_custom_call.1} parent=5 // pred_region
        %s359 = ssub.s32 %s34, 1
        // Predicated region
        $region13: #{tpu_custom_call.1} parent=11 // pred_check
          %p360 = pneg %p67
        $region14: #{tpu_custom_call.1} parent=11 // pred_check_branch
          %362 = sbr.rel (%p360) target = $region16
        $region15: #{tpu_custom_call.1} parent=11 // pred_region
          %s364 = ssub.s32 256, 256
          %365 = vsyncadd [#allocation5], %s364
          %s366 = sshll.u32 [#allocation4], 4
          %s367 = int_to_ptr.vmem [resolvable:$true] %s366
          %372 = dma.hbm_to_vmem [thread:$0]  %s0, 256, %s367, [#allocation5], 128, 128, 8
        $region16: #{tpu_custom_call.1} parent=11 // pred_fallthru
          _
        // Predicated region
        $region17: #{tpu_custom_call.1} parent=11 // pred_check
          %p373 = pneg %p88
        $region18: #{tpu_custom_call.1} parent=11 // pred_check_branch
          %375 = sbr.rel (%p373) target = $region20
        $region19: #{tpu_custom_call.1} parent=11 // pred_region
          %s377 = ssub.s32 1024, 1024
          %378 = vsyncadd [#allocation8], %s377
          %s380 = sshll.u32 [#allocation7], 4
          %s381 = int_to_ptr.vmem [resolvable:$true] %s380
          %383 = dma.hbm_to_vmem [thread:$0]  %s1, 1024, %s381, [#allocation8]
        $region20: #{tpu_custom_call.1} parent=11 // pred_fallthru
          _
        // Predicated region
        $region21: #{tpu_custom_call.1} parent=11 // pred_check
          %p384 = pneg %p109
        $region22: #{tpu_custom_call.1} parent=11 // pred_check_branch
          %386 = sbr.rel (%p384) target = $region24
        $region23: #{tpu_custom_call.1} parent=11 // pred_region
          %s388 = ssub.s32 256, 256
          %389 = vsyncadd [#allocation8], %s388
          %s391 = sshll.u32 [#allocation9], 4
          %s392 = int_to_ptr.vmem [resolvable:$true] %s391
          %394 = dma.hbm_to_vmem [thread:$0]  %s2, 256, %s392, [#allocation8]
        $region24: #{tpu_custom_call.1} parent=11 // pred_fallthru
          _
      $region12: #{tpu_custom_call.1} parent=5 // pred_fallthru
        _
      %p395 = scmp.lt.s32.totalorder %s34, 8
      // Predicated region
      $region25: #{tpu_custom_call.1} parent=5 // pred_check
        %p396 = pneg %p395
      $region26: #{tpu_custom_call.1} parent=5 // pred_check_branch
        %398 = sbr.rel (%p396) target = $region28
      $region27: #{tpu_custom_call.1} parent=5 // pred_region
        // Predicated region
        $region29: #{tpu_custom_call.1} parent=27 // pred_check
          %p399 = pneg %p131
        $region30: #{tpu_custom_call.1} parent=27 // pred_check_branch
          %401 = sbr.rel (%p399) target = $region32
        $region31: #{tpu_custom_call.1} parent=27 // pred_region
          %s402 = sand.u32 %s34, 1
          %s403 = scalar_lea.sflag [#allocation11], %s402
          %s404 = sand.u32 %s121, 1
          %s405 = smul.addr %s404, 2048
          %s406 = scalar_lea.vmem [#allocation10], %s405
          %s407 = smul.u32 16, %s42
          %s408 = smul.u32 16, %s41
          %s410 = ssub.s32 32768, 32768
          %411 = vsyncadd %s403, %s410
          %s412 = smul.addr %s407, 32
          %s413 = sadd.s32 %s408, %s412
          %s414 = smul.addr %s413, 128
          %s415 = scalar_lea.hbm %s3, %s414
          %s416 = sshll.u32 %s406, 4
          %s417 = int_to_ptr.vmem [resolvable:$true] %s416
          %422 = dma.hbm_to_vmem [thread:$0]  %s415, 32768, %s417, %s403, 4096, 2048, 128
        $region32: #{tpu_custom_call.1} parent=27 // pred_fallthru
          _
        // Predicated region
        $region33: #{tpu_custom_call.1} parent=27 // pred_check
          %p423 = pneg %p157
        $region34: #{tpu_custom_call.1} parent=27 // pred_check_branch
          %425 = sbr.rel (%p423) target = $region36
        $region35: #{tpu_custom_call.1} parent=27 // pred_region
          %s426 = sand.u32 %s34, 1
          %s427 = scalar_lea.sflag [#allocation11], %s426
          %s428 = sand.u32 %s147, 1
          %s429 = smul.addr %s428, 16
          %s430 = scalar_lea.vmem [#allocation12], %s429
          %s431 = smul.u32 16, %s41
          %s433 = ssub.s32 256, 256
          %434 = vsyncadd %s427, %s433
          %s435 = smul.addr %s431, 16
          %s436 = scalar_lea.hbm %s4, %s435
          %s438 = sshll.u32 %s430, 4
          %s439 = int_to_ptr.vmem [resolvable:$true] %s438
          %441 = dma.hbm_to_vmem [thread:$0]  %s436, 256, %s439, %s427
        $region36: #{tpu_custom_call.1} parent=27 // pred_fallthru
          _
        // Predicated region
        $region37: #{tpu_custom_call.1} parent=27 // pred_check
          %p442 = pneg %p183
        $region38: #{tpu_custom_call.1} parent=27 // pred_check_branch
          %444 = sbr.rel (%p442) target = $region40
        $region39: #{tpu_custom_call.1} parent=27 // pred_region
          %s445 = sand.u32 %s34, 1
          %s446 = scalar_lea.sflag [#allocation14], %s445
          %s447 = sand.u32 %s173, 1
          %s448 = smul.addr %s447, 16
          %s449 = scalar_lea.vmem [#allocation13], %s448
          %s450 = smul.u32 16, %s41
          %s452 = ssub.s32 256, 256
          %453 = vsyncadd %s446, %s452
          %s454 = smul.addr %s450, 16
          %s455 = scalar_lea.hbm %s5, %s454
          %s457 = sshll.u32 %s449, 4
          %s458 = int_to_ptr.vmem [resolvable:$true] %s457
          %460 = dma.hbm_to_vmem [thread:$0]  %s455, 256, %s458, %s446
        $region40: #{tpu_custom_call.1} parent=27 // pred_fallthru
          _
        // Predicated region
        $region41: #{tpu_custom_call.1} parent=27 // pred_check
          %p461 = pneg %p209
        $region42: #{tpu_custom_call.1} parent=27 // pred_check_branch
          %463 = sbr.rel (%p461) target = $region44
        $region43: #{tpu_custom_call.1} parent=27 // pred_region
          %s464 = sand.u32 %s34, 1
          %s465 = scalar_lea.sflag [#allocation14], %s464
          %s466 = sand.u32 %s199, 1
          %s467 = smul.addr %s466, 2048
          %s468 = scalar_lea.vmem [#allocation15], %s467
          %s470 = ssub.s32 32768, 32768
          %471 = vsyncadd %s465, %s470
          %s472 = smul.addr %s41, 256
          %s473 = smul.addr %s472, 128
          %s474 = scalar_lea.hbm %s6, %s473
          %s475 = sshll.u32 %s468, 4
          %s476 = int_to_ptr.vmem [resolvable:$true] %s475
          %481 = dma.hbm_to_vmem [thread:$0]  %s474, 32768, %s476, %s465, 512, 512, 32
        $region44: #{tpu_custom_call.1} parent=27 // pred_fallthru
          _
        // Predicated region
        $region45: #{tpu_custom_call.1} parent=27 // pred_check
          %p482 = pneg %p235
        $region46: #{tpu_custom_call.1} parent=27 // pred_check_branch
          %484 = sbr.rel (%p482) target = $region48
        $region47: #{tpu_custom_call.1} parent=27 // pred_region
          %s485 = sand.u32 %s34, 1
          %s486 = scalar_lea.sflag [#allocation17], %s485
          %s487 = sand.u32 %s225, 1
          %s488 = smul.addr %s487, 4
          %s489 = scalar_lea.vmem [#allocation16], %s488
          %s491 = ssub.s32 64, 64
          %492 = vsyncadd %s486, %s491
          %s493 = smul.addr %s41, 4
          %s494 = smul.addr %s493, 16
          %s495 = scalar_lea.hbm %s7, %s494
          %s497 = sshll.u32 %s489, 4
          %s498 = int_to_ptr.vmem [resolvable:$true] %s497
          %500 = dma.hbm_to_vmem [thread:$0]  %s495, 64, %s498, %s486
        $region48: #{tpu_custom_call.1} parent=27 // pred_fallthru
          _
        // Predicated region
        $region49: #{tpu_custom_call.1} parent=27 // pred_check
          %p501 = pneg %p261
        $region50: #{tpu_custom_call.1} parent=27 // pred_check_branch
          %503 = sbr.rel (%p501) target = $region52
        $region51: #{tpu_custom_call.1} parent=27 // pred_region
          %s504 = sand.u32 %s34, 1
          %s505 = scalar_lea.sflag [#allocation17], %s504
          %s506 = sand.u32 %s251, 1
          %s507 = smul.addr %s506, 4
          %s508 = scalar_lea.vmem [#allocation18], %s507
          %s510 = ssub.s32 64, 64
          %511 = vsyncadd %s505, %s510
          %s512 = smul.addr %s41, 4
          %s513 = smul.addr %s512, 16
          %s514 = scalar_lea.hbm %s8, %s513
          %s516 = sshll.u32 %s508, 4
          %s517 = int_to_ptr.vmem [resolvable:$true] %s516
          %519 = dma.hbm_to_vmem [thread:$0]  %s514, 64, %s517, %s505
        $region52: #{tpu_custom_call.1} parent=27 // pred_fallthru
          _
        // Predicated region
        $region53: #{tpu_custom_call.1} parent=27 // pred_check
          %p520 = pneg %p287
        $region54: #{tpu_custom_call.1} parent=27 // pred_check_branch
          %522 = sbr.rel (%p520) target = $region56
        $region55: #{tpu_custom_call.1} parent=27 // pred_region
          %s523 = sand.u32 %s34, 1
          %s524 = scalar_lea.sflag [#allocation20], %s523
          %s525 = sand.u32 %s277, 1
          %s526 = smul.addr %s525, 256
          %s527 = scalar_lea.vmem [#allocation19], %s526
          %s529 = ssub.s32 4096, 4096
          %530 = vsyncadd %s524, %s529
          %s531 = smul.addr %s41, 64
          %s532 = smul.addr %s531, 64
          %s533 = scalar_lea.hbm %s9, %s532
          %s534 = sshll.u32 %s527, 4
          %s535 = int_to_ptr.vmem [resolvable:$true] %s534
          %540 = dma.hbm_to_vmem [thread:$0]  %s533, 4096, %s535, %s524, 64, 64, 4
        $region56: #{tpu_custom_call.1} parent=27 // pred_fallthru
          _
        // Predicated region
        $region57: #{tpu_custom_call.1} parent=27 // pred_check
          %p541 = pneg %p313
        $region58: #{tpu_custom_call.1} parent=27 // pred_check_branch
          %543 = sbr.rel (%p541) target = $region60
        $region59: #{tpu_custom_call.1} parent=27 // pred_region
          %s544 = sand.u32 %s34, 1
          %s545 = scalar_lea.sflag [#allocation20], %s544
          %s546 = sand.u32 %s303, 1
          %s547 = scalar_lea.vmem [#allocation21], %s546
          %s549 = ssub.s32 16, 16
          %550 = vsyncadd %s545, %s549
          %s551 = smul.addr %s41, 16
          %s552 = scalar_lea.hbm %s10, %s551
          %s554 = sshll.u32 %s547, 4
          %s555 = int_to_ptr.vmem [resolvable:$true] %s554
          %557 = dma.hbm_to_vmem [thread:$0]  %s552, 16, %s555, %s545
        $region60: #{tpu_custom_call.1} parent=27 // pred_fallthru
          _
      $region28: #{tpu_custom_call.1} parent=5 // pred_fallthru
        _
      %p558 = scmp.le.s32.totalorder 1, %s34
      %p559 = scmp.lt.s32.totalorder %s34, 9
      %p560 = pnand %p558, %p559
      %p561 = pneg %p560
      // Predicated region
      $region61: #{tpu_custom_call.1} parent=5 // pred_check
        _
      $region62: #{tpu_custom_call.1} parent=5 // pred_check_branch
        %563 = sbr.rel (%p560) target = $region64
      $region63: #{tpu_custom_call.1} parent=5 // pred_region
        %s564 = ssub.s32 %s34, 1
        // Predicated region
        $region65: #{tpu_custom_call.1} parent=63 // pred_check
          %p565 = pneg %p67
        $region66: #{tpu_custom_call.1} parent=63 // pred_check_branch
          %567 = sbr.rel (%p565) target = $region68
        $region67: #{tpu_custom_call.1} parent=63 // pred_region
          %568 = dma.done [#allocation5], 256
        $region68: #{tpu_custom_call.1} parent=63 // pred_fallthru
          _
        // Predicated region
        $region69: #{tpu_custom_call.1} parent=63 // pred_check
          %p569 = pneg %p88
        $region70: #{tpu_custom_call.1} parent=63 // pred_check_branch
          %571 = sbr.rel (%p569) target = $region72
        $region71: #{tpu_custom_call.1} parent=63 // pred_region
          %572 = dma.done [#allocation8], 1024
        $region72: #{tpu_custom_call.1} parent=63 // pred_fallthru
          _
        // Predicated region
        $region73: #{tpu_custom_call.1} parent=63 // pred_check
          %p573 = pneg %p109
        $region74: #{tpu_custom_call.1} parent=63 // pred_check_branch
          %575 = sbr.rel (%p573) target = $region76
        $region75: #{tpu_custom_call.1} parent=63 // pred_region
          %576 = dma.done [#allocation8], 256
        $region76: #{tpu_custom_call.1} parent=63 // pred_fallthru
          _
        %s577 = sand.u32 %s39, 1
        %s578 = scalar_lea.sflag [#allocation11], %s577
        %s579 = sand.u32 %s124, 1
        %s580 = smul.addr %s579, 2048
        %s581 = scalar_lea.vmem [#allocation10], %s580
        // Predicated region
        $region77: #{tpu_custom_call.1} parent=63 // pred_check
          %p582 = pneg %p137
        $region78: #{tpu_custom_call.1} parent=63 // pred_check_branch
          %584 = sbr.rel (%p582) target = $region80
        $region79: #{tpu_custom_call.1} parent=63 // pred_region
          %585 = dma.done %s578, 32768
        $region80: #{tpu_custom_call.1} parent=63 // pred_fallthru
          _
        %s586 = sand.u32 %s39, 1
        %s587 = scalar_lea.sflag [#allocation11], %s586
        %s588 = sand.u32 %s150, 1
        %s589 = smul.addr %s588, 16
        %s590 = scalar_lea.vmem [#allocation12], %s589
        // Predicated region
        $region81: #{tpu_custom_call.1} parent=63 // pred_check
          %p591 = pneg %p163
        $region82: #{tpu_custom_call.1} parent=63 // pred_check_branch
          %593 = sbr.rel (%p591) target = $region84
        $region83: #{tpu_custom_call.1} parent=63 // pred_region
          %594 = dma.done %s587, 256
        $region84: #{tpu_custom_call.1} parent=63 // pred_fallthru
          _
        %s595 = sand.u32 %s39, 1
        %s596 = scalar_lea.sflag [#allocation14], %s595
        %s597 = sand.u32 %s176, 1
        %s598 = smul.addr %s597, 16
        %s599 = scalar_lea.vmem [#allocation13], %s598
        // Predicated region
        $region85: #{tpu_custom_call.1} parent=63 // pred_check
          %p600 = pneg %p189
        $region86: #{tpu_custom_call.1} parent=63 // pred_check_branch
          %602 = sbr.rel (%p600) target = $region88
        $region87: #{tpu_custom_call.1} parent=63 // pred_region
          %603 = dma.done %s596, 256
        $region88: #{tpu_custom_call.1} parent=63 // pred_fallthru
          _
        %s604 = sand.u32 %s39, 1
        %s605 = scalar_lea.sflag [#allocation14], %s604
        %s606 = sand.u32 %s202, 1
        %s607 = smul.addr %s606, 2048
        %s608 = scalar_lea.vmem [#allocation15], %s607
        // Predicated region
        $region89: #{tpu_custom_call.1} parent=63 // pred_check
          %p609 = pneg %p215
        $region90: #{tpu_custom_call.1} parent=63 // pred_check_branch
          %611 = sbr.rel (%p609) target = $region92
        $region91: #{tpu_custom_call.1} parent=63 // pred_region
          %612 = dma.done %s605, 32768
        $region92: #{tpu_custom_call.1} parent=63 // pred_fallthru
          _
        %s613 = sand.u32 %s39, 1
        %s614 = scalar_lea.sflag [#allocation17], %s613
        %s615 = sand.u32 %s228, 1
        %s616 = smul.addr %s615, 4
        %s617 = scalar_lea.vmem [#allocation16], %s616
        // Predicated region
        $region93: #{tpu_custom_call.1} parent=63 // pred_check
          %p618 = pneg %p241
        $region94: #{tpu_custom_call.1} parent=63 // pred_check_branch
          %620 = sbr.rel (%p618) target = $region96
        $region95: #{tpu_custom_call.1} parent=63 // pred_region
          %621 = dma.done %s614, 64
        $region96: #{tpu_custom_call.1} parent=63 // pred_fallthru
          _
        %s622 = sand.u32 %s39, 1
        %s623 = scalar_lea.sflag [#allocation17], %s622
        %s624 = sand.u32 %s254, 1
        %s625 = smul.addr %s624, 4
        %s626 = scalar_lea.vmem [#allocation18], %s625
        // Predicated region
        $region97: #{tpu_custom_call.1} parent=63 // pred_check
          %p627 = pneg %p267
        $region98: #{tpu_custom_call.1} parent=63 // pred_check_branch
          %629 = sbr.rel (%p627) target = $region100
        $region99: #{tpu_custom_call.1} parent=63 // pred_region
          %630 = dma.done %s623, 64
        $region100: #{tpu_custom_call.1} parent=63 // pred_fallthru
          _
        %s631 = sand.u32 %s39, 1
        %s632 = scalar_lea.sflag [#allocation20], %s631
        %s633 = sand.u32 %s280, 1
        %s634 = smul.addr %s633, 256
        %s635 = scalar_lea.vmem [#allocation19], %s634
        // Predicated region
        $region101: #{tpu_custom_call.1} parent=63 // pred_check
          %p636 = pneg %p293
        $region102: #{tpu_custom_call.1} parent=63 // pred_check_branch
          %638 = sbr.rel (%p636) target = $region104
        $region103: #{tpu_custom_call.1} parent=63 // pred_region
          %639 = dma.done %s632, 4096
        $region104: #{tpu_custom_call.1} parent=63 // pred_fallthru
          _
        %s640 = sand.u32 %s39, 1
        %s641 = scalar_lea.sflag [#allocation20], %s640
        %s642 = sand.u32 %s306, 1
        %s643 = scalar_lea.vmem [#allocation21], %s642
        // Predicated region
        $region105: #{tpu_custom_call.1} parent=63 // pred_check
          %p644 = pneg %p319
        $region106: #{tpu_custom_call.1} parent=63 // pred_check_branch
          %646 = sbr.rel (%p644) target = $region108
        $region107: #{tpu_custom_call.1} parent=63 // pred_region
          %647 = dma.done %s641, 16
        $region108: #{tpu_custom_call.1} parent=63 // pred_fallthru
          _
        %p648 = pneg %p67
        %p649 = pneg %p64
        %p650 = pneg %p88
        %p651 = pneg %p85
        %p652 = pneg %p109
        %p653 = pneg %p106
        %s654 = sand.u32 %s39, 1
        %s655 = scalar_lea.sflag [#allocation11], %s654
        %s656 = sand.u32 %s124, 1
        %s657 = smul.addr %s656, 2048
        %s658 = scalar_lea.vmem [#allocation10], %s657
        %p659 = pneg %p137
        %p660 = pneg %p134
        %s661 = sand.u32 %s39, 1
        %s662 = scalar_lea.sflag [#allocation11], %s661
        %s663 = sand.u32 %s150, 1
        %s664 = smul.addr %s663, 16
        %s665 = scalar_lea.vmem [#allocation12], %s664
        %p666 = pneg %p163
        %p667 = pneg %p160
        %s668 = sand.u32 %s39, 1
        %s669 = scalar_lea.sflag [#allocation14], %s668
        %s670 = sand.u32 %s176, 1
        %s671 = smul.addr %s670, 16
        %s672 = scalar_lea.vmem [#allocation13], %s671
        %p673 = pneg %p189
        %p674 = pneg %p186
        %s675 = sand.u32 %s39, 1
        %s676 = scalar_lea.sflag [#allocation14], %s675
        %s677 = sand.u32 %s202, 1
        %s678 = smul.addr %s677, 2048
        %s679 = scalar_lea.vmem [#allocation15], %s678
        %p680 = pneg %p215
        %p681 = pneg %p212
        %s682 = sand.u32 %s39, 1
        %s683 = scalar_lea.sflag [#allocation17], %s682
        %s684 = sand.u32 %s228, 1
        %s685 = smul.addr %s684, 4
        %s686 = scalar_lea.vmem [#allocation16], %s685
        %p687 = pneg %p241
        %p688 = pneg %p238
        %s689 = sand.u32 %s39, 1
        %s690 = scalar_lea.sflag [#allocation17], %s689
        %s691 = sand.u32 %s254, 1
        %s692 = smul.addr %s691, 4
        %s693 = scalar_lea.vmem [#allocation18], %s692
        %p694 = pneg %p267
        %p695 = pneg %p264
        %s696 = sand.u32 %s39, 1
        %s697 = scalar_lea.sflag [#allocation20], %s696
        %s698 = sand.u32 %s280, 1
        %s699 = smul.addr %s698, 256
        %s700 = scalar_lea.vmem [#allocation19], %s699
        %p701 = pneg %p293
        %p702 = pneg %p290
        %s703 = sand.u32 %s39, 1
        %s704 = scalar_lea.sflag [#allocation20], %s703
        %s705 = sand.u32 %s306, 1
        %s706 = scalar_lea.vmem [#allocation21], %s705
        %p707 = pneg %p319
        %p708 = pneg %p316
        %p709 = pneg %p345
        %p710 = pneg %p342
        %s711 = sand.u32 %s332, 1
        %s712 = scalar_lea.sflag [#allocation6], %s711
        %s713 = sand.u32 %s332, 1
        %s714 = smul.addr %s713, 2
        %s715 = scalar_lea.vmem [#allocation22], %s714
        %s716 = smul.u32 16, %s44
        %s717 = smul.u32 16, %s43
        %s718 = smul.u32 16, %s43
        %s719 = smul.u32 16, %s43
        %p721 = scmp.eq.s32.totalorder %s44, 0
        // Predicated region
        $region109: #{tpu_custom_call.1} parent=63 // pred_check
          %p722 = pneg %p721
        $region110: #{tpu_custom_call.1} parent=63 // pred_check_branch
          %724 = sbr.rel (%p722) target = $region112
        $region111: #{tpu_custom_call.1} parent=63 // pred_region
          %v725 = vld [vmem:[#allocation4] sm:$0xff]
          %v726 = vld [vmem:[#allocation4 + $0x8] sm:$0xff]
          %v729 = vcombine.high %v725, %v725
          %v730 = vcombine.high %v726, %v726
          %vm733 = vcmask 1043456
          %v734 = vsel %vm733, %v725, 0.0
          %v735 = vsel %vm733, %v729, 0.0
          %v736 = vadd.f32 %v734, %v735
          %737 = vadd.xlane.f32.xlu0 %v736
          %v738 = vpop.xlane.xlu0 %737
          %v739 = vsel %vm733, %v726, 0.0
          %v740 = vsel %vm733, %v730, 0.0
          %v741 = vadd.f32 %v739, %v740
          %742 = vadd.xlane.f32.xlu0 %v741
          %v743 = vpop.xlane.xlu0 %742
          %v744 = vrcp.pop 256.0
          %v745 = vmul.f32 %v738, %v744
          %v746 = vmul.f32 %v743, %v744
          %v747 = vld [vmem:[#allocation7] sm:$0xff]
          %v748 = vld [vmem:[#allocation7 + $0x8] sm:$0xff]
          %v749 = vld [vmem:[#allocation7 + $0x10] sm:$0xff]
          %v750 = vld [vmem:[#allocation7 + $0x18] sm:$0xff]
          %v751 = vld [vmem:[#allocation7 + $0x20] sm:$0xff]
          %v752 = vld [vmem:[#allocation7 + $0x28] sm:$0xff]
          %v753 = vld [vmem:[#allocation7 + $0x30] sm:$0xff]
          %v754 = vld [vmem:[#allocation7 + $0x38] sm:$0xff]
          %v755 = vld [vmem:[#allocation9] sm:$0xff]
          %v756 = vld [vmem:[#allocation9 + $0x8] sm:$0xff]
          %v759 = vlaneseq
          %v760 = vshrl.u32 %v759, 7
          %v761 = vsub.s32 0, %v760
          %v762 = vrot.slane %v755, %v761
          %v763 = vlaneseq
          %v764 = vshrl.u32 %v763, 7
          %v765 = vsub.s32 1, %v764
          %v766 = vrot.slane %v755, %v765
          %v767 = vlaneseq
          %v768 = vshrl.u32 %v767, 7
          %v769 = vsub.s32 2, %v768
          %v770 = vrot.slane %v755, %v769
          %v771 = vlaneseq
          %v772 = vshrl.u32 %v771, 7
          %v773 = vsub.s32 3, %v772
          %v774 = vrot.slane %v755, %v773
          %v775 = vlaneseq
          %v776 = vshrl.u32 %v775, 7
          %v777 = vsub.s32 4, %v776
          %v778 = vrot.slane %v755, %v777
          %v779 = vlaneseq
          %v780 = vshrl.u32 %v779, 7
          %v781 = vsub.s32 5, %v780
          %v782 = vrot.slane %v755, %v781
          %v783 = vlaneseq
          %v784 = vshrl.u32 %v783, 7
          %v785 = vsub.s32 6, %v784
          %v786 = vrot.slane %v755, %v785
          %v787 = vlaneseq
          %v788 = vshrl.u32 %v787, 7
          %v789 = vsub.s32 7, %v788
          %v790 = vrot.slane %v755, %v789
          %v791 = vlaneseq
          %v792 = vshrl.u32 %v791, 7
          %v793 = vsub.s32 0, %v792
          %v794 = vrot.slane %v756, %v793
          %v795 = vlaneseq
          %v796 = vshrl.u32 %v795, 7
          %v797 = vsub.s32 1, %v796
          %v798 = vrot.slane %v756, %v797
          %v799 = vlaneseq
          %v800 = vshrl.u32 %v799, 7
          %v801 = vsub.s32 2, %v800
          %v802 = vrot.slane %v756, %v801
          %v803 = vlaneseq
          %v804 = vshrl.u32 %v803, 7
          %v805 = vsub.s32 3, %v804
          %v806 = vrot.slane %v756, %v805
          %v807 = vlaneseq
          %v808 = vshrl.u32 %v807, 7
          %v809 = vsub.s32 4, %v808
          %v810 = vrot.slane %v756, %v809
          %v811 = vlaneseq
          %v812 = vshrl.u32 %v811, 7
          %v813 = vsub.s32 5, %v812
          %v814 = vrot.slane %v756, %v813
          %v815 = vlaneseq
          %v816 = vshrl.u32 %v815, 7
          %v817 = vsub.s32 6, %v816
          %v818 = vrot.slane %v756, %v817
          %v819 = vlaneseq
          %v820 = vshrl.u32 %v819, 7
          %v821 = vsub.s32 7, %v820
          %v822 = vrot.slane %v756, %v821
          %v841 = vlaneseq
          %v842 = vand.u32 %v841, 127
          %v843 = vlaneseq
          %v844 = vshrl.u32 %v843, 7
          %v845 = vsub.s32 %v842, %v844
          %v846 = vrot.slane %v745, %v845
          %v847 = vlaneseq
          %v848 = vshrl.u32 %v847, 7
          %v849 = vsub.s32 %v842, %v848
          %v850 = vrot.slane %v746, %v849
          %vm851 = vcmask 1041409
          %v852 = vsel %vm851, %v850, %v846
          %v861 = vcombine.high %v747, %v747
          %v862 = vcombine.high %v748, %v748
          %v863 = vcombine.high %v749, %v749
          %v864 = vcombine.high %v750, %v750
          %v865 = vcombine.high %v751, %v751
          %v866 = vcombine.high %v752, %v752
          %v867 = vcombine.high %v753, %v753
          %v868 = vcombine.high %v754, %v754
          %vm869 = vcmask 31744
          %v870 = vsel %vm869, %v852, 0
          %v872 = vsel %vm733, %v747, 0
          %v874 = vsel %vm733, %v861, 0
          %v876 = vsel %vm733, %v748, 0
          %v878 = vsel %vm733, %v862, 0
          %v880 = vsel %vm733, %v749, 0
          %v882 = vsel %vm733, %v863, 0
          %v884 = vsel %vm733, %v750, 0
          %v886 = vsel %vm733, %v864, 0
          %v888 = vsel %vm733, %v751, 0
          %v890 = vsel %vm733, %v865, 0
          %v892 = vsel %vm733, %v752, 0
          %v894 = vsel %vm733, %v866, 0
          %v896 = vsel %vm733, %v753, 0
          %v898 = vsel %vm733, %v867, 0
          %v900 = vsel %vm733, %v754, 0
          %v902 = vsel %vm733, %v868, 0
          %904 = vmatprep.subr.mxu0 0.0
          %905 = vmatpush1.msra.mxu0 0.0
          %906 = vmatprep.subr.mxu0 0.0
          %907 = vmatpush1.msra.mxu0 0.0
          %908 = vmatprep.subr.mxu0 0.0
          %909 = vmatpush1.msra.mxu0 0.0
          %910 = vmatprep.subr.mxu0 0.0
          %911 = vmatpush1.msra.mxu0 0.0
          %912 = vmatprep.subr.mxu0 0.0
          %913 = vmatpush1.msra.mxu0 0.0
          %914 = vmatprep.subr.mxu0 0.0
          %915 = vmatpush1.msra.mxu0 0.0
          %916 = vmatprep.subr.mxu0 0.0
          %917 = vmatpush1.msra.mxu0 0.0
          %918 = vmatprep.subr.mxu0 0.0
          %919 = vmatpush1.msra.mxu0 0.0
          %920 = vmatprep.subr.mxu0 0.0
          %921 = vmatpush1.msra.mxu0 0.0
          %922 = vmatprep.subr.mxu0 0.0
          %923 = vmatpush1.msra.mxu0 0.0
          %924 = vmatprep.subr.mxu0 0.0
          %925 = vmatpush1.msra.mxu0 0.0
          %926 = vmatprep.subr.mxu0 0.0
          %927 = vmatpush1.msra.mxu0 0.0
          %928 = vmatprep.subr.mxu0 0.0
          %929 = vmatpush1.msra.mxu0 0.0
          %930 = vmatprep.subr.mxu0 0.0
          %931 = vmatpush1.msra.mxu0 0.0
          %932 = vmatprep.subr.mxu0 0.0
          %933 = vmatpush1.msra.mxu0 0.0
          %934 = vmatprep.subr.mxu0 %v874
          %935 = vmatpush1.msra.mxu0 %v872
          %936 = vmatprep.subr.mxu0 0.0
          %937 = vmatpush2.msra.mxu0 0.0
          %938 = vmatprep.subr.mxu0 0.0
          %939 = vmatpush2.msra.mxu0 0.0
          %940 = vmatprep.subr.mxu0 0.0
          %941 = vmatpush2.msra.mxu0 0.0
          %942 = vmatprep.subr.mxu0 0.0
          %943 = vmatpush2.msra.mxu0 0.0
          %944 = vmatprep.subr.mxu0 0.0
          %945 = vmatpush2.msra.mxu0 0.0
          %946 = vmatprep.subr.mxu0 0.0
          %947 = vmatpush2.msra.mxu0 0.0
          %948 = vmatprep.subr.mxu0 0.0
          %949 = vmatpush2.msra.mxu0 0.0
          %950 = vmatprep.subr.mxu0 0.0
          %951 = vmatpush2.msra.mxu0 0.0
          %952 = vmatprep.subr.mxu0 0.0
          %953 = vmatpush2.msra.mxu0 0.0
          %954 = vmatprep.subr.mxu0 0.0
          %955 = vmatpush2.msra.mxu0 0.0
          %956 = vmatprep.subr.mxu0 0.0
          %957 = vmatpush2.msra.mxu0 0.0
          %958 = vmatprep.subr.mxu0 0.0
          %959 = vmatpush2.msra.mxu0 0.0
          %960 = vmatprep.subr.mxu0 0.0
          %961 = vmatpush2.msra.mxu0 0.0
          %962 = vmatprep.subr.mxu0 0.0
          %963 = vmatpush2.msra.mxu0 0.0
          %964 = vmatprep.subr.mxu0 0.0
          %965 = vmatpush2.msra.mxu0 0.0
          %966 = vmatprep.subr.mxu0 0.0
          %967 = vmatpush2.msra.mxu0 0.0
          %968 = vmatprep.mubr.f32.mxu0 0.0
          %969 = vmatmul.mubr.f32.gmra.mxu0 %v870
          %v970 = vpop.f32.mrf.mxu0
          %v971 = vadd.f32 %v762, %v970
          %v972 = vpop.f32.mrf.mxu0
          %v973 = vadd.f32 %v766, %v972
          %974 = vdwg.mxu0
          %975 = vmatprep.subr.mxu0 0.0
          %976 = vmatpush1.msra.mxu0 0.0
          %977 = vmatprep.subr.mxu0 0.0
          %978 = vmatpush1.msra.mxu0 0.0
          %979 = vmatprep.subr.mxu0 0.0
          %980 = vmatpush1.msra.mxu0 0.0
          %981 = vmatprep.subr.mxu0 0.0
          %982 = vmatpush1.msra.mxu0 0.0
          %983 = vmatprep.subr.mxu0 0.0
          %984 = vmatpush1.msra.mxu0 0.0
          %985 = vmatprep.subr.mxu0 0.0
          %986 = vmatpush1.msra.mxu0 0.0
          %987 = vmatprep.subr.mxu0 0.0
          %988 = vmatpush1.msra.mxu0 0.0
          %989 = vmatprep.subr.mxu0 0.0
          %990 = vmatpush1.msra.mxu0 0.0
          %991 = vmatprep.subr.mxu0 0.0
          %992 = vmatpush1.msra.mxu0 0.0
          %993 = vmatprep.subr.mxu0 0.0
          %994 = vmatpush1.msra.mxu0 0.0
          %995 = vmatprep.subr.mxu0 0.0
          %996 = vmatpush1.msra.mxu0 0.0
          %997 = vmatprep.subr.mxu0 0.0
          %998 = vmatpush1.msra.mxu0 0.0
          %999 = vmatprep.subr.mxu0 0.0
          %1000 = vmatpush1.msra.mxu0 0.0
          %1001 = vmatprep.subr.mxu0 0.0
          %1002 = vmatpush1.msra.mxu0 0.0
          %1003 = vmatprep.subr.mxu0 0.0
          %1004 = vmatpush1.msra.mxu0 0.0
          %1005 = vmatprep.subr.mxu0 %v878
          %1006 = vmatpush1.msra.mxu0 %v876
          %1007 = vmatprep.subr.mxu0 0.0
          %1008 = vmatpush2.msra.mxu0 0.0
          %1009 = vmatprep.subr.mxu0 0.0
          %1010 = vmatpush2.msra.mxu0 0.0
          %1011 = vmatprep.subr.mxu0 0.0
          %1012 = vmatpush2.msra.mxu0 0.0
          %1013 = vmatprep.subr.mxu0 0.0
          %1014 = vmatpush2.msra.mxu0 0.0
          %1015 = vmatprep.subr.mxu0 0.0
          %1016 = vmatpush2.msra.mxu0 0.0
          %1017 = vmatprep.subr.mxu0 0.0
          %1018 = vmatpush2.msra.mxu0 0.0
          %1019 = vmatprep.subr.mxu0 0.0
          %1020 = vmatpush2.msra.mxu0 0.0
          %1021 = vmatprep.subr.mxu0 0.0
          %1022 = vmatpush2.msra.mxu0 0.0
          %1023 = vmatprep.subr.mxu0 0.0
          %1024 = vmatpush2.msra.mxu0 0.0
          %1025 = vmatprep.subr.mxu0 0.0
          %1026 = vmatpush2.msra.mxu0 0.0
          %1027 = vmatprep.subr.mxu0 0.0
          %1028 = vmatpush2.msra.mxu0 0.0
          %1029 = vmatprep.subr.mxu0 0.0
          %1030 = vmatpush2.msra.mxu0 0.0
          %1031 = vmatprep.subr.mxu0 0.0
          %1032 = vmatpush2.msra.mxu0 0.0
          %1033 = vmatprep.subr.mxu0 0.0
          %1034 = vmatpush2.msra.mxu0 0.0
          %1035 = vmatprep.subr.mxu0 0.0
          %1036 = vmatpush2.msra.mxu0 0.0
          %1037 = vmatprep.subr.mxu0 0.0
          %1038 = vmatpush2.msra.mxu0 0.0
          %1039 = vmatprep.mubr.f32.mxu0 0.0
          %1040 = vmatmul.mubr.f32.gmra.mxu0 %v870
          %v1041 = vpop.f32.mrf.mxu0
          %v1042 = vadd.f32 %v770, %v1041
          %v1043 = vpop.f32.mrf.mxu0
          %v1044 = vadd.f32 %v774, %v1043
          %1045 = vdwg.mxu0
          %1046 = vmatprep.subr.mxu0 0.0
          %1047 = vmatpush1.msra.mxu0 0.0
          %1048 = vmatprep.subr.mxu0 0.0
          %1049 = vmatpush1.msra.mxu0 0.0
          %1050 = vmatprep.subr.mxu0 0.0
          %1051 = vmatpush1.msra.mxu0 0.0
          %1052 = vmatprep.subr.mxu0 0.0
          %1053 = vmatpush1.msra.mxu0 0.0
          %1054 = vmatprep.subr.mxu0 0.0
          %1055 = vmatpush1.msra.mxu0 0.0
          %1056 = vmatprep.subr.mxu0 0.0
          %1057 = vmatpush1.msra.mxu0 0.0
          %1058 = vmatprep.subr.mxu0 0.0
          %1059 = vmatpush1.msra.mxu0 0.0
          %1060 = vmatprep.subr.mxu0 0.0
          %1061 = vmatpush1.msra.mxu0 0.0
          %1062 = vmatprep.subr.mxu0 0.0
          %1063 = vmatpush1.msra.mxu0 0.0
          %1064 = vmatprep.subr.mxu0 0.0
          %1065 = vmatpush1.msra.mxu0 0.0
          %1066 = vmatprep.subr.mxu0 0.0
          %1067 = vmatpush1.msra.mxu0 0.0
          %1068 = vmatprep.subr.mxu0 0.0
          %1069 = vmatpush1.msra.mxu0 0.0
          %1070 = vmatprep.subr.mxu0 0.0
          %1071 = vmatpush1.msra.mxu0 0.0
          %1072 = vmatprep.subr.mxu0 0.0
          %1073 = vmatpush1.msra.mxu0 0.0
          %1074 = vmatprep.subr.mxu0 0.0
          %1075 = vmatpush1.msra.mxu0 0.0
          %1076 = vmatprep.subr.mxu0 %v882
          %1077 = vmatpush1.msra.mxu0 %v880
          %1078 = vmatprep.subr.mxu0 0.0
          %1079 = vmatpush2.msra.mxu0 0.0
          %1080 = vmatprep.subr.mxu0 0.0
          %1081 = vmatpush2.msra.mxu0 0.0
          %1082 = vmatprep.subr.mxu0 0.0
          %1083 = vmatpush2.msra.mxu0 0.0
          %1084 = vmatprep.subr.mxu0 0.0
          %1085 = vmatpush2.msra.mxu0 0.0
          %1086 = vmatprep.subr.mxu0 0.0
          %1087 = vmatpush2.msra.mxu0 0.0
          %1088 = vmatprep.subr.mxu0 0.0
          %1089 = vmatpush2.msra.mxu0 0.0
          %1090 = vmatprep.subr.mxu0 0.0
          %1091 = vmatpush2.msra.mxu0 0.0
          %1092 = vmatprep.subr.mxu0 0.0
          %1093 = vmatpush2.msra.mxu0 0.0
          %1094 = vmatprep.subr.mxu0 0.0
          %1095 = vmatpush2.msra.mxu0 0.0
          %1096 = vmatprep.subr.mxu0 0.0
          %1097 = vmatpush2.msra.mxu0 0.0
          %1098 = vmatprep.subr.mxu0 0.0
          %1099 = vmatpush2.msra.mxu0 0.0
          %1100 = vmatprep.subr.mxu0 0.0
          %1101 = vmatpush2.msra.mxu0 0.0
          %1102 = vmatprep.subr.mxu0 0.0
          %1103 = vmatpush2.msra.mxu0 0.0
          %1104 = vmatprep.subr.mxu0 0.0
          %1105 = vmatpush2.msra.mxu0 0.0
          %1106 = vmatprep.subr.mxu0 0.0
          %1107 = vmatpush2.msra.mxu0 0.0
          %1108 = vmatprep.subr.mxu0 0.0
          %1109 = vmatpush2.msra.mxu0 0.0
          %1110 = vmatprep.mubr.f32.mxu0 0.0
          %1111 = vmatmul.mubr.f32.gmra.mxu0 %v870
          %v1112 = vpop.f32.mrf.mxu0
          %v1113 = vadd.f32 %v778, %v1112
          %v1114 = vpop.f32.mrf.mxu0
          %v1115 = vadd.f32 %v782, %v1114
          %1116 = vdwg.mxu0
          %1117 = vmatprep.subr.mxu0 0.0
          %1118 = vmatpush1.msra.mxu0 0.0
          %1119 = vmatprep.subr.mxu0 0.0
          %1120 = vmatpush1.msra.mxu0 0.0
          %1121 = vmatprep.subr.mxu0 0.0
          %1122 = vmatpush1.msra.mxu0 0.0
          %1123 = vmatprep.subr.mxu0 0.0
          %1124 = vmatpush1.msra.mxu0 0.0
          %1125 = vmatprep.subr.mxu0 0.0
          %1126 = vmatpush1.msra.mxu0 0.0
          %1127 = vmatprep.subr.mxu0 0.0
          %1128 = vmatpush1.msra.mxu0 0.0
          %1129 = vmatprep.subr.mxu0 0.0
          %1130 = vmatpush1.msra.mxu0 0.0
          %1131 = vmatprep.subr.mxu0 0.0
          %1132 = vmatpush1.msra.mxu0 0.0
          %1133 = vmatprep.subr.mxu0 0.0
          %1134 = vmatpush1.msra.mxu0 0.0
          %1135 = vmatprep.subr.mxu0 0.0
          %1136 = vmatpush1.msra.mxu0 0.0
          %1137 = vmatprep.subr.mxu0 0.0
          %1138 = vmatpush1.msra.mxu0 0.0
          %1139 = vmatprep.subr.mxu0 0.0
          %1140 = vmatpush1.msra.mxu0 0.0
          %1141 = vmatprep.subr.mxu0 0.0
          %1142 = vmatpush1.msra.mxu0 0.0
          %1143 = vmatprep.subr.mxu0 0.0
          %1144 = vmatpush1.msra.mxu0 0.0
          %1145 = vmatprep.subr.mxu0 0.0
          %1146 = vmatpush1.msra.mxu0 0.0
          %1147 = vmatprep.subr.mxu0 %v886
          %1148 = vmatpush1.msra.mxu0 %v884
          %1149 = vmatprep.subr.mxu0 0.0
          %1150 = vmatpush2.msra.mxu0 0.0
          %1151 = vmatprep.subr.mxu0 0.0
          %1152 = vmatpush2.msra.mxu0 0.0
          %1153 = vmatprep.subr.mxu0 0.0
          %1154 = vmatpush2.msra.mxu0 0.0
          %1155 = vmatprep.subr.mxu0 0.0
          %1156 = vmatpush2.msra.mxu0 0.0
          %1157 = vmatprep.subr.mxu0 0.0
          %1158 = vmatpush2.msra.mxu0 0.0
          %1159 = vmatprep.subr.mxu0 0.0
          %1160 = vmatpush2.msra.mxu0 0.0
          %1161 = vmatprep.subr.mxu0 0.0
          %1162 = vmatpush2.msra.mxu0 0.0
          %1163 = vmatprep.subr.mxu0 0.0
          %1164 = vmatpush2.msra.mxu0 0.0
          %1165 = vmatprep.subr.mxu0 0.0
          %1166 = vmatpush2.msra.mxu0 0.0
          %1167 = vmatprep.subr.mxu0 0.0
          %1168 = vmatpush2.msra.mxu0 0.0
          %1169 = vmatprep.subr.mxu0 0.0
          %1170 = vmatpush2.msra.mxu0 0.0
          %1171 = vmatprep.subr.mxu0 0.0
          %1172 = vmatpush2.msra.mxu0 0.0
          %1173 = vmatprep.subr.mxu0 0.0
          %1174 = vmatpush2.msra.mxu0 0.0
          %1175 = vmatprep.subr.mxu0 0.0
          %1176 = vmatpush2.msra.mxu0 0.0
          %1177 = vmatprep.subr.mxu0 0.0
          %1178 = vmatpush2.msra.mxu0 0.0
          %1179 = vmatprep.subr.mxu0 0.0
          %1180 = vmatpush2.msra.mxu0 0.0
          %1181 = vmatprep.mubr.f32.mxu0 0.0
          %1182 = vmatmul.mubr.f32.gmra.mxu0 %v870
          %v1183 = vpop.f32.mrf.mxu0
          %v1184 = vadd.f32 %v786, %v1183
          %v1185 = vpop.f32.mrf.mxu0
          %v1186 = vadd.f32 %v790, %v1185
          %1187 = vdwg.mxu0
          %1188 = vmatprep.subr.mxu0 0.0
          %1189 = vmatpush1.msra.mxu0 0.0
          %1190 = vmatprep.subr.mxu0 0.0
          %1191 = vmatpush1.msra.mxu0 0.0
          %1192 = vmatprep.subr.mxu0 0.0
          %1193 = vmatpush1.msra.mxu0 0.0
          %1194 = vmatprep.subr.mxu0 0.0
          %1195 = vmatpush1.msra.mxu0 0.0
          %1196 = vmatprep.subr.mxu0 0.0
          %1197 = vmatpush1.msra.mxu0 0.0
          %1198 = vmatprep.subr.mxu0 0.0
          %1199 = vmatpush1.msra.mxu0 0.0
          %1200 = vmatprep.subr.mxu0 0.0
          %1201 = vmatpush1.msra.mxu0 0.0
          %1202 = vmatprep.subr.mxu0 0.0
          %1203 = vmatpush1.msra.mxu0 0.0
          %1204 = vmatprep.subr.mxu0 0.0
          %1205 = vmatpush1.msra.mxu0 0.0
          %1206 = vmatprep.subr.mxu0 0.0
          %1207 = vmatpush1.msra.mxu0 0.0
          %1208 = vmatprep.subr.mxu0 0.0
          %1209 = vmatpush1.msra.mxu0 0.0
          %1210 = vmatprep.subr.mxu0 0.0
          %1211 = vmatpush1.msra.mxu0 0.0
          %1212 = vmatprep.subr.mxu0 0.0
          %1213 = vmatpush1.msra.mxu0 0.0
          %1214 = vmatprep.subr.mxu0 0.0
          %1215 = vmatpush1.msra.mxu0 0.0
          %1216 = vmatprep.subr.mxu0 0.0
          %1217 = vmatpush1.msra.mxu0 0.0
          %1218 = vmatprep.subr.mxu0 %v890
          %1219 = vmatpush1.msra.mxu0 %v888
          %1220 = vmatprep.subr.mxu0 0.0
          %1221 = vmatpush2.msra.mxu0 0.0
          %1222 = vmatprep.subr.mxu0 0.0
          %1223 = vmatpush2.msra.mxu0 0.0
          %1224 = vmatprep.subr.mxu0 0.0
          %1225 = vmatpush2.msra.mxu0 0.0
          %1226 = vmatprep.subr.mxu0 0.0
          %1227 = vmatpush2.msra.mxu0 0.0
          %1228 = vmatprep.subr.mxu0 0.0
          %1229 = vmatpush2.msra.mxu0 0.0
          %1230 = vmatprep.subr.mxu0 0.0
          %1231 = vmatpush2.msra.mxu0 0.0
          %1232 = vmatprep.subr.mxu0 0.0
          %1233 = vmatpush2.msra.mxu0 0.0
          %1234 = vmatprep.subr.mxu0 0.0
          %1235 = vmatpush2.msra.mxu0 0.0
          %1236 = vmatprep.subr.mxu0 0.0
          %1237 = vmatpush2.msra.mxu0 0.0
          %1238 = vmatprep.subr.mxu0 0.0
          %1239 = vmatpush2.msra.mxu0 0.0
          %1240 = vmatprep.subr.mxu0 0.0
          %1241 = vmatpush2.msra.mxu0 0.0
          %1242 = vmatprep.subr.mxu0 0.0
          %1243 = vmatpush2.msra.mxu0 0.0
          %1244 = vmatprep.subr.mxu0 0.0
          %1245 = vmatpush2.msra.mxu0 0.0
          %1246 = vmatprep.subr.mxu0 0.0
          %1247 = vmatpush2.msra.mxu0 0.0
          %1248 = vmatprep.subr.mxu0 0.0
          %1249 = vmatpush2.msra.mxu0 0.0
          %1250 = vmatprep.subr.mxu0 0.0
          %1251 = vmatpush2.msra.mxu0 0.0
          %1252 = vmatprep.mubr.f32.mxu0 0.0
          %1253 = vmatmul.mubr.f32.gmra.mxu0 %v870
          %v1254 = vpop.f32.mrf.mxu0
          %v1255 = vadd.f32 %v794, %v1254
          %v1256 = vpop.f32.mrf.mxu0
          %v1257 = vadd.f32 %v798, %v1256
          %1258 = vdwg.mxu0
          %1259 = vmatprep.subr.mxu0 0.0
          %1260 = vmatpush1.msra.mxu0 0.0
          %1261 = vmatprep.subr.mxu0 0.0
          %1262 = vmatpush1.msra.mxu0 0.0
          %1263 = vmatprep.subr.mxu0 0.0
          %1264 = vmatpush1.msra.mxu0 0.0
          %1265 = vmatprep.subr.mxu0 0.0
          %1266 = vmatpush1.msra.mxu0 0.0
          %1267 = vmatprep.subr.mxu0 0.0
          %1268 = vmatpush1.msra.mxu0 0.0
          %1269 = vmatprep.subr.mxu0 0.0
          %1270 = vmatpush1.msra.mxu0 0.0
          %1271 = vmatprep.subr.mxu0 0.0
          %1272 = vmatpush1.msra.mxu0 0.0
          %1273 = vmatprep.subr.mxu0 0.0
          %1274 = vmatpush1.msra.mxu0 0.0
          %1275 = vmatprep.subr.mxu0 0.0
          %1276 = vmatpush1.msra.mxu0 0.0
          %1277 = vmatprep.subr.mxu0 0.0
          %1278 = vmatpush1.msra.mxu0 0.0
          %1279 = vmatprep.subr.mxu0 0.0
          %1280 = vmatpush1.msra.mxu0 0.0
          %1281 = vmatprep.subr.mxu0 0.0
          %1282 = vmatpush1.msra.mxu0 0.0
          %1283 = vmatprep.subr.mxu0 0.0
          %1284 = vmatpush1.msra.mxu0 0.0
          %1285 = vmatprep.subr.mxu0 0.0
          %1286 = vmatpush1.msra.mxu0 0.0
          %1287 = vmatprep.subr.mxu0 0.0
          %1288 = vmatpush1.msra.mxu0 0.0
          %1289 = vmatprep.subr.mxu0 %v894
          %1290 = vmatpush1.msra.mxu0 %v892
          %1291 = vmatprep.subr.mxu0 0.0
          %1292 = vmatpush2.msra.mxu0 0.0
          %1293 = vmatprep.subr.mxu0 0.0
          %1294 = vmatpush2.msra.mxu0 0.0
          %1295 = vmatprep.subr.mxu0 0.0
          %1296 = vmatpush2.msra.mxu0 0.0
          %1297 = vmatprep.subr.mxu0 0.0
          %1298 = vmatpush2.msra.mxu0 0.0
          %1299 = vmatprep.subr.mxu0 0.0
          %1300 = vmatpush2.msra.mxu0 0.0
          %1301 = vmatprep.subr.mxu0 0.0
          %1302 = vmatpush2.msra.mxu0 0.0
          %1303 = vmatprep.subr.mxu0 0.0
          %1304 = vmatpush2.msra.mxu0 0.0
          %1305 = vmatprep.subr.mxu0 0.0
          %1306 = vmatpush2.msra.mxu0 0.0
          %1307 = vmatprep.subr.mxu0 0.0
          %1308 = vmatpush2.msra.mxu0 0.0
          %1309 = vmatprep.subr.mxu0 0.0
          %1310 = vmatpush2.msra.mxu0 0.0
          %1311 = vmatprep.subr.mxu0 0.0
          %1312 = vmatpush2.msra.mxu0 0.0
          %1313 = vmatprep.subr.mxu0 0.0
          %1314 = vmatpush2.msra.mxu0 0.0
          %1315 = vmatprep.subr.mxu0 0.0
          %1316 = vmatpush2.msra.mxu0 0.0
          %1317 = vmatprep.subr.mxu0 0.0
          %1318 = vmatpush2.msra.mxu0 0.0
          %1319 = vmatprep.subr.mxu0 0.0
          %1320 = vmatpush2.msra.mxu0 0.0
          %1321 = vmatprep.subr.mxu0 0.0
          %1322 = vmatpush2.msra.mxu0 0.0
          %1323 = vmatprep.mubr.f32.mxu0 0.0
          %1324 = vmatmul.mubr.f32.gmra.mxu0 %v870
          %v1325 = vpop.f32.mrf.mxu0
          %v1326 = vadd.f32 %v802, %v1325
          %v1327 = vpop.f32.mrf.mxu0
          %v1328 = vadd.f32 %v806, %v1327
          %1329 = vdwg.mxu0
          %1330 = vmatprep.subr.mxu0 0.0
          %1331 = vmatpush1.msra.mxu0 0.0
          %1332 = vmatprep.subr.mxu0 0.0
          %1333 = vmatpush1.msra.mxu0 0.0
          %1334 = vmatprep.subr.mxu0 0.0
          %1335 = vmatpush1.msra.mxu0 0.0
          %1336 = vmatprep.subr.mxu0 0.0
          %1337 = vmatpush1.msra.mxu0 0.0
          %1338 = vmatprep.subr.mxu0 0.0
          %1339 = vmatpush1.msra.mxu0 0.0
          %1340 = vmatprep.subr.mxu0 0.0
          %1341 = vmatpush1.msra.mxu0 0.0
          %1342 = vmatprep.subr.mxu0 0.0
          %1343 = vmatpush1.msra.mxu0 0.0
          %1344 = vmatprep.subr.mxu0 0.0
          %1345 = vmatpush1.msra.mxu0 0.0
          %1346 = vmatprep.subr.mxu0 0.0
          %1347 = vmatpush1.msra.mxu0 0.0
          %1348 = vmatprep.subr.mxu0 0.0
          %1349 = vmatpush1.msra.mxu0 0.0
          %1350 = vmatprep.subr.mxu0 0.0
          %1351 = vmatpush1.msra.mxu0 0.0
          %1352 = vmatprep.subr.mxu0 0.0
          %1353 = vmatpush1.msra.mxu0 0.0
          %1354 = vmatprep.subr.mxu0 0.0
          %1355 = vmatpush1.msra.mxu0 0.0
          %1356 = vmatprep.subr.mxu0 0.0
          %1357 = vmatpush1.msra.mxu0 0.0
          %1358 = vmatprep.subr.mxu0 0.0
          %1359 = vmatpush1.msra.mxu0 0.0
          %1360 = vmatprep.subr.mxu0 %v898
          %1361 = vmatpush1.msra.mxu0 %v896
          %1362 = vmatprep.subr.mxu0 0.0
          %1363 = vmatpush2.msra.mxu0 0.0
          %1364 = vmatprep.subr.mxu0 0.0
          %1365 = vmatpush2.msra.mxu0 0.0
          %1366 = vmatprep.subr.mxu0 0.0
          %1367 = vmatpush2.msra.mxu0 0.0
          %1368 = vmatprep.subr.mxu0 0.0
          %1369 = vmatpush2.msra.mxu0 0.0
          %1370 = vmatprep.subr.mxu0 0.0
          %1371 = vmatpush2.msra.mxu0 0.0
          %1372 = vmatprep.subr.mxu0 0.0
          %1373 = vmatpush2.msra.mxu0 0.0
          %1374 = vmatprep.subr.mxu0 0.0
          %1375 = vmatpush2.msra.mxu0 0.0
          %1376 = vmatprep.subr.mxu0 0.0
          %1377 = vmatpush2.msra.mxu0 0.0
          %1378 = vmatprep.subr.mxu0 0.0
          %1379 = vmatpush2.msra.mxu0 0.0
          %1380 = vmatprep.subr.mxu0 0.0
          %1381 = vmatpush2.msra.mxu0 0.0
          %1382 = vmatprep.subr.mxu0 0.0
          %1383 = vmatpush2.msra.mxu0 0.0
          %1384 = vmatprep.subr.mxu0 0.0
          %1385 = vmatpush2.msra.mxu0 0.0
          %1386 = vmatprep.subr.mxu0 0.0
          %1387 = vmatpush2.msra.mxu0 0.0
          %1388 = vmatprep.subr.mxu0 0.0
          %1389 = vmatpush2.msra.mxu0 0.0
          %1390 = vmatprep.subr.mxu0 0.0
          %1391 = vmatpush2.msra.mxu0 0.0
          %1392 = vmatprep.subr.mxu0 0.0
          %1393 = vmatpush2.msra.mxu0 0.0
          %1394 = vmatprep.mubr.f32.mxu0 0.0
          %1395 = vmatmul.mubr.f32.gmra.mxu0 %v870
          %v1396 = vpop.f32.mrf.mxu0
          %v1397 = vadd.f32 %v810, %v1396
          %v1398 = vpop.f32.mrf.mxu0
          %v1399 = vadd.f32 %v814, %v1398
          %1400 = vdwg.mxu0
          %1401 = vmatprep.subr.mxu0 0.0
          %1402 = vmatpush1.msra.mxu0 0.0
          %1403 = vmatprep.subr.mxu0 0.0
          %1404 = vmatpush1.msra.mxu0 0.0
          %1405 = vmatprep.subr.mxu0 0.0
          %1406 = vmatpush1.msra.mxu0 0.0
          %1407 = vmatprep.subr.mxu0 0.0
          %1408 = vmatpush1.msra.mxu0 0.0
          %1409 = vmatprep.subr.mxu0 0.0
          %1410 = vmatpush1.msra.mxu0 0.0
          %1411 = vmatprep.subr.mxu0 0.0
          %1412 = vmatpush1.msra.mxu0 0.0
          %1413 = vmatprep.subr.mxu0 0.0
          %1414 = vmatpush1.msra.mxu0 0.0
          %1415 = vmatprep.subr.mxu0 0.0
          %1416 = vmatpush1.msra.mxu0 0.0
          %1417 = vmatprep.subr.mxu0 0.0
          %1418 = vmatpush1.msra.mxu0 0.0
          %1419 = vmatprep.subr.mxu0 0.0
          %1420 = vmatpush1.msra.mxu0 0.0
          %1421 = vmatprep.subr.mxu0 0.0
          %1422 = vmatpush1.msra.mxu0 0.0
          %1423 = vmatprep.subr.mxu0 0.0
          %1424 = vmatpush1.msra.mxu0 0.0
          %1425 = vmatprep.subr.mxu0 0.0
          %1426 = vmatpush1.msra.mxu0 0.0
          %1427 = vmatprep.subr.mxu0 0.0
          %1428 = vmatpush1.msra.mxu0 0.0
          %1429 = vmatprep.subr.mxu0 0.0
          %1430 = vmatpush1.msra.mxu0 0.0
          %1431 = vmatprep.subr.mxu0 %v902
          %1432 = vmatpush1.msra.mxu0 %v900
          %1433 = vmatprep.subr.mxu0 0.0
          %1434 = vmatpush2.msra.mxu0 0.0
          %1435 = vmatprep.subr.mxu0 0.0
          %1436 = vmatpush2.msra.mxu0 0.0
          %1437 = vmatprep.subr.mxu0 0.0
          %1438 = vmatpush2.msra.mxu0 0.0
          %1439 = vmatprep.subr.mxu0 0.0
          %1440 = vmatpush2.msra.mxu0 0.0
          %1441 = vmatprep.subr.mxu0 0.0
          %1442 = vmatpush2.msra.mxu0 0.0
          %1443 = vmatprep.subr.mxu0 0.0
          %1444 = vmatpush2.msra.mxu0 0.0
          %1445 = vmatprep.subr.mxu0 0.0
          %1446 = vmatpush2.msra.mxu0 0.0
          %1447 = vmatprep.subr.mxu0 0.0
          %1448 = vmatpush2.msra.mxu0 0.0
          %1449 = vmatprep.subr.mxu0 0.0
          %1450 = vmatpush2.msra.mxu0 0.0
          %1451 = vmatprep.subr.mxu0 0.0
          %1452 = vmatpush2.msra.mxu0 0.0
          %1453 = vmatprep.subr.mxu0 0.0
          %1454 = vmatpush2.msra.mxu0 0.0
          %1455 = vmatprep.subr.mxu0 0.0
          %1456 = vmatpush2.msra.mxu0 0.0
          %1457 = vmatprep.subr.mxu0 0.0
          %1458 = vmatpush2.msra.mxu0 0.0
          %1459 = vmatprep.subr.mxu0 0.0
          %1460 = vmatpush2.msra.mxu0 0.0
          %1461 = vmatprep.subr.mxu0 0.0
          %1462 = vmatpush2.msra.mxu0 0.0
          %1463 = vmatprep.subr.mxu0 0.0
          %1464 = vmatpush2.msra.mxu0 0.0
          %1465 = vmatprep.mubr.f32.mxu0 0.0
          %1466 = vmatmul.mubr.f32.gmra.mxu0 %v870
          %v1467 = vpop.f32.mrf.mxu0
          %v1468 = vadd.f32 %v818, %v1467
          %v1469 = vpop.f32.mrf.mxu0
          %v1470 = vadd.f32 %v822, %v1469
          %1471 = vdwg.mxu0
          %v1472 = vpack.c.bf16 %v971, %v971
          %v1473 = vpack.c.bf16 %v973, %v973
          %v1474 = vpack.c.bf16 %v1042, %v1042
          %v1475 = vpack.c.bf16 %v1044, %v1044
          %v1476 = vpack.c.bf16 %v1113, %v1113
          %v1477 = vpack.c.bf16 %v1115, %v1115
          %v1478 = vpack.c.bf16 %v1184, %v1184
          %v1479 = vpack.c.bf16 %v1186, %v1186
          %v1480 = vpack.c.bf16 %v1255, %v1255
          %v1481 = vpack.c.bf16 %v1257, %v1257
          %v1482 = vpack.c.bf16 %v1326, %v1326
          %v1483 = vpack.c.bf16 %v1328, %v1328
          %v1484 = vpack.c.bf16 %v1397, %v1397
          %v1485 = vpack.c.bf16 %v1399, %v1399
          %v1486 = vpack.c.bf16 %v1468, %v1468
          %v1487 = vpack.c.bf16 %v1470, %v1470
          %v1504 = vcombine.low %v1472, %v1473
          %v1505 = vcombine.low %v1474, %v1475
          %v1506 = vcombine.low %v1476, %v1477
          %v1507 = vcombine.low %v1478, %v1479
          %v1509 = vunpack.c.l.s4 1966171168
          %v1510 = vunpack.c.0.s8 %v1509
          %v1511 = vlaneseq
          %v1512 = vshrl.u32 %v1511, 7
          %v1513 = vsub.s32 %v1510, %v1512
          %v1514 = vrot.slane %v1504, %v1513
          %v1516 = vunpack.c.l.s4 1966171168
          %v1517 = vunpack.c.0.s8 %v1516
          %v1518 = vlaneseq
          %v1519 = vshrl.u32 %v1518, 7
          %v1520 = vsub.s32 %v1517, %v1519
          %v1521 = vrot.slane %v1505, %v1520
          %v1523 = vunpack.c.l.s4 1966171168
          %v1524 = vunpack.c.0.s8 %v1523
          %v1525 = vlaneseq
          %v1526 = vshrl.u32 %v1525, 7
          %v1527 = vsub.s32 %v1524, %v1526
          %v1528 = vrot.slane %v1506, %v1527
          %v1530 = vunpack.c.l.s4 1966171168
          %v1531 = vunpack.c.0.s8 %v1530
          %v1532 = vlaneseq
          %v1533 = vshrl.u32 %v1532, 7
          %v1534 = vsub.s32 %v1531, %v1533
          %v1535 = vrot.slane %v1507, %v1534
          %v1536 = vcombine.low %v1514, %v1521
          %v1537 = vcombine.low %v1528, %v1535
          %v1539 = vunpack.c.l.s4 1966171168
          %v1540 = vunpack.c.0.s8 %v1539
          %v1541 = vlaneseq
          %v1542 = vshrl.u32 %v1541, 7
          %v1543 = vsub.s32 %v1540, %v1542
          %v1544 = vrot.slane %v1536, %v1543
          %v1546 = vunpack.c.l.s4 1966171168
          %v1547 = vunpack.c.0.s8 %v1546
          %v1548 = vlaneseq
          %v1549 = vshrl.u32 %v1548, 7
          %v1550 = vsub.s32 %v1547, %v1549
          %v1551 = vrot.slane %v1537, %v1550
          %v1552 = vcombine.low %v1544, %v1551
          %v1553 = vcombine.low %v1480, %v1481
          %v1554 = vcombine.low %v1482, %v1483
          %v1555 = vcombine.low %v1484, %v1485
          %v1556 = vcombine.low %v1486, %v1487
          %v1558 = vunpack.c.l.s4 1966171168
          %v1559 = vunpack.c.0.s8 %v1558
          %v1560 = vlaneseq
          %v1561 = vshrl.u32 %v1560, 7
          %v1562 = vsub.s32 %v1559, %v1561
          %v1563 = vrot.slane %v1553, %v1562
          %v1565 = vunpack.c.l.s4 1966171168
          %v1566 = vunpack.c.0.s8 %v1565
          %v1567 = vlaneseq
          %v1568 = vshrl.u32 %v1567, 7
          %v1569 = vsub.s32 %v1566, %v1568
          %v1570 = vrot.slane %v1554, %v1569
          %v1572 = vunpack.c.l.s4 1966171168
          %v1573 = vunpack.c.0.s8 %v1572
          %v1574 = vlaneseq
          %v1575 = vshrl.u32 %v1574, 7
          %v1576 = vsub.s32 %v1573, %v1575
          %v1577 = vrot.slane %v1555, %v1576
          %v1579 = vunpack.c.l.s4 1966171168
          %v1580 = vunpack.c.0.s8 %v1579
          %v1581 = vlaneseq
          %v1582 = vshrl.u32 %v1581, 7
          %v1583 = vsub.s32 %v1580, %v1582
          %v1584 = vrot.slane %v1556, %v1583
          %v1585 = vcombine.low %v1563, %v1570
          %v1586 = vcombine.low %v1577, %v1584
          %v1588 = vunpack.c.l.s4 1966171168
          %v1589 = vunpack.c.0.s8 %v1588
          %v1590 = vlaneseq
          %v1591 = vshrl.u32 %v1590, 7
          %v1592 = vsub.s32 %v1589, %v1591
          %v1593 = vrot.slane %v1585, %v1592
          %v1595 = vunpack.c.l.s4 1966171168
          %v1596 = vunpack.c.0.s8 %v1595
          %v1597 = vlaneseq
          %v1598 = vshrl.u32 %v1597, 7
          %v1599 = vsub.s32 %v1596, %v1598
          %v1600 = vrot.slane %v1586, %v1599
          %v1601 = vcombine.low %v1593, %v1600
          %1604 = vst [vmem:[#allocation2] sm:$0xff] %v1552
          %1605 = vst [vmem:[#allocation2 + $0x8] sm:$0xff] %v1601
          %1606 = vst [vmem:[#allocation3] sm:$0xff] 0.0
          %1607 = vst [vmem:[#allocation3 + $0x8] sm:$0xff] 0.0
          %1608 = vst [vmem:[#allocation3 + $0x10] sm:$0xff] 0.0
          %1609 = vst [vmem:[#allocation3 + $0x18] sm:$0xff] 0.0
        $region112: #{tpu_custom_call.1} parent=63 // pred_fallthru
          _
        %s1610 = smul.u32 %s44, 512
        %s1611 = sshra.s32 %s1610, 7
        %s1612 = sand.u32 %s1610, 127
        %s1613 = scalar_lea.vmem [#allocation2], %s1611
        %v1614 = vld [vmem:[%s1613] sm:$0xf]
        %v1615 = vld [vmem:[%s581] sm:$0xff]
        %v1616 = vld [vmem:[%s581 + $0x8] sm:$0xff]
        %v1617 = vld [vmem:[%s581 + $0x10] sm:$0xff]
        %v1618 = vld [vmem:[%s581 + $0x18] sm:$0xff]
        %v1619 = vld [vmem:[%s581 + $0x20] sm:$0xff]
        %v1620 = vld [vmem:[%s581 + $0x28] sm:$0xff]
        %v1621 = vld [vmem:[%s581 + $0x30] sm:$0xff]
        %v1622 = vld [vmem:[%s581 + $0x38] sm:$0xff]
        %v1623 = vld [vmem:[%s581 + $0x40] sm:$0xff]
        %v1624 = vld [vmem:[%s581 + $0x48] sm:$0xff]
        %v1625 = vld [vmem:[%s581 + $0x50] sm:$0xff]
        %v1626 = vld [vmem:[%s581 + $0x58] sm:$0xff]
        %v1627 = vld [vmem:[%s581 + $0x60] sm:$0xff]
        %v1628 = vld [vmem:[%s581 + $0x68] sm:$0xff]
        %v1629 = vld [vmem:[%s581 + $0x70] sm:$0xff]
        %v1630 = vld [vmem:[%s581 + $0x78] sm:$0xff]
        %v1631 = vld [vmem:[%s581 + $0x80] sm:$0xff]
        %v1632 = vld [vmem:[%s581 + $0x88] sm:$0xff]
        %v1633 = vld [vmem:[%s581 + $0x90] sm:$0xff]
        %v1634 = vld [vmem:[%s581 + $0x98] sm:$0xff]
        %v1635 = vld [vmem:[%s581 + $0xa0] sm:$0xff]
        %v1636 = vld [vmem:[%s581 + $0xa8] sm:$0xff]
        %v1637 = vld [vmem:[%s581 + $0xb0] sm:$0xff]
        %v1638 = vld [vmem:[%s581 + $0xb8] sm:$0xff]
        %v1639 = vld [vmem:[%s581 + $0xc0] sm:$0xff]
        %v1640 = vld [vmem:[%s581 + $0xc8] sm:$0xff]
        %v1641 = vld [vmem:[%s581 + $0xd0] sm:$0xff]
        %v1642 = vld [vmem:[%s581 + $0xd8] sm:$0xff]
        %v1643 = vld [vmem:[%s581 + $0xe0] sm:$0xff]
        %v1644 = vld [vmem:[%s581 + $0xe8] sm:$0xff]
        %v1645 = vld [vmem:[%s581 + $0xf0] sm:$0xff]
        %v1646 = vld [vmem:[%s581 + $0xf8] sm:$0xff]
        %v1647 = vld [vmem:[%s581 + $0x100] sm:$0xff]
        %v1648 = vld [vmem:[%s581 + $0x108] sm:$0xff]
        %v1649 = vld [vmem:[%s581 + $0x110] sm:$0xff]
        %v1650 = vld [vmem:[%s581 + $0x118] sm:$0xff]
        %v1651 = vld [vmem:[%s581 + $0x120] sm:$0xff]
        %v1652 = vld [vmem:[%s581 + $0x128] sm:$0xff]
        %v1653 = vld [vmem:[%s581 + $0x130] sm:$0xff]
        %v1654 = vld [vmem:[%s581 + $0x138] sm:$0xff]
        %v1655 = vld [vmem:[%s581 + $0x140] sm:$0xff]
        %v1656 = vld [vmem:[%s581 + $0x148] sm:$0xff]
        %v1657 = vld [vmem:[%s581 + $0x150] sm:$0xff]
        %v1658 = vld [vmem:[%s581 + $0x158] sm:$0xff]
        %v1659 = vld [vmem:[%s581 + $0x160] sm:$0xff]
        %v1660 = vld [vmem:[%s581 + $0x168] sm:$0xff]
        %v1661 = vld [vmem:[%s581 + $0x170] sm:$0xff]
        %v1662 = vld [vmem:[%s581 + $0x178] sm:$0xff]
        %v1663 = vld [vmem:[%s581 + $0x180] sm:$0xff]
        %v1664 = vld [vmem:[%s581 + $0x188] sm:$0xff]
        %v1665 = vld [vmem:[%s581 + $0x190] sm:$0xff]
        %v1666 = vld [vmem:[%s581 + $0x198] sm:$0xff]
        %v1667 = vld [vmem:[%s581 + $0x1a0] sm:$0xff]
        %v1668 = vld [vmem:[%s581 + $0x1a8] sm:$0xff]
        %v1669 = vld [vmem:[%s581 + $0x1b0] sm:$0xff]
        %v1670 = vld [vmem:[%s581 + $0x1b8] sm:$0xff]
        %v1671 = vld [vmem:[%s581 + $0x1c0] sm:$0xff]
        %v1672 = vld [vmem:[%s581 + $0x1c8] sm:$0xff]
        %v1673 = vld [vmem:[%s581 + $0x1d0] sm:$0xff]
        %v1674 = vld [vmem:[%s581 + $0x1d8] sm:$0xff]
        %v1675 = vld [vmem:[%s581 + $0x1e0] sm:$0xff]
        %v1676 = vld [vmem:[%s581 + $0x1e8] sm:$0xff]
        %v1677 = vld [vmem:[%s581 + $0x1f0] sm:$0xff]
        %v1678 = vld [vmem:[%s581 + $0x1f8] sm:$0xff]
        %v1679 = vld [vmem:[%s581 + $0x200] sm:$0xff]
        %v1680 = vld [vmem:[%s581 + $0x208] sm:$0xff]
        %v1681 = vld [vmem:[%s581 + $0x210] sm:$0xff]
        %v1682 = vld [vmem:[%s581 + $0x218] sm:$0xff]
        %v1683 = vld [vmem:[%s581 + $0x220] sm:$0xff]
        %v1684 = vld [vmem:[%s581 + $0x228] sm:$0xff]
        %v1685 = vld [vmem:[%s581 + $0x230] sm:$0xff]
        %v1686 = vld [vmem:[%s581 + $0x238] sm:$0xff]
        %v1687 = vld [vmem:[%s581 + $0x240] sm:$0xff]
        %v1688 = vld [vmem:[%s581 + $0x248] sm:$0xff]
        %v1689 = vld [vmem:[%s581 + $0x250] sm:$0xff]
        %v1690 = vld [vmem:[%s581 + $0x258] sm:$0xff]
        %v1691 = vld [vmem:[%s581 + $0x260] sm:$0xff]
        %v1692 = vld [vmem:[%s581 + $0x268] sm:$0xff]
        %v1693 = vld [vmem:[%s581 + $0x270] sm:$0xff]
        %v1694 = vld [vmem:[%s581 + $0x278] sm:$0xff]
        %v1695 = vld [vmem:[%s581 + $0x280] sm:$0xff]
        %v1696 = vld [vmem:[%s581 + $0x288] sm:$0xff]
        %v1697 = vld [vmem:[%s581 + $0x290] sm:$0xff]
        %v1698 = vld [vmem:[%s581 + $0x298] sm:$0xff]
        %v1699 = vld [vmem:[%s581 + $0x2a0] sm:$0xff]
        %v1700 = vld [vmem:[%s581 + $0x2a8] sm:$0xff]
        %v1701 = vld [vmem:[%s581 + $0x2b0] sm:$0xff]
        %v1702 = vld [vmem:[%s581 + $0x2b8] sm:$0xff]
        %v1703 = vld [vmem:[%s581 + $0x2c0] sm:$0xff]
        %v1704 = vld [vmem:[%s581 + $0x2c8] sm:$0xff]
        %v1705 = vld [vmem:[%s581 + $0x2d0] sm:$0xff]
        %v1706 = vld [vmem:[%s581 + $0x2d8] sm:$0xff]
        %v1707 = vld [vmem:[%s581 + $0x2e0] sm:$0xff]
        %v1708 = vld [vmem:[%s581 + $0x2e8] sm:$0xff]
        %v1709 = vld [vmem:[%s581 + $0x2f0] sm:$0xff]
        %v1710 = vld [vmem:[%s581 + $0x2f8] sm:$0xff]
        %v1711 = vld [vmem:[%s581 + $0x300] sm:$0xff]
        %v1712 = vld [vmem:[%s581 + $0x308] sm:$0xff]
        %v1713 = vld [vmem:[%s581 + $0x310] sm:$0xff]
        %v1714 = vld [vmem:[%s581 + $0x318] sm:$0xff]
        %v1715 = vld [vmem:[%s581 + $0x320] sm:$0xff]
        %v1716 = vld [vmem:[%s581 + $0x328] sm:$0xff]
        %v1717 = vld [vmem:[%s581 + $0x330] sm:$0xff]
        %v1718 = vld [vmem:[%s581 + $0x338] sm:$0xff]
        %v1719 = vld [vmem:[%s581 + $0x340] sm:$0xff]
        %v1720 = vld [vmem:[%s581 + $0x348] sm:$0xff]
        %v1721 = vld [vmem:[%s581 + $0x350] sm:$0xff]
        %v1722 = vld [vmem:[%s581 + $0x358] sm:$0xff]
        %v1723 = vld [vmem:[%s581 + $0x360] sm:$0xff]
        %v1724 = vld [vmem:[%s581 + $0x368] sm:$0xff]
        %v1725 = vld [vmem:[%s581 + $0x370] sm:$0xff]
        %v1726 = vld [vmem:[%s581 + $0x378] sm:$0xff]
        %v1727 = vld [vmem:[%s581 + $0x380] sm:$0xff]
        %v1728 = vld [vmem:[%s581 + $0x388] sm:$0xff]
        %v1729 = vld [vmem:[%s581 + $0x390] sm:$0xff]
        %v1730 = vld [vmem:[%s581 + $0x398] sm:$0xff]
        %v1731 = vld [vmem:[%s581 + $0x3a0] sm:$0xff]
        %v1732 = vld [vmem:[%s581 + $0x3a8] sm:$0xff]
        %v1733 = vld [vmem:[%s581 + $0x3b0] sm:$0xff]
        %v1734 = vld [vmem:[%s581 + $0x3b8] sm:$0xff]
        %v1735 = vld [vmem:[%s581 + $0x3c0] sm:$0xff]
        %v1736 = vld [vmem:[%s581 + $0x3c8] sm:$0xff]
        %v1737 = vld [vmem:[%s581 + $0x3d0] sm:$0xff]
        %v1738 = vld [vmem:[%s581 + $0x3d8] sm:$0xff]
        %v1739 = vld [vmem:[%s581 + $0x3e0] sm:$0xff]
        %v1740 = vld [vmem:[%s581 + $0x3e8] sm:$0xff]
        %v1741 = vld [vmem:[%s581 + $0x3f0] sm:$0xff]
        %v1742 = vld [vmem:[%s581 + $0x3f8] sm:$0xff]
        %v1743 = vld [vmem:[%s581 + $0x400] sm:$0xff]
        %v1744 = vld [vmem:[%s581 + $0x408] sm:$0xff]
        %v1745 = vld [vmem:[%s581 + $0x410] sm:$0xff]
        %v1746 = vld [vmem:[%s581 + $0x418] sm:$0xff]
        %v1747 = vld [vmem:[%s581 + $0x420] sm:$0xff]
        %v1748 = vld [vmem:[%s581 + $0x428] sm:$0xff]
        %v1749 = vld [vmem:[%s581 + $0x430] sm:$0xff]
        %v1750 = vld [vmem:[%s581 + $0x438] sm:$0xff]
        %v1751 = vld [vmem:[%s581 + $0x440] sm:$0xff]
        %v1752 = vld [vmem:[%s581 + $0x448] sm:$0xff]
        %v1753 = vld [vmem:[%s581 + $0x450] sm:$0xff]
        %v1754 = vld [vmem:[%s581 + $0x458] sm:$0xff]
        %v1755 = vld [vmem:[%s581 + $0x460] sm:$0xff]
        %v1756 = vld [vmem:[%s581 + $0x468] sm:$0xff]
        %v1757 = vld [vmem:[%s581 + $0x470] sm:$0xff]
        %v1758 = vld [vmem:[%s581 + $0x478] sm:$0xff]
        %v1759 = vld [vmem:[%s581 + $0x480] sm:$0xff]
        %v1760 = vld [vmem:[%s581 + $0x488] sm:$0xff]
        %v1761 = vld [vmem:[%s581 + $0x490] sm:$0xff]
        %v1762 = vld [vmem:[%s581 + $0x498] sm:$0xff]
        %v1763 = vld [vmem:[%s581 + $0x4a0] sm:$0xff]
        %v1764 = vld [vmem:[%s581 + $0x4a8] sm:$0xff]
        %v1765 = vld [vmem:[%s581 + $0x4b0] sm:$0xff]
        %v1766 = vld [vmem:[%s581 + $0x4b8] sm:$0xff]
        %v1767 = vld [vmem:[%s581 + $0x4c0] sm:$0xff]
        %v1768 = vld [vmem:[%s581 + $0x4c8] sm:$0xff]
        %v1769 = vld [vmem:[%s581 + $0x4d0] sm:$0xff]
        %v1770 = vld [vmem:[%s581 + $0x4d8] sm:$0xff]
        %v1771 = vld [vmem:[%s581 + $0x4e0] sm:$0xff]
        %v1772 = vld [vmem:[%s581 + $0x4e8] sm:$0xff]
        %v1773 = vld [vmem:[%s581 + $0x4f0] sm:$0xff]
        %v1774 = vld [vmem:[%s581 + $0x4f8] sm:$0xff]
        %v1775 = vld [vmem:[%s581 + $0x500] sm:$0xff]
        %v1776 = vld [vmem:[%s581 + $0x508] sm:$0xff]
        %v1777 = vld [vmem:[%s581 + $0x510] sm:$0xff]
        %v1778 = vld [vmem:[%s581 + $0x518] sm:$0xff]
        %v1779 = vld [vmem:[%s581 + $0x520] sm:$0xff]
        %v1780 = vld [vmem:[%s581 + $0x528] sm:$0xff]
        %v1781 = vld [vmem:[%s581 + $0x530] sm:$0xff]
        %v1782 = vld [vmem:[%s581 + $0x538] sm:$0xff]
        %v1783 = vld [vmem:[%s581 + $0x540] sm:$0xff]
        %v1784 = vld [vmem:[%s581 + $0x548] sm:$0xff]
        %v1785 = vld [vmem:[%s581 + $0x550] sm:$0xff]
        %v1786 = vld [vmem:[%s581 + $0x558] sm:$0xff]
        %v1787 = vld [vmem:[%s581 + $0x560] sm:$0xff]
        %v1788 = vld [vmem:[%s581 + $0x568] sm:$0xff]
        %v1789 = vld [vmem:[%s581 + $0x570] sm:$0xff]
        %v1790 = vld [vmem:[%s581 + $0x578] sm:$0xff]
        %v1791 = vld [vmem:[%s581 + $0x580] sm:$0xff]
        %v1792 = vld [vmem:[%s581 + $0x588] sm:$0xff]
        %v1793 = vld [vmem:[%s581 + $0x590] sm:$0xff]
        %v1794 = vld [vmem:[%s581 + $0x598] sm:$0xff]
        %v1795 = vld [vmem:[%s581 + $0x5a0] sm:$0xff]
        %v1796 = vld [vmem:[%s581 + $0x5a8] sm:$0xff]
        %v1797 = vld [vmem:[%s581 + $0x5b0] sm:$0xff]
        %v1798 = vld [vmem:[%s581 + $0x5b8] sm:$0xff]
        %v1799 = vld [vmem:[%s581 + $0x5c0] sm:$0xff]
        %v1800 = vld [vmem:[%s581 + $0x5c8] sm:$0xff]
        %v1801 = vld [vmem:[%s581 + $0x5d0] sm:$0xff]
        %v1802 = vld [vmem:[%s581 + $0x5d8] sm:$0xff]
        %v1803 = vld [vmem:[%s581 + $0x5e0] sm:$0xff]
        %v1804 = vld [vmem:[%s581 + $0x5e8] sm:$0xff]
        %v1805 = vld [vmem:[%s581 + $0x5f0] sm:$0xff]
        %v1806 = vld [vmem:[%s581 + $0x5f8] sm:$0xff]
        %v1807 = vld [vmem:[%s581 + $0x600] sm:$0xff]
        %v1808 = vld [vmem:[%s581 + $0x608] sm:$0xff]
        %v1809 = vld [vmem:[%s581 + $0x610] sm:$0xff]
        %v1810 = vld [vmem:[%s581 + $0x618] sm:$0xff]
        %v1811 = vld [vmem:[%s581 + $0x620] sm:$0xff]
        %v1812 = vld [vmem:[%s581 + $0x628] sm:$0xff]
        %v1813 = vld [vmem:[%s581 + $0x630] sm:$0xff]
        %v1814 = vld [vmem:[%s581 + $0x638] sm:$0xff]
        %v1815 = vld [vmem:[%s581 + $0x640] sm:$0xff]
        %v1816 = vld [vmem:[%s581 + $0x648] sm:$0xff]
        %v1817 = vld [vmem:[%s581 + $0x650] sm:$0xff]
        %v1818 = vld [vmem:[%s581 + $0x658] sm:$0xff]
        %v1819 = vld [vmem:[%s581 + $0x660] sm:$0xff]
        %v1820 = vld [vmem:[%s581 + $0x668] sm:$0xff]
        %v1821 = vld [vmem:[%s581 + $0x670] sm:$0xff]
        %v1822 = vld [vmem:[%s581 + $0x678] sm:$0xff]
        %v1823 = vld [vmem:[%s581 + $0x680] sm:$0xff]
        %v1824 = vld [vmem:[%s581 + $0x688] sm:$0xff]
        %v1825 = vld [vmem:[%s581 + $0x690] sm:$0xff]
        %v1826 = vld [vmem:[%s581 + $0x698] sm:$0xff]
        %v1827 = vld [vmem:[%s581 + $0x6a0] sm:$0xff]
        %v1828 = vld [vmem:[%s581 + $0x6a8] sm:$0xff]
        %v1829 = vld [vmem:[%s581 + $0x6b0] sm:$0xff]
        %v1830 = vld [vmem:[%s581 + $0x6b8] sm:$0xff]
        %v1831 = vld [vmem:[%s581 + $0x6c0] sm:$0xff]
        %v1832 = vld [vmem:[%s581 + $0x6c8] sm:$0xff]
        %v1833 = vld [vmem:[%s581 + $0x6d0] sm:$0xff]
        %v1834 = vld [vmem:[%s581 + $0x6d8] sm:$0xff]
        %v1835 = vld [vmem:[%s581 + $0x6e0] sm:$0xff]
        %v1836 = vld [vmem:[%s581 + $0x6e8] sm:$0xff]
        %v1837 = vld [vmem:[%s581 + $0x6f0] sm:$0xff]
        %v1838 = vld [vmem:[%s581 + $0x6f8] sm:$0xff]
        %v1839 = vld [vmem:[%s581 + $0x700] sm:$0xff]
        %v1840 = vld [vmem:[%s581 + $0x708] sm:$0xff]
        %v1841 = vld [vmem:[%s581 + $0x710] sm:$0xff]
        %v1842 = vld [vmem:[%s581 + $0x718] sm:$0xff]
        %v1843 = vld [vmem:[%s581 + $0x720] sm:$0xff]
        %v1844 = vld [vmem:[%s581 + $0x728] sm:$0xff]
        %v1845 = vld [vmem:[%s581 + $0x730] sm:$0xff]
        %v1846 = vld [vmem:[%s581 + $0x738] sm:$0xff]
        %v1847 = vld [vmem:[%s581 + $0x740] sm:$0xff]
        %v1848 = vld [vmem:[%s581 + $0x748] sm:$0xff]
        %v1849 = vld [vmem:[%s581 + $0x750] sm:$0xff]
        %v1850 = vld [vmem:[%s581 + $0x758] sm:$0xff]
        %v1851 = vld [vmem:[%s581 + $0x760] sm:$0xff]
        %v1852 = vld [vmem:[%s581 + $0x768] sm:$0xff]
        %v1853 = vld [vmem:[%s581 + $0x770] sm:$0xff]
        %v1854 = vld [vmem:[%s581 + $0x778] sm:$0xff]
        %v1855 = vld [vmem:[%s581 + $0x780] sm:$0xff]
        %v1856 = vld [vmem:[%s581 + $0x788] sm:$0xff]
        %v1857 = vld [vmem:[%s581 + $0x790] sm:$0xff]
        %v1858 = vld [vmem:[%s581 + $0x798] sm:$0xff]
        %v1859 = vld [vmem:[%s581 + $0x7a0] sm:$0xff]
        %v1860 = vld [vmem:[%s581 + $0x7a8] sm:$0xff]
        %v1861 = vld [vmem:[%s581 + $0x7b0] sm:$0xff]
        %v1862 = vld [vmem:[%s581 + $0x7b8] sm:$0xff]
        %v1863 = vld [vmem:[%s581 + $0x7c0] sm:$0xff]
        %v1864 = vld [vmem:[%s581 + $0x7c8] sm:$0xff]
        %v1865 = vld [vmem:[%s581 + $0x7d0] sm:$0xff]
        %v1866 = vld [vmem:[%s581 + $0x7d8] sm:$0xff]
        %v1867 = vld [vmem:[%s581 + $0x7e0] sm:$0xff]
        %v1868 = vld [vmem:[%s581 + $0x7e8] sm:$0xff]
        %v1869 = vld [vmem:[%s581 + $0x7f0] sm:$0xff]
        %v1870 = vld [vmem:[%s581 + $0x7f8] sm:$0xff]
        %v1871 = vunpack.c.l.s8.bf16 %v1615
        %v1872 = vunpack.c.l.s8.bf16 %v1616
        %v1873 = vunpack.c.l.s8.bf16 %v1617
        %v1874 = vunpack.c.l.s8.bf16 %v1618
        %v1875 = vunpack.c.l.s8.bf16 %v1619
        %v1876 = vunpack.c.l.s8.bf16 %v1620
        %v1877 = vunpack.c.l.s8.bf16 %v1621
        %v1878 = vunpack.c.l.s8.bf16 %v1622
        %v1879 = vunpack.c.l.s8.bf16 %v1623
        %v1880 = vunpack.c.l.s8.bf16 %v1624
        %v1881 = vunpack.c.l.s8.bf16 %v1625
        %v1882 = vunpack.c.l.s8.bf16 %v1626
        %v1883 = vunpack.c.l.s8.bf16 %v1627
        %v1884 = vunpack.c.l.s8.bf16 %v1628
        %v1885 = vunpack.c.l.s8.bf16 %v1629
        %v1886 = vunpack.c.l.s8.bf16 %v1630
        %v1887 = vunpack.c.h.s8.bf16 %v1615
        %v1888 = vunpack.c.h.s8.bf16 %v1616
        %v1889 = vunpack.c.h.s8.bf16 %v1617
        %v1890 = vunpack.c.h.s8.bf16 %v1618
        %v1891 = vunpack.c.h.s8.bf16 %v1619
        %v1892 = vunpack.c.h.s8.bf16 %v1620
        %v1893 = vunpack.c.h.s8.bf16 %v1621
        %v1894 = vunpack.c.h.s8.bf16 %v1622
        %v1895 = vunpack.c.h.s8.bf16 %v1623
        %v1896 = vunpack.c.h.s8.bf16 %v1624
        %v1897 = vunpack.c.h.s8.bf16 %v1625
        %v1898 = vunpack.c.h.s8.bf16 %v1626
        %v1899 = vunpack.c.h.s8.bf16 %v1627
        %v1900 = vunpack.c.h.s8.bf16 %v1628
        %v1901 = vunpack.c.h.s8.bf16 %v1629
        %v1902 = vunpack.c.h.s8.bf16 %v1630
        %v1903 = vunpack.c.l.s8.bf16 %v1631
        %v1904 = vunpack.c.l.s8.bf16 %v1632
        %v1905 = vunpack.c.l.s8.bf16 %v1633
        %v1906 = vunpack.c.l.s8.bf16 %v1634
        %v1907 = vunpack.c.l.s8.bf16 %v1635
        %v1908 = vunpack.c.l.s8.bf16 %v1636
        %v1909 = vunpack.c.l.s8.bf16 %v1637
        %v1910 = vunpack.c.l.s8.bf16 %v1638
        %v1911 = vunpack.c.l.s8.bf16 %v1639
        %v1912 = vunpack.c.l.s8.bf16 %v1640
        %v1913 = vunpack.c.l.s8.bf16 %v1641
        %v1914 = vunpack.c.l.s8.bf16 %v1642
        %v1915 = vunpack.c.l.s8.bf16 %v1643
        %v1916 = vunpack.c.l.s8.bf16 %v1644
        %v1917 = vunpack.c.l.s8.bf16 %v1645
        %v1918 = vunpack.c.l.s8.bf16 %v1646
        %v1919 = vunpack.c.h.s8.bf16 %v1631
        %v1920 = vunpack.c.h.s8.bf16 %v1632
        %v1921 = vunpack.c.h.s8.bf16 %v1633
        %v1922 = vunpack.c.h.s8.bf16 %v1634
        %v1923 = vunpack.c.h.s8.bf16 %v1635
        %v1924 = vunpack.c.h.s8.bf16 %v1636
        %v1925 = vunpack.c.h.s8.bf16 %v1637
        %v1926 = vunpack.c.h.s8.bf16 %v1638
        %v1927 = vunpack.c.h.s8.bf16 %v1639
        %v1928 = vunpack.c.h.s8.bf16 %v1640
        %v1929 = vunpack.c.h.s8.bf16 %v1641
        %v1930 = vunpack.c.h.s8.bf16 %v1642
        %v1931 = vunpack.c.h.s8.bf16 %v1643
        %v1932 = vunpack.c.h.s8.bf16 %v1644
        %v1933 = vunpack.c.h.s8.bf16 %v1645
        %v1934 = vunpack.c.h.s8.bf16 %v1646
        %v1935 = vunpack.c.l.s8.bf16 %v1647
        %v1936 = vunpack.c.l.s8.bf16 %v1648
        %v1937 = vunpack.c.l.s8.bf16 %v1649
        %v1938 = vunpack.c.l.s8.bf16 %v1650
        %v1939 = vunpack.c.l.s8.bf16 %v1651
        %v1940 = vunpack.c.l.s8.bf16 %v1652
        %v1941 = vunpack.c.l.s8.bf16 %v1653
        %v1942 = vunpack.c.l.s8.bf16 %v1654
        %v1943 = vunpack.c.l.s8.bf16 %v1655
        %v1944 = vunpack.c.l.s8.bf16 %v1656
        %v1945 = vunpack.c.l.s8.bf16 %v1657
        %v1946 = vunpack.c.l.s8.bf16 %v1658
        %v1947 = vunpack.c.l.s8.bf16 %v1659
        %v1948 = vunpack.c.l.s8.bf16 %v1660
        %v1949 = vunpack.c.l.s8.bf16 %v1661
        %v1950 = vunpack.c.l.s8.bf16 %v1662
        %v1951 = vunpack.c.h.s8.bf16 %v1647
        %v1952 = vunpack.c.h.s8.bf16 %v1648
        %v1953 = vunpack.c.h.s8.bf16 %v1649
        %v1954 = vunpack.c.h.s8.bf16 %v1650
        %v1955 = vunpack.c.h.s8.bf16 %v1651
        %v1956 = vunpack.c.h.s8.bf16 %v1652
        %v1957 = vunpack.c.h.s8.bf16 %v1653
        %v1958 = vunpack.c.h.s8.bf16 %v1654
        %v1959 = vunpack.c.h.s8.bf16 %v1655
        %v1960 = vunpack.c.h.s8.bf16 %v1656
        %v1961 = vunpack.c.h.s8.bf16 %v1657
        %v1962 = vunpack.c.h.s8.bf16 %v1658
        %v1963 = vunpack.c.h.s8.bf16 %v1659
        %v1964 = vunpack.c.h.s8.bf16 %v1660
        %v1965 = vunpack.c.h.s8.bf16 %v1661
        %v1966 = vunpack.c.h.s8.bf16 %v1662
        %v1967 = vunpack.c.l.s8.bf16 %v1663
        %v1968 = vunpack.c.l.s8.bf16 %v1664
        %v1969 = vunpack.c.l.s8.bf16 %v1665
        %v1970 = vunpack.c.l.s8.bf16 %v1666
        %v1971 = vunpack.c.l.s8.bf16 %v1667
        %v1972 = vunpack.c.l.s8.bf16 %v1668
        %v1973 = vunpack.c.l.s8.bf16 %v1669
        %v1974 = vunpack.c.l.s8.bf16 %v1670
        %v1975 = vunpack.c.l.s8.bf16 %v1671
        %v1976 = vunpack.c.l.s8.bf16 %v1672
        %v1977 = vunpack.c.l.s8.bf16 %v1673
        %v1978 = vunpack.c.l.s8.bf16 %v1674
        %v1979 = vunpack.c.l.s8.bf16 %v1675
        %v1980 = vunpack.c.l.s8.bf16 %v1676
        %v1981 = vunpack.c.l.s8.bf16 %v1677
        %v1982 = vunpack.c.l.s8.bf16 %v1678
        %v1983 = vunpack.c.h.s8.bf16 %v1663
        %v1984 = vunpack.c.h.s8.bf16 %v1664
        %v1985 = vunpack.c.h.s8.bf16 %v1665
        %v1986 = vunpack.c.h.s8.bf16 %v1666
        %v1987 = vunpack.c.h.s8.bf16 %v1667
        %v1988 = vunpack.c.h.s8.bf16 %v1668
        %v1989 = vunpack.c.h.s8.bf16 %v1669
        %v1990 = vunpack.c.h.s8.bf16 %v1670
        %v1991 = vunpack.c.h.s8.bf16 %v1671
        %v1992 = vunpack.c.h.s8.bf16 %v1672
        %v1993 = vunpack.c.h.s8.bf16 %v1673
        %v1994 = vunpack.c.h.s8.bf16 %v1674
        %v1995 = vunpack.c.h.s8.bf16 %v1675
        %v1996 = vunpack.c.h.s8.bf16 %v1676
        %v1997 = vunpack.c.h.s8.bf16 %v1677
        %v1998 = vunpack.c.h.s8.bf16 %v1678
        %v1999 = vunpack.c.l.s8.bf16 %v1679
        %v2000 = vunpack.c.l.s8.bf16 %v1680
        %v2001 = vunpack.c.l.s8.bf16 %v1681
        %v2002 = vunpack.c.l.s8.bf16 %v1682
        %v2003 = vunpack.c.l.s8.bf16 %v1683
        %v2004 = vunpack.c.l.s8.bf16 %v1684
        %v2005 = vunpack.c.l.s8.bf16 %v1685
        %v2006 = vunpack.c.l.s8.bf16 %v1686
        %v2007 = vunpack.c.l.s8.bf16 %v1687
        %v2008 = vunpack.c.l.s8.bf16 %v1688
        %v2009 = vunpack.c.l.s8.bf16 %v1689
        %v2010 = vunpack.c.l.s8.bf16 %v1690
        %v2011 = vunpack.c.l.s8.bf16 %v1691
        %v2012 = vunpack.c.l.s8.bf16 %v1692
        %v2013 = vunpack.c.l.s8.bf16 %v1693
        %v2014 = vunpack.c.l.s8.bf16 %v1694
        %v2015 = vunpack.c.h.s8.bf16 %v1679
        %v2016 = vunpack.c.h.s8.bf16 %v1680
        %v2017 = vunpack.c.h.s8.bf16 %v1681
        %v2018 = vunpack.c.h.s8.bf16 %v1682
        %v2019 = vunpack.c.h.s8.bf16 %v1683
        %v2020 = vunpack.c.h.s8.bf16 %v1684
        %v2021 = vunpack.c.h.s8.bf16 %v1685
        %v2022 = vunpack.c.h.s8.bf16 %v1686
        %v2023 = vunpack.c.h.s8.bf16 %v1687
        %v2024 = vunpack.c.h.s8.bf16 %v1688
        %v2025 = vunpack.c.h.s8.bf16 %v1689
        %v2026 = vunpack.c.h.s8.bf16 %v1690
        %v2027 = vunpack.c.h.s8.bf16 %v1691
        %v2028 = vunpack.c.h.s8.bf16 %v1692
        %v2029 = vunpack.c.h.s8.bf16 %v1693
        %v2030 = vunpack.c.h.s8.bf16 %v1694
        %v2031 = vunpack.c.l.s8.bf16 %v1695
        %v2032 = vunpack.c.l.s8.bf16 %v1696
        %v2033 = vunpack.c.l.s8.bf16 %v1697
        %v2034 = vunpack.c.l.s8.bf16 %v1698
        %v2035 = vunpack.c.l.s8.bf16 %v1699
        %v2036 = vunpack.c.l.s8.bf16 %v1700
        %v2037 = vunpack.c.l.s8.bf16 %v1701
        %v2038 = vunpack.c.l.s8.bf16 %v1702
        %v2039 = vunpack.c.l.s8.bf16 %v1703
        %v2040 = vunpack.c.l.s8.bf16 %v1704
        %v2041 = vunpack.c.l.s8.bf16 %v1705
        %v2042 = vunpack.c.l.s8.bf16 %v1706
        %v2043 = vunpack.c.l.s8.bf16 %v1707
        %v2044 = vunpack.c.l.s8.bf16 %v1708
        %v2045 = vunpack.c.l.s8.bf16 %v1709
        %v2046 = vunpack.c.l.s8.bf16 %v1710
        %v2047 = vunpack.c.h.s8.bf16 %v1695
        %v2048 = vunpack.c.h.s8.bf16 %v1696
        %v2049 = vunpack.c.h.s8.bf16 %v1697
        %v2050 = vunpack.c.h.s8.bf16 %v1698
        %v2051 = vunpack.c.h.s8.bf16 %v1699
        %v2052 = vunpack.c.h.s8.bf16 %v1700
        %v2053 = vunpack.c.h.s8.bf16 %v1701
        %v2054 = vunpack.c.h.s8.bf16 %v1702
        %v2055 = vunpack.c.h.s8.bf16 %v1703
        %v2056 = vunpack.c.h.s8.bf16 %v1704
        %v2057 = vunpack.c.h.s8.bf16 %v1705
        %v2058 = vunpack.c.h.s8.bf16 %v1706
        %v2059 = vunpack.c.h.s8.bf16 %v1707
        %v2060 = vunpack.c.h.s8.bf16 %v1708
        %v2061 = vunpack.c.h.s8.bf16 %v1709
        %v2062 = vunpack.c.h.s8.bf16 %v1710
        %v2063 = vunpack.c.l.s8.bf16 %v1711
        %v2064 = vunpack.c.l.s8.bf16 %v1712
        %v2065 = vunpack.c.l.s8.bf16 %v1713
        %v2066 = vunpack.c.l.s8.bf16 %v1714
        %v2067 = vunpack.c.l.s8.bf16 %v1715
        %v2068 = vunpack.c.l.s8.bf16 %v1716
        %v2069 = vunpack.c.l.s8.bf16 %v1717
        %v2070 = vunpack.c.l.s8.bf16 %v1718
        %v2071 = vunpack.c.l.s8.bf16 %v1719
        %v2072 = vunpack.c.l.s8.bf16 %v1720
        %v2073 = vunpack.c.l.s8.bf16 %v1721
        %v2074 = vunpack.c.l.s8.bf16 %v1722
        %v2075 = vunpack.c.l.s8.bf16 %v1723
        %v2076 = vunpack.c.l.s8.bf16 %v1724
        %v2077 = vunpack.c.l.s8.bf16 %v1725
        %v2078 = vunpack.c.l.s8.bf16 %v1726
        %v2079 = vunpack.c.h.s8.bf16 %v1711
        %v2080 = vunpack.c.h.s8.bf16 %v1712
        %v2081 = vunpack.c.h.s8.bf16 %v1713
        %v2082 = vunpack.c.h.s8.bf16 %v1714
        %v2083 = vunpack.c.h.s8.bf16 %v1715
        %v2084 = vunpack.c.h.s8.bf16 %v1716
        %v2085 = vunpack.c.h.s8.bf16 %v1717
        %v2086 = vunpack.c.h.s8.bf16 %v1718
        %v2087 = vunpack.c.h.s8.bf16 %v1719
        %v2088 = vunpack.c.h.s8.bf16 %v1720
        %v2089 = vunpack.c.h.s8.bf16 %v1721
        %v2090 = vunpack.c.h.s8.bf16 %v1722
        %v2091 = vunpack.c.h.s8.bf16 %v1723
        %v2092 = vunpack.c.h.s8.bf16 %v1724
        %v2093 = vunpack.c.h.s8.bf16 %v1725
        %v2094 = vunpack.c.h.s8.bf16 %v1726
        %v2095 = vunpack.c.l.s8.bf16 %v1727
        %v2096 = vunpack.c.l.s8.bf16 %v1728
        %v2097 = vunpack.c.l.s8.bf16 %v1729
        %v2098 = vunpack.c.l.s8.bf16 %v1730
        %v2099 = vunpack.c.l.s8.bf16 %v1731
        %v2100 = vunpack.c.l.s8.bf16 %v1732
        %v2101 = vunpack.c.l.s8.bf16 %v1733
        %v2102 = vunpack.c.l.s8.bf16 %v1734
        %v2103 = vunpack.c.l.s8.bf16 %v1735
        %v2104 = vunpack.c.l.s8.bf16 %v1736
        %v2105 = vunpack.c.l.s8.bf16 %v1737
        %v2106 = vunpack.c.l.s8.bf16 %v1738
        %v2107 = vunpack.c.l.s8.bf16 %v1739
        %v2108 = vunpack.c.l.s8.bf16 %v1740
        %v2109 = vunpack.c.l.s8.bf16 %v1741
        %v2110 = vunpack.c.l.s8.bf16 %v1742
        %v2111 = vunpack.c.h.s8.bf16 %v1727
        %v2112 = vunpack.c.h.s8.bf16 %v1728
        %v2113 = vunpack.c.h.s8.bf16 %v1729
        %v2114 = vunpack.c.h.s8.bf16 %v1730
        %v2115 = vunpack.c.h.s8.bf16 %v1731
        %v2116 = vunpack.c.h.s8.bf16 %v1732
        %v2117 = vunpack.c.h.s8.bf16 %v1733
        %v2118 = vunpack.c.h.s8.bf16 %v1734
        %v2119 = vunpack.c.h.s8.bf16 %v1735
        %v2120 = vunpack.c.h.s8.bf16 %v1736
        %v2121 = vunpack.c.h.s8.bf16 %v1737
        %v2122 = vunpack.c.h.s8.bf16 %v1738
        %v2123 = vunpack.c.h.s8.bf16 %v1739
        %v2124 = vunpack.c.h.s8.bf16 %v1740
        %v2125 = vunpack.c.h.s8.bf16 %v1741
        %v2126 = vunpack.c.h.s8.bf16 %v1742
        %v2127 = vunpack.c.l.s8.bf16 %v1743
        %v2128 = vunpack.c.l.s8.bf16 %v1744
        %v2129 = vunpack.c.l.s8.bf16 %v1745
        %v2130 = vunpack.c.l.s8.bf16 %v1746
        %v2131 = vunpack.c.l.s8.bf16 %v1747
        %v2132 = vunpack.c.l.s8.bf16 %v1748
        %v2133 = vunpack.c.l.s8.bf16 %v1749
        %v2134 = vunpack.c.l.s8.bf16 %v1750
        %v2135 = vunpack.c.l.s8.bf16 %v1751
        %v2136 = vunpack.c.l.s8.bf16 %v1752
        %v2137 = vunpack.c.l.s8.bf16 %v1753
        %v2138 = vunpack.c.l.s8.bf16 %v1754
        %v2139 = vunpack.c.l.s8.bf16 %v1755
        %v2140 = vunpack.c.l.s8.bf16 %v1756
        %v2141 = vunpack.c.l.s8.bf16 %v1757
        %v2142 = vunpack.c.l.s8.bf16 %v1758
        %v2143 = vunpack.c.h.s8.bf16 %v1743
        %v2144 = vunpack.c.h.s8.bf16 %v1744
        %v2145 = vunpack.c.h.s8.bf16 %v1745
        %v2146 = vunpack.c.h.s8.bf16 %v1746
        %v2147 = vunpack.c.h.s8.bf16 %v1747
        %v2148 = vunpack.c.h.s8.bf16 %v1748
        %v2149 = vunpack.c.h.s8.bf16 %v1749
        %v2150 = vunpack.c.h.s8.bf16 %v1750
        %v2151 = vunpack.c.h.s8.bf16 %v1751
        %v2152 = vunpack.c.h.s8.bf16 %v1752
        %v2153 = vunpack.c.h.s8.bf16 %v1753
        %v2154 = vunpack.c.h.s8.bf16 %v1754
        %v2155 = vunpack.c.h.s8.bf16 %v1755
        %v2156 = vunpack.c.h.s8.bf16 %v1756
        %v2157 = vunpack.c.h.s8.bf16 %v1757
        %v2158 = vunpack.c.h.s8.bf16 %v1758
        %v2159 = vunpack.c.l.s8.bf16 %v1759
        %v2160 = vunpack.c.l.s8.bf16 %v1760
        %v2161 = vunpack.c.l.s8.bf16 %v1761
        %v2162 = vunpack.c.l.s8.bf16 %v1762
        %v2163 = vunpack.c.l.s8.bf16 %v1763
        %v2164 = vunpack.c.l.s8.bf16 %v1764
        %v2165 = vunpack.c.l.s8.bf16 %v1765
        %v2166 = vunpack.c.l.s8.bf16 %v1766
        %v2167 = vunpack.c.l.s8.bf16 %v1767
        %v2168 = vunpack.c.l.s8.bf16 %v1768
        %v2169 = vunpack.c.l.s8.bf16 %v1769
        %v2170 = vunpack.c.l.s8.bf16 %v1770
        %v2171 = vunpack.c.l.s8.bf16 %v1771
        %v2172 = vunpack.c.l.s8.bf16 %v1772
        %v2173 = vunpack.c.l.s8.bf16 %v1773
        %v2174 = vunpack.c.l.s8.bf16 %v1774
        %v2175 = vunpack.c.h.s8.bf16 %v1759
        %v2176 = vunpack.c.h.s8.bf16 %v1760
        %v2177 = vunpack.c.h.s8.bf16 %v1761
        %v2178 = vunpack.c.h.s8.bf16 %v1762
        %v2179 = vunpack.c.h.s8.bf16 %v1763
        %v2180 = vunpack.c.h.s8.bf16 %v1764
        %v2181 = vunpack.c.h.s8.bf16 %v1765
        %v2182 = vunpack.c.h.s8.bf16 %v1766
        %v2183 = vunpack.c.h.s8.bf16 %v1767
        %v2184 = vunpack.c.h.s8.bf16 %v1768
        %v2185 = vunpack.c.h.s8.bf16 %v1769
        %v2186 = vunpack.c.h.s8.bf16 %v1770
        %v2187 = vunpack.c.h.s8.bf16 %v1771
        %v2188 = vunpack.c.h.s8.bf16 %v1772
        %v2189 = vunpack.c.h.s8.bf16 %v1773
        %v2190 = vunpack.c.h.s8.bf16 %v1774
        %v2191 = vunpack.c.l.s8.bf16 %v1775
        %v2192 = vunpack.c.l.s8.bf16 %v1776
        %v2193 = vunpack.c.l.s8.bf16 %v1777
        %v2194 = vunpack.c.l.s8.bf16 %v1778
        %v2195 = vunpack.c.l.s8.bf16 %v1779
        %v2196 = vunpack.c.l.s8.bf16 %v1780
        %v2197 = vunpack.c.l.s8.bf16 %v1781
        %v2198 = vunpack.c.l.s8.bf16 %v1782
        %v2199 = vunpack.c.l.s8.bf16 %v1783
        %v2200 = vunpack.c.l.s8.bf16 %v1784
        %v2201 = vunpack.c.l.s8.bf16 %v1785
        %v2202 = vunpack.c.l.s8.bf16 %v1786
        %v2203 = vunpack.c.l.s8.bf16 %v1787
        %v2204 = vunpack.c.l.s8.bf16 %v1788
        %v2205 = vunpack.c.l.s8.bf16 %v1789
        %v2206 = vunpack.c.l.s8.bf16 %v1790
        %v2207 = vunpack.c.h.s8.bf16 %v1775
        %v2208 = vunpack.c.h.s8.bf16 %v1776
        %v2209 = vunpack.c.h.s8.bf16 %v1777
        %v2210 = vunpack.c.h.s8.bf16 %v1778
        %v2211 = vunpack.c.h.s8.bf16 %v1779
        %v2212 = vunpack.c.h.s8.bf16 %v1780
        %v2213 = vunpack.c.h.s8.bf16 %v1781
        %v2214 = vunpack.c.h.s8.bf16 %v1782
        %v2215 = vunpack.c.h.s8.bf16 %v1783
        %v2216 = vunpack.c.h.s8.bf16 %v1784
        %v2217 = vunpack.c.h.s8.bf16 %v1785
        %v2218 = vunpack.c.h.s8.bf16 %v1786
        %v2219 = vunpack.c.h.s8.bf16 %v1787
        %v2220 = vunpack.c.h.s8.bf16 %v1788
        %v2221 = vunpack.c.h.s8.bf16 %v1789
        %v2222 = vunpack.c.h.s8.bf16 %v1790
        %v2223 = vunpack.c.l.s8.bf16 %v1791
        %v2224 = vunpack.c.l.s8.bf16 %v1792
        %v2225 = vunpack.c.l.s8.bf16 %v1793
        %v2226 = vunpack.c.l.s8.bf16 %v1794
        %v2227 = vunpack.c.l.s8.bf16 %v1795
        %v2228 = vunpack.c.l.s8.bf16 %v1796
        %v2229 = vunpack.c.l.s8.bf16 %v1797
        %v2230 = vunpack.c.l.s8.bf16 %v1798
        %v2231 = vunpack.c.l.s8.bf16 %v1799
        %v2232 = vunpack.c.l.s8.bf16 %v1800
        %v2233 = vunpack.c.l.s8.bf16 %v1801
        %v2234 = vunpack.c.l.s8.bf16 %v1802
        %v2235 = vunpack.c.l.s8.bf16 %v1803
        %v2236 = vunpack.c.l.s8.bf16 %v1804
        %v2237 = vunpack.c.l.s8.bf16 %v1805
        %v2238 = vunpack.c.l.s8.bf16 %v1806
        %v2239 = vunpack.c.h.s8.bf16 %v1791
        %v2240 = vunpack.c.h.s8.bf16 %v1792
        %v2241 = vunpack.c.h.s8.bf16 %v1793
        %v2242 = vunpack.c.h.s8.bf16 %v1794
        %v2243 = vunpack.c.h.s8.bf16 %v1795
        %v2244 = vunpack.c.h.s8.bf16 %v1796
        %v2245 = vunpack.c.h.s8.bf16 %v1797
        %v2246 = vunpack.c.h.s8.bf16 %v1798
        %v2247 = vunpack.c.h.s8.bf16 %v1799
        %v2248 = vunpack.c.h.s8.bf16 %v1800
        %v2249 = vunpack.c.h.s8.bf16 %v1801
        %v2250 = vunpack.c.h.s8.bf16 %v1802
        %v2251 = vunpack.c.h.s8.bf16 %v1803
        %v2252 = vunpack.c.h.s8.bf16 %v1804
        %v2253 = vunpack.c.h.s8.bf16 %v1805
        %v2254 = vunpack.c.h.s8.bf16 %v1806
        %v2255 = vunpack.c.l.s8.bf16 %v1807
        %v2256 = vunpack.c.l.s8.bf16 %v1808
        %v2257 = vunpack.c.l.s8.bf16 %v1809
        %v2258 = vunpack.c.l.s8.bf16 %v1810
        %v2259 = vunpack.c.l.s8.bf16 %v1811
        %v2260 = vunpack.c.l.s8.bf16 %v1812
        %v2261 = vunpack.c.l.s8.bf16 %v1813
        %v2262 = vunpack.c.l.s8.bf16 %v1814
        %v2263 = vunpack.c.l.s8.bf16 %v1815
        %v2264 = vunpack.c.l.s8.bf16 %v1816
        %v2265 = vunpack.c.l.s8.bf16 %v1817
        %v2266 = vunpack.c.l.s8.bf16 %v1818
        %v2267 = vunpack.c.l.s8.bf16 %v1819
        %v2268 = vunpack.c.l.s8.bf16 %v1820
        %v2269 = vunpack.c.l.s8.bf16 %v1821
        %v2270 = vunpack.c.l.s8.bf16 %v1822
        %v2271 = vunpack.c.h.s8.bf16 %v1807
        %v2272 = vunpack.c.h.s8.bf16 %v1808
        %v2273 = vunpack.c.h.s8.bf16 %v1809
        %v2274 = vunpack.c.h.s8.bf16 %v1810
        %v2275 = vunpack.c.h.s8.bf16 %v1811
        %v2276 = vunpack.c.h.s8.bf16 %v1812
        %v2277 = vunpack.c.h.s8.bf16 %v1813
        %v2278 = vunpack.c.h.s8.bf16 %v1814
        %v2279 = vunpack.c.h.s8.bf16 %v1815
        %v2280 = vunpack.c.h.s8.bf16 %v1816
        %v2281 = vunpack.c.h.s8.bf16 %v1817
        %v2282 = vunpack.c.h.s8.bf16 %v1818
        %v2283 = vunpack.c.h.s8.bf16 %v1819
        %v2284 = vunpack.c.h.s8.bf16 %v1820
        %v2285 = vunpack.c.h.s8.bf16 %v1821
        %v2286 = vunpack.c.h.s8.bf16 %v1822
        %v2287 = vunpack.c.l.s8.bf16 %v1823
        %v2288 = vunpack.c.l.s8.bf16 %v1824
        %v2289 = vunpack.c.l.s8.bf16 %v1825
        %v2290 = vunpack.c.l.s8.bf16 %v1826
        %v2291 = vunpack.c.l.s8.bf16 %v1827
        %v2292 = vunpack.c.l.s8.bf16 %v1828
        %v2293 = vunpack.c.l.s8.bf16 %v1829
        %v2294 = vunpack.c.l.s8.bf16 %v1830
        %v2295 = vunpack.c.l.s8.bf16 %v1831
        %v2296 = vunpack.c.l.s8.bf16 %v1832
        %v2297 = vunpack.c.l.s8.bf16 %v1833
        %v2298 = vunpack.c.l.s8.bf16 %v1834
        %v2299 = vunpack.c.l.s8.bf16 %v1835
        %v2300 = vunpack.c.l.s8.bf16 %v1836
        %v2301 = vunpack.c.l.s8.bf16 %v1837
        %v2302 = vunpack.c.l.s8.bf16 %v1838
        %v2303 = vunpack.c.h.s8.bf16 %v1823
        %v2304 = vunpack.c.h.s8.bf16 %v1824
        %v2305 = vunpack.c.h.s8.bf16 %v1825
        %v2306 = vunpack.c.h.s8.bf16 %v1826
        %v2307 = vunpack.c.h.s8.bf16 %v1827
        %v2308 = vunpack.c.h.s8.bf16 %v1828
        %v2309 = vunpack.c.h.s8.bf16 %v1829
        %v2310 = vunpack.c.h.s8.bf16 %v1830
        %v2311 = vunpack.c.h.s8.bf16 %v1831
        %v2312 = vunpack.c.h.s8.bf16 %v1832
        %v2313 = vunpack.c.h.s8.bf16 %v1833
        %v2314 = vunpack.c.h.s8.bf16 %v1834
        %v2315 = vunpack.c.h.s8.bf16 %v1835
        %v2316 = vunpack.c.h.s8.bf16 %v1836
        %v2317 = vunpack.c.h.s8.bf16 %v1837
        %v2318 = vunpack.c.h.s8.bf16 %v1838
        %v2319 = vunpack.c.l.s8.bf16 %v1839
        %v2320 = vunpack.c.l.s8.bf16 %v1840
        %v2321 = vunpack.c.l.s8.bf16 %v1841
        %v2322 = vunpack.c.l.s8.bf16 %v1842
        %v2323 = vunpack.c.l.s8.bf16 %v1843
        %v2324 = vunpack.c.l.s8.bf16 %v1844
        %v2325 = vunpack.c.l.s8.bf16 %v1845
        %v2326 = vunpack.c.l.s8.bf16 %v1846
        %v2327 = vunpack.c.l.s8.bf16 %v1847
        %v2328 = vunpack.c.l.s8.bf16 %v1848
        %v2329 = vunpack.c.l.s8.bf16 %v1849
        %v2330 = vunpack.c.l.s8.bf16 %v1850
        %v2331 = vunpack.c.l.s8.bf16 %v1851
        %v2332 = vunpack.c.l.s8.bf16 %v1852
        %v2333 = vunpack.c.l.s8.bf16 %v1853
        %v2334 = vunpack.c.l.s8.bf16 %v1854
        %v2335 = vunpack.c.h.s8.bf16 %v1839
        %v2336 = vunpack.c.h.s8.bf16 %v1840
        %v2337 = vunpack.c.h.s8.bf16 %v1841
        %v2338 = vunpack.c.h.s8.bf16 %v1842
        %v2339 = vunpack.c.h.s8.bf16 %v1843
        %v2340 = vunpack.c.h.s8.bf16 %v1844
        %v2341 = vunpack.c.h.s8.bf16 %v1845
        %v2342 = vunpack.c.h.s8.bf16 %v1846
        %v2343 = vunpack.c.h.s8.bf16 %v1847
        %v2344 = vunpack.c.h.s8.bf16 %v1848
        %v2345 = vunpack.c.h.s8.bf16 %v1849
        %v2346 = vunpack.c.h.s8.bf16 %v1850
        %v2347 = vunpack.c.h.s8.bf16 %v1851
        %v2348 = vunpack.c.h.s8.bf16 %v1852
        %v2349 = vunpack.c.h.s8.bf16 %v1853
        %v2350 = vunpack.c.h.s8.bf16 %v1854
        %v2351 = vunpack.c.l.s8.bf16 %v1855
        %v2352 = vunpack.c.l.s8.bf16 %v1856
        %v2353 = vunpack.c.l.s8.bf16 %v1857
        %v2354 = vunpack.c.l.s8.bf16 %v1858
        %v2355 = vunpack.c.l.s8.bf16 %v1859
        %v2356 = vunpack.c.l.s8.bf16 %v1860
        %v2357 = vunpack.c.l.s8.bf16 %v1861
        %v2358 = vunpack.c.l.s8.bf16 %v1862
        %v2359 = vunpack.c.l.s8.bf16 %v1863
        %v2360 = vunpack.c.l.s8.bf16 %v1864
        %v2361 = vunpack.c.l.s8.bf16 %v1865
        %v2362 = vunpack.c.l.s8.bf16 %v1866
        %v2363 = vunpack.c.l.s8.bf16 %v1867
        %v2364 = vunpack.c.l.s8.bf16 %v1868
        %v2365 = vunpack.c.l.s8.bf16 %v1869
        %v2366 = vunpack.c.l.s8.bf16 %v1870
        %v2367 = vunpack.c.h.s8.bf16 %v1855
        %v2368 = vunpack.c.h.s8.bf16 %v1856
        %v2369 = vunpack.c.h.s8.bf16 %v1857
        %v2370 = vunpack.c.h.s8.bf16 %v1858
        %v2371 = vunpack.c.h.s8.bf16 %v1859
        %v2372 = vunpack.c.h.s8.bf16 %v1860
        %v2373 = vunpack.c.h.s8.bf16 %v1861
        %v2374 = vunpack.c.h.s8.bf16 %v1862
        %v2375 = vunpack.c.h.s8.bf16 %v1863
        %v2376 = vunpack.c.h.s8.bf16 %v1864
        %v2377 = vunpack.c.h.s8.bf16 %v1865
        %v2378 = vunpack.c.h.s8.bf16 %v1866
        %v2379 = vunpack.c.h.s8.bf16 %v1867
        %v2380 = vunpack.c.h.s8.bf16 %v1868
        %v2381 = vunpack.c.h.s8.bf16 %v1869
        %v2382 = vunpack.c.h.s8.bf16 %v1870
        %v2383 = vld [vmem:[#allocation3] sm:$0xff]
        %v2384 = vld [vmem:[#allocation3 + $0x8] sm:$0xff]
        %v2385 = vld [vmem:[#allocation3 + $0x10] sm:$0xff]
        %v2386 = vld [vmem:[#allocation3 + $0x18] sm:$0xff]
        %v2389 = vunpack.c.l.s4 1966171168
        %v2390 = vunpack.c.0.s8 %v2389
        %v2391 = vlaneseq
        %v2392 = vshrl.u32 %v2391, 7
        %v2393 = vsub.s32 %v2390, %v2392
        %v2394 = vrot.slane %v1614, %v2393
        %v2395 = vcombine.high %v2394, %v2394
        %v2397 = vunpack.c.l.s4 1966171168
        %v2398 = vunpack.c.0.s8 %v2397
        %v2399 = vlaneseq
        %v2400 = vshrl.u32 %v2399, 7
        %v2401 = vsub.s32 %v2398, %v2400
        %v2402 = vrot.slane %v2394, %v2401
        %v2404 = vunpack.c.l.s4 1966171168
        %v2405 = vunpack.c.0.s8 %v2404
        %v2406 = vlaneseq
        %v2407 = vshrl.u32 %v2406, 7
        %v2408 = vsub.s32 %v2405, %v2407
        %v2409 = vrot.slane %v2395, %v2408
        %v2410 = vcombine.high %v2402, %v2402
        %v2411 = vcombine.high %v2409, %v2409
        %2416 = vmatprep.subr.bf16.mxu0 %v1984
        %2417 = vmatpush1.bf16.msra.mxu0 %v1983
        %2418 = vmatprep.subr.bf16.mxu0 %v1968
        %2419 = vmatpush1.bf16.msra.mxu0 %v1967
        %2420 = vmatprep.subr.bf16.mxu0 %v1952
        %2421 = vmatpush1.bf16.msra.mxu0 %v1951
        %2422 = vmatprep.subr.bf16.mxu0 %v1936
        %2423 = vmatpush1.bf16.msra.mxu0 %v1935
        %2424 = vmatprep.subr.bf16.mxu0 %v1920
        %2425 = vmatpush1.bf16.msra.mxu0 %v1919
        %2426 = vmatprep.subr.bf16.mxu0 %v1904
        %2427 = vmatpush1.bf16.msra.mxu0 %v1903
        %2428 = vmatprep.subr.bf16.mxu0 %v1888
        %2429 = vmatpush1.bf16.msra.mxu0 %v1887
        %2430 = vmatprep.subr.bf16.mxu0 %v1872
        %2431 = vmatpush1.bf16.msra.mxu0 %v1871
        %2432 = vmatprep.subr.bf16.mxu0 %v2112
        %2433 = vmatpush2.bf16.msra.mxu0 %v2111
        %2434 = vmatprep.subr.bf16.mxu0 %v2096
        %2435 = vmatpush2.bf16.msra.mxu0 %v2095
        %2436 = vmatprep.subr.bf16.mxu0 %v2080
        %2437 = vmatpush2.bf16.msra.mxu0 %v2079
        %2438 = vmatprep.subr.bf16.mxu0 %v2064
        %2439 = vmatpush2.bf16.msra.mxu0 %v2063
        %2440 = vmatprep.subr.bf16.mxu0 %v2048
        %2441 = vmatpush2.bf16.msra.mxu0 %v2047
        %2442 = vmatprep.subr.bf16.mxu0 %v2032
        %2443 = vmatpush2.bf16.msra.mxu0 %v2031
        %2444 = vmatprep.subr.bf16.mxu0 %v2016
        %2445 = vmatpush2.bf16.msra.mxu0 %v2015
        %2446 = vmatprep.subr.bf16.mxu0 %v2000
        %2447 = vmatpush2.bf16.msra.mxu0 %v1999
        %2448 = vmatprep.mubr.bf16.mxu0 %v2409
        %2449 = vmatmul.mubr.bf16.gmra.mxu0 %v2402
        %v2450 = vpop.f32.mrf.mxu0
        %v2451 = vadd.f32 0.0, %v2450
        %v2452 = vpop.f32.mrf.mxu0
        %v2453 = vadd.f32 0.0, %v2452
        %v2454 = vpop.f32.mrf.mxu0
        %v2455 = vpop.f32.mrf.mxu0
        %2456 = vdwg.mxu0
        %2457 = vmatprep.subr.bf16.mxu0 %v2240
        %2458 = vmatpush1.bf16.msra.mxu0 %v2239
        %2459 = vmatprep.subr.bf16.mxu0 %v2224
        %2460 = vmatpush1.bf16.msra.mxu0 %v2223
        %2461 = vmatprep.subr.bf16.mxu0 %v2208
        %2462 = vmatpush1.bf16.msra.mxu0 %v2207
        %2463 = vmatprep.subr.bf16.mxu0 %v2192
        %2464 = vmatpush1.bf16.msra.mxu0 %v2191
        %2465 = vmatprep.subr.bf16.mxu0 %v2176
        %2466 = vmatpush1.bf16.msra.mxu0 %v2175
        %2467 = vmatprep.subr.bf16.mxu0 %v2160
        %2468 = vmatpush1.bf16.msra.mxu0 %v2159
        %2469 = vmatprep.subr.bf16.mxu0 %v2144
        %2470 = vmatpush1.bf16.msra.mxu0 %v2143
        %2471 = vmatprep.subr.bf16.mxu0 %v2128
        %2472 = vmatpush1.bf16.msra.mxu0 %v2127
        %2473 = vmatprep.subr.bf16.mxu0 %v2368
        %2474 = vmatpush2.bf16.msra.mxu0 %v2367
        %2475 = vmatprep.subr.bf16.mxu0 %v2352
        %2476 = vmatpush2.bf16.msra.mxu0 %v2351
        %2477 = vmatprep.subr.bf16.mxu0 %v2336
        %2478 = vmatpush2.bf16.msra.mxu0 %v2335
        %2479 = vmatprep.subr.bf16.mxu0 %v2320
        %2480 = vmatpush2.bf16.msra.mxu0 %v2319
        %2481 = vmatprep.subr.bf16.mxu0 %v2304
        %2482 = vmatpush2.bf16.msra.mxu0 %v2303
        %2483 = vmatprep.subr.bf16.mxu0 %v2288
        %2484 = vmatpush2.bf16.msra.mxu0 %v2287
        %2485 = vmatprep.subr.bf16.mxu0 %v2272
        %2486 = vmatpush2.bf16.msra.mxu0 %v2271
        %2487 = vmatprep.subr.bf16.mxu0 %v2256
        %2488 = vmatpush2.bf16.msra.mxu0 %v2255
        %2489 = vmatprep.mubr.bf16.mxu0 %v2411
        %2490 = vmatmul.mubr.bf16.gmra.mxu0 %v2410
        %v2491 = vpop.f32.mrf.mxu0
        %v2492 = vadd.f32 %v2451, %v2491
        %v2493 = vpop.f32.mrf.mxu0
        %v2494 = vadd.f32 %v2453, %v2493
        %v2495 = vpop.f32.mrf.mxu0
        %v2496 = vpop.f32.mrf.mxu0
        %2497 = vdwg.mxu0
        %2498 = vmatprep.subr.bf16.mxu0 %v1986
        %2499 = vmatpush1.bf16.msra.mxu0 %v1985
        %2500 = vmatprep.subr.bf16.mxu0 %v1970
        %2501 = vmatpush1.bf16.msra.mxu0 %v1969
        %2502 = vmatprep.subr.bf16.mxu0 %v1954
        %2503 = vmatpush1.bf16.msra.mxu0 %v1953
        %2504 = vmatprep.subr.bf16.mxu0 %v1938
        %2505 = vmatpush1.bf16.msra.mxu0 %v1937
        %2506 = vmatprep.subr.bf16.mxu0 %v1922
        %2507 = vmatpush1.bf16.msra.mxu0 %v1921
        %2508 = vmatprep.subr.bf16.mxu0 %v1906
        %2509 = vmatpush1.bf16.msra.mxu0 %v1905
        %2510 = vmatprep.subr.bf16.mxu0 %v1890
        %2511 = vmatpush1.bf16.msra.mxu0 %v1889
        %2512 = vmatprep.subr.bf16.mxu0 %v1874
        %2513 = vmatpush1.bf16.msra.mxu0 %v1873
        %2514 = vmatprep.subr.bf16.mxu0 %v2114
        %2515 = vmatpush2.bf16.msra.mxu0 %v2113
        %2516 = vmatprep.subr.bf16.mxu0 %v2098
        %2517 = vmatpush2.bf16.msra.mxu0 %v2097
        %2518 = vmatprep.subr.bf16.mxu0 %v2082
        %2519 = vmatpush2.bf16.msra.mxu0 %v2081
        %2520 = vmatprep.subr.bf16.mxu0 %v2066
        %2521 = vmatpush2.bf16.msra.mxu0 %v2065
        %2522 = vmatprep.subr.bf16.mxu0 %v2050
        %2523 = vmatpush2.bf16.msra.mxu0 %v2049
        %2524 = vmatprep.subr.bf16.mxu0 %v2034
        %2525 = vmatpush2.bf16.msra.mxu0 %v2033
        %2526 = vmatprep.subr.bf16.mxu0 %v2018
        %2527 = vmatpush2.bf16.msra.mxu0 %v2017
        %2528 = vmatprep.subr.bf16.mxu0 %v2002
        %2529 = vmatpush2.bf16.msra.mxu0 %v2001
        %2530 = vmatprep.mubr.bf16.mxu0 %v2409
        %2531 = vmatmul.mubr.bf16.gmra.mxu0 %v2402
        %v2532 = vpop.f32.mrf.mxu0
        %v2533 = vadd.f32 0.0, %v2532
        %v2534 = vpop.f32.mrf.mxu0
        %v2535 = vadd.f32 0.0, %v2534
        %v2536 = vpop.f32.mrf.mxu0
        %v2537 = vpop.f32.mrf.mxu0
        %2538 = vdwg.mxu0
        %2539 = vmatprep.subr.bf16.mxu0 %v2242
        %2540 = vmatpush1.bf16.msra.mxu0 %v2241
        %2541 = vmatprep.subr.bf16.mxu0 %v2226
        %2542 = vmatpush1.bf16.msra.mxu0 %v2225
        %2543 = vmatprep.subr.bf16.mxu0 %v2210
        %2544 = vmatpush1.bf16.msra.mxu0 %v2209
        %2545 = vmatprep.subr.bf16.mxu0 %v2194
        %2546 = vmatpush1.bf16.msra.mxu0 %v2193
        %2547 = vmatprep.subr.bf16.mxu0 %v2178
        %2548 = vmatpush1.bf16.msra.mxu0 %v2177
        %2549 = vmatprep.subr.bf16.mxu0 %v2162
        %2550 = vmatpush1.bf16.msra.mxu0 %v2161
        %2551 = vmatprep.subr.bf16.mxu0 %v2146
        %2552 = vmatpush1.bf16.msra.mxu0 %v2145
        %2553 = vmatprep.subr.bf16.mxu0 %v2130
        %2554 = vmatpush1.bf16.msra.mxu0 %v2129
        %2555 = vmatprep.subr.bf16.mxu0 %v2370
        %2556 = vmatpush2.bf16.msra.mxu0 %v2369
        %2557 = vmatprep.subr.bf16.mxu0 %v2354
        %2558 = vmatpush2.bf16.msra.mxu0 %v2353
        %2559 = vmatprep.subr.bf16.mxu0 %v2338
        %2560 = vmatpush2.bf16.msra.mxu0 %v2337
        %2561 = vmatprep.subr.bf16.mxu0 %v2322
        %2562 = vmatpush2.bf16.msra.mxu0 %v2321
        %2563 = vmatprep.subr.bf16.mxu0 %v2306
        %2564 = vmatpush2.bf16.msra.mxu0 %v2305
        %2565 = vmatprep.subr.bf16.mxu0 %v2290
        %2566 = vmatpush2.bf16.msra.mxu0 %v2289
        %2567 = vmatprep.subr.bf16.mxu0 %v2274
        %2568 = vmatpush2.bf16.msra.mxu0 %v2273
        %2569 = vmatprep.subr.bf16.mxu0 %v2258
        %2570 = vmatpush2.bf16.msra.mxu0 %v2257
        %2571 = vmatprep.mubr.bf16.mxu0 %v2411
        %2572 = vmatmul.mubr.bf16.gmra.mxu0 %v2410
        %v2573 = vpop.f32.mrf.mxu0
        %v2574 = vadd.f32 %v2533, %v2573
        %v2575 = vpop.f32.mrf.mxu0
        %v2576 = vadd.f32 %v2535, %v2575
        %v2577 = vpop.f32.mrf.mxu0
        %v2578 = vpop.f32.mrf.mxu0
        %2579 = vdwg.mxu0
        %2580 = vmatprep.subr.bf16.mxu0 %v1988
        %2581 = vmatpush1.bf16.msra.mxu0 %v1987
        %2582 = vmatprep.subr.bf16.mxu0 %v1972
        %2583 = vmatpush1.bf16.msra.mxu0 %v1971
        %2584 = vmatprep.subr.bf16.mxu0 %v1956
        %2585 = vmatpush1.bf16.msra.mxu0 %v1955
        %2586 = vmatprep.subr.bf16.mxu0 %v1940
        %2587 = vmatpush1.bf16.msra.mxu0 %v1939
        %2588 = vmatprep.subr.bf16.mxu0 %v1924
        %2589 = vmatpush1.bf16.msra.mxu0 %v1923
        %2590 = vmatprep.subr.bf16.mxu0 %v1908
        %2591 = vmatpush1.bf16.msra.mxu0 %v1907
        %2592 = vmatprep.subr.bf16.mxu0 %v1892
        %2593 = vmatpush1.bf16.msra.mxu0 %v1891
        %2594 = vmatprep.subr.bf16.mxu0 %v1876
        %2595 = vmatpush1.bf16.msra.mxu0 %v1875
        %2596 = vmatprep.subr.bf16.mxu0 %v2116
        %2597 = vmatpush2.bf16.msra.mxu0 %v2115
        %2598 = vmatprep.subr.bf16.mxu0 %v2100
        %2599 = vmatpush2.bf16.msra.mxu0 %v2099
        %2600 = vmatprep.subr.bf16.mxu0 %v2084
        %2601 = vmatpush2.bf16.msra.mxu0 %v2083
        %2602 = vmatprep.subr.bf16.mxu0 %v2068
        %2603 = vmatpush2.bf16.msra.mxu0 %v2067
        %2604 = vmatprep.subr.bf16.mxu0 %v2052
        %2605 = vmatpush2.bf16.msra.mxu0 %v2051
        %2606 = vmatprep.subr.bf16.mxu0 %v2036
        %2607 = vmatpush2.bf16.msra.mxu0 %v2035
        %2608 = vmatprep.subr.bf16.mxu0 %v2020
        %2609 = vmatpush2.bf16.msra.mxu0 %v2019
        %2610 = vmatprep.subr.bf16.mxu0 %v2004
        %2611 = vmatpush2.bf16.msra.mxu0 %v2003
        %2612 = vmatprep.mubr.bf16.mxu0 %v2409
        %2613 = vmatmul.mubr.bf16.gmra.mxu0 %v2402
        %v2614 = vpop.f32.mrf.mxu0
        %v2615 = vadd.f32 0.0, %v2614
        %v2616 = vpop.f32.mrf.mxu0
        %v2617 = vadd.f32 0.0, %v2616
        %v2618 = vpop.f32.mrf.mxu0
        %v2619 = vpop.f32.mrf.mxu0
        %2620 = vdwg.mxu0
        %2621 = vmatprep.subr.bf16.mxu0 %v2244
        %2622 = vmatpush1.bf16.msra.mxu0 %v2243
        %2623 = vmatprep.subr.bf16.mxu0 %v2228
        %2624 = vmatpush1.bf16.msra.mxu0 %v2227
        %2625 = vmatprep.subr.bf16.mxu0 %v2212
        %2626 = vmatpush1.bf16.msra.mxu0 %v2211
        %2627 = vmatprep.subr.bf16.mxu0 %v2196
        %2628 = vmatpush1.bf16.msra.mxu0 %v2195
        %2629 = vmatprep.subr.bf16.mxu0 %v2180
        %2630 = vmatpush1.bf16.msra.mxu0 %v2179
        %2631 = vmatprep.subr.bf16.mxu0 %v2164
        %2632 = vmatpush1.bf16.msra.mxu0 %v2163
        %2633 = vmatprep.subr.bf16.mxu0 %v2148
        %2634 = vmatpush1.bf16.msra.mxu0 %v2147
        %2635 = vmatprep.subr.bf16.mxu0 %v2132
        %2636 = vmatpush1.bf16.msra.mxu0 %v2131
        %2637 = vmatprep.subr.bf16.mxu0 %v2372
        %2638 = vmatpush2.bf16.msra.mxu0 %v2371
        %2639 = vmatprep.subr.bf16.mxu0 %v2356
        %2640 = vmatpush2.bf16.msra.mxu0 %v2355
        %2641 = vmatprep.subr.bf16.mxu0 %v2340
        %2642 = vmatpush2.bf16.msra.mxu0 %v2339
        %2643 = vmatprep.subr.bf16.mxu0 %v2324
        %2644 = vmatpush2.bf16.msra.mxu0 %v2323
        %2645 = vmatprep.subr.bf16.mxu0 %v2308
        %2646 = vmatpush2.bf16.msra.mxu0 %v2307
        %2647 = vmatprep.subr.bf16.mxu0 %v2292
        %2648 = vmatpush2.bf16.msra.mxu0 %v2291
        %2649 = vmatprep.subr.bf16.mxu0 %v2276
        %2650 = vmatpush2.bf16.msra.mxu0 %v2275
        %2651 = vmatprep.subr.bf16.mxu0 %v2260
        %2652 = vmatpush2.bf16.msra.mxu0 %v2259
        %2653 = vmatprep.mubr.bf16.mxu0 %v2411
        %2654 = vmatmul.mubr.bf16.gmra.mxu0 %v2410
        %v2655 = vpop.f32.mrf.mxu0
        %v2656 = vadd.f32 %v2615, %v2655
        %v2657 = vpop.f32.mrf.mxu0
        %v2658 = vadd.f32 %v2617, %v2657
        %v2659 = vpop.f32.mrf.mxu0
        %v2660 = vpop.f32.mrf.mxu0
        %2661 = vdwg.mxu0
        %2662 = vmatprep.subr.bf16.mxu0 %v1990
        %2663 = vmatpush1.bf16.msra.mxu0 %v1989
        %2664 = vmatprep.subr.bf16.mxu0 %v1974
        %2665 = vmatpush1.bf16.msra.mxu0 %v1973
        %2666 = vmatprep.subr.bf16.mxu0 %v1958
        %2667 = vmatpush1.bf16.msra.mxu0 %v1957
        %2668 = vmatprep.subr.bf16.mxu0 %v1942
        %2669 = vmatpush1.bf16.msra.mxu0 %v1941
        %2670 = vmatprep.subr.bf16.mxu0 %v1926
        %2671 = vmatpush1.bf16.msra.mxu0 %v1925
        %2672 = vmatprep.subr.bf16.mxu0 %v1910
        %2673 = vmatpush1.bf16.msra.mxu0 %v1909
        %2674 = vmatprep.subr.bf16.mxu0 %v1894
        %2675 = vmatpush1.bf16.msra.mxu0 %v1893
        %2676 = vmatprep.subr.bf16.mxu0 %v1878
        %2677 = vmatpush1.bf16.msra.mxu0 %v1877
        %2678 = vmatprep.subr.bf16.mxu0 %v2118
        %2679 = vmatpush2.bf16.msra.mxu0 %v2117
        %2680 = vmatprep.subr.bf16.mxu0 %v2102
        %2681 = vmatpush2.bf16.msra.mxu0 %v2101
        %2682 = vmatprep.subr.bf16.mxu0 %v2086
        %2683 = vmatpush2.bf16.msra.mxu0 %v2085
        %2684 = vmatprep.subr.bf16.mxu0 %v2070
        %2685 = vmatpush2.bf16.msra.mxu0 %v2069
        %2686 = vmatprep.subr.bf16.mxu0 %v2054
        %2687 = vmatpush2.bf16.msra.mxu0 %v2053
        %2688 = vmatprep.subr.bf16.mxu0 %v2038
        %2689 = vmatpush2.bf16.msra.mxu0 %v2037
        %2690 = vmatprep.subr.bf16.mxu0 %v2022
        %2691 = vmatpush2.bf16.msra.mxu0 %v2021
        %2692 = vmatprep.subr.bf16.mxu0 %v2006
        %2693 = vmatpush2.bf16.msra.mxu0 %v2005
        %2694 = vmatprep.mubr.bf16.mxu0 %v2409
        %2695 = vmatmul.mubr.bf16.gmra.mxu0 %v2402
        %v2696 = vpop.f32.mrf.mxu0
        %v2697 = vadd.f32 0.0, %v2696
        %v2698 = vpop.f32.mrf.mxu0
        %v2699 = vadd.f32 0.0, %v2698
        %v2700 = vpop.f32.mrf.mxu0
        %v2701 = vpop.f32.mrf.mxu0
        %2702 = vdwg.mxu0
        %2703 = vmatprep.subr.bf16.mxu0 %v2246
        %2704 = vmatpush1.bf16.msra.mxu0 %v2245
        %2705 = vmatprep.subr.bf16.mxu0 %v2230
        %2706 = vmatpush1.bf16.msra.mxu0 %v2229
        %2707 = vmatprep.subr.bf16.mxu0 %v2214
        %2708 = vmatpush1.bf16.msra.mxu0 %v2213
        %2709 = vmatprep.subr.bf16.mxu0 %v2198
        %2710 = vmatpush1.bf16.msra.mxu0 %v2197
        %2711 = vmatprep.subr.bf16.mxu0 %v2182
        %2712 = vmatpush1.bf16.msra.mxu0 %v2181
        %2713 = vmatprep.subr.bf16.mxu0 %v2166
        %2714 = vmatpush1.bf16.msra.mxu0 %v2165
        %2715 = vmatprep.subr.bf16.mxu0 %v2150
        %2716 = vmatpush1.bf16.msra.mxu0 %v2149
        %2717 = vmatprep.subr.bf16.mxu0 %v2134
        %2718 = vmatpush1.bf16.msra.mxu0 %v2133
        %2719 = vmatprep.subr.bf16.mxu0 %v2374
        %2720 = vmatpush2.bf16.msra.mxu0 %v2373
        %2721 = vmatprep.subr.bf16.mxu0 %v2358
        %2722 = vmatpush2.bf16.msra.mxu0 %v2357
        %2723 = vmatprep.subr.bf16.mxu0 %v2342
        %2724 = vmatpush2.bf16.msra.mxu0 %v2341
        %2725 = vmatprep.subr.bf16.mxu0 %v2326
        %2726 = vmatpush2.bf16.msra.mxu0 %v2325
        %2727 = vmatprep.subr.bf16.mxu0 %v2310
        %2728 = vmatpush2.bf16.msra.mxu0 %v2309
        %2729 = vmatprep.subr.bf16.mxu0 %v2294
        %2730 = vmatpush2.bf16.msra.mxu0 %v2293
        %2731 = vmatprep.subr.bf16.mxu0 %v2278
        %2732 = vmatpush2.bf16.msra.mxu0 %v2277
        %2733 = vmatprep.subr.bf16.mxu0 %v2262
        %2734 = vmatpush2.bf16.msra.mxu0 %v2261
        %2735 = vmatprep.mubr.bf16.mxu0 %v2411
        %2736 = vmatmul.mubr.bf16.gmra.mxu0 %v2410
        %v2737 = vpop.f32.mrf.mxu0
        %v2738 = vadd.f32 %v2697, %v2737
        %v2739 = vpop.f32.mrf.mxu0
        %v2740 = vadd.f32 %v2699, %v2739
        %v2741 = vpop.f32.mrf.mxu0
        %v2742 = vpop.f32.mrf.mxu0
        %2743 = vdwg.mxu0
        %2744 = vmatprep.subr.bf16.mxu0 %v1992
        %2745 = vmatpush1.bf16.msra.mxu0 %v1991
        %2746 = vmatprep.subr.bf16.mxu0 %v1976
        %2747 = vmatpush1.bf16.msra.mxu0 %v1975
        %2748 = vmatprep.subr.bf16.mxu0 %v1960
        %2749 = vmatpush1.bf16.msra.mxu0 %v1959
        %2750 = vmatprep.subr.bf16.mxu0 %v1944
        %2751 = vmatpush1.bf16.msra.mxu0 %v1943
        %2752 = vmatprep.subr.bf16.mxu0 %v1928
        %2753 = vmatpush1.bf16.msra.mxu0 %v1927
        %2754 = vmatprep.subr.bf16.mxu0 %v1912
        %2755 = vmatpush1.bf16.msra.mxu0 %v1911
        %2756 = vmatprep.subr.bf16.mxu0 %v1896
        %2757 = vmatpush1.bf16.msra.mxu0 %v1895
        %2758 = vmatprep.subr.bf16.mxu0 %v1880
        %2759 = vmatpush1.bf16.msra.mxu0 %v1879
        %2760 = vmatprep.subr.bf16.mxu0 %v2120
        %2761 = vmatpush2.bf16.msra.mxu0 %v2119
        %2762 = vmatprep.subr.bf16.mxu0 %v2104
        %2763 = vmatpush2.bf16.msra.mxu0 %v2103
        %2764 = vmatprep.subr.bf16.mxu0 %v2088
        %2765 = vmatpush2.bf16.msra.mxu0 %v2087
        %2766 = vmatprep.subr.bf16.mxu0 %v2072
        %2767 = vmatpush2.bf16.msra.mxu0 %v2071
        %2768 = vmatprep.subr.bf16.mxu0 %v2056
        %2769 = vmatpush2.bf16.msra.mxu0 %v2055
        %2770 = vmatprep.subr.bf16.mxu0 %v2040
        %2771 = vmatpush2.bf16.msra.mxu0 %v2039
        %2772 = vmatprep.subr.bf16.mxu0 %v2024
        %2773 = vmatpush2.bf16.msra.mxu0 %v2023
        %2774 = vmatprep.subr.bf16.mxu0 %v2008
        %2775 = vmatpush2.bf16.msra.mxu0 %v2007
        %2776 = vmatprep.mubr.bf16.mxu0 %v2409
        %2777 = vmatmul.mubr.bf16.gmra.mxu0 %v2402
        %v2778 = vpop.f32.mrf.mxu0
        %v2779 = vadd.f32 0.0, %v2778
        %v2780 = vpop.f32.mrf.mxu0
        %v2781 = vadd.f32 0.0, %v2780
        %v2782 = vpop.f32.mrf.mxu0
        %v2783 = vpop.f32.mrf.mxu0
        %2784 = vdwg.mxu0
        %2785 = vmatprep.subr.bf16.mxu0 %v2248
        %2786 = vmatpush1.bf16.msra.mxu0 %v2247
        %2787 = vmatprep.subr.bf16.mxu0 %v2232
        %2788 = vmatpush1.bf16.msra.mxu0 %v2231
        %2789 = vmatprep.subr.bf16.mxu0 %v2216
        %2790 = vmatpush1.bf16.msra.mxu0 %v2215
        %2791 = vmatprep.subr.bf16.mxu0 %v2200
        %2792 = vmatpush1.bf16.msra.mxu0 %v2199
        %2793 = vmatprep.subr.bf16.mxu0 %v2184
        %2794 = vmatpush1.bf16.msra.mxu0 %v2183
        %2795 = vmatprep.subr.bf16.mxu0 %v2168
        %2796 = vmatpush1.bf16.msra.mxu0 %v2167
        %2797 = vmatprep.subr.bf16.mxu0 %v2152
        %2798 = vmatpush1.bf16.msra.mxu0 %v2151
        %2799 = vmatprep.subr.bf16.mxu0 %v2136
        %2800 = vmatpush1.bf16.msra.mxu0 %v2135
        %2801 = vmatprep.subr.bf16.mxu0 %v2376
        %2802 = vmatpush2.bf16.msra.mxu0 %v2375
        %2803 = vmatprep.subr.bf16.mxu0 %v2360
        %2804 = vmatpush2.bf16.msra.mxu0 %v2359
        %2805 = vmatprep.subr.bf16.mxu0 %v2344
        %2806 = vmatpush2.bf16.msra.mxu0 %v2343
        %2807 = vmatprep.subr.bf16.mxu0 %v2328
        %2808 = vmatpush2.bf16.msra.mxu0 %v2327
        %2809 = vmatprep.subr.bf16.mxu0 %v2312
        %2810 = vmatpush2.bf16.msra.mxu0 %v2311
        %2811 = vmatprep.subr.bf16.mxu0 %v2296
        %2812 = vmatpush2.bf16.msra.mxu0 %v2295
        %2813 = vmatprep.subr.bf16.mxu0 %v2280
        %2814 = vmatpush2.bf16.msra.mxu0 %v2279
        %2815 = vmatprep.subr.bf16.mxu0 %v2264
        %2816 = vmatpush2.bf16.msra.mxu0 %v2263
        %2817 = vmatprep.mubr.bf16.mxu0 %v2411
        %2818 = vmatmul.mubr.bf16.gmra.mxu0 %v2410
        %v2819 = vpop.f32.mrf.mxu0
        %v2820 = vadd.f32 %v2779, %v2819
        %v2821 = vpop.f32.mrf.mxu0
        %v2822 = vadd.f32 %v2781, %v2821
        %v2823 = vpop.f32.mrf.mxu0
        %v2824 = vpop.f32.mrf.mxu0
        %2825 = vdwg.mxu0
        %2826 = vmatprep.subr.bf16.mxu0 %v1994
        %2827 = vmatpush1.bf16.msra.mxu0 %v1993
        %2828 = vmatprep.subr.bf16.mxu0 %v1978
        %2829 = vmatpush1.bf16.msra.mxu0 %v1977
        %2830 = vmatprep.subr.bf16.mxu0 %v1962
        %2831 = vmatpush1.bf16.msra.mxu0 %v1961
        %2832 = vmatprep.subr.bf16.mxu0 %v1946
        %2833 = vmatpush1.bf16.msra.mxu0 %v1945
        %2834 = vmatprep.subr.bf16.mxu0 %v1930
        %2835 = vmatpush1.bf16.msra.mxu0 %v1929
        %2836 = vmatprep.subr.bf16.mxu0 %v1914
        %2837 = vmatpush1.bf16.msra.mxu0 %v1913
        %2838 = vmatprep.subr.bf16.mxu0 %v1898
        %2839 = vmatpush1.bf16.msra.mxu0 %v1897
        %2840 = vmatprep.subr.bf16.mxu0 %v1882
        %2841 = vmatpush1.bf16.msra.mxu0 %v1881
        %2842 = vmatprep.subr.bf16.mxu0 %v2122
        %2843 = vmatpush2.bf16.msra.mxu0 %v2121
        %2844 = vmatprep.subr.bf16.mxu0 %v2106
        %2845 = vmatpush2.bf16.msra.mxu0 %v2105
        %2846 = vmatprep.subr.bf16.mxu0 %v2090
        %2847 = vmatpush2.bf16.msra.mxu0 %v2089
        %2848 = vmatprep.subr.bf16.mxu0 %v2074
        %2849 = vmatpush2.bf16.msra.mxu0 %v2073
        %2850 = vmatprep.subr.bf16.mxu0 %v2058
        %2851 = vmatpush2.bf16.msra.mxu0 %v2057
        %2852 = vmatprep.subr.bf16.mxu0 %v2042
        %2853 = vmatpush2.bf16.msra.mxu0 %v2041
        %2854 = vmatprep.subr.bf16.mxu0 %v2026
        %2855 = vmatpush2.bf16.msra.mxu0 %v2025
        %2856 = vmatprep.subr.bf16.mxu0 %v2010
        %2857 = vmatpush2.bf16.msra.mxu0 %v2009
        %2858 = vmatprep.mubr.bf16.mxu0 %v2409
        %2859 = vmatmul.mubr.bf16.gmra.mxu0 %v2402
        %v2860 = vpop.f32.mrf.mxu0
        %v2861 = vadd.f32 0.0, %v2860
        %v2862 = vpop.f32.mrf.mxu0
        %v2863 = vadd.f32 0.0, %v2862
        %v2864 = vpop.f32.mrf.mxu0
        %v2865 = vpop.f32.mrf.mxu0
        %2866 = vdwg.mxu0
        %2867 = vmatprep.subr.bf16.mxu0 %v2250
        %2868 = vmatpush1.bf16.msra.mxu0 %v2249
        %2869 = vmatprep.subr.bf16.mxu0 %v2234
        %2870 = vmatpush1.bf16.msra.mxu0 %v2233
        %2871 = vmatprep.subr.bf16.mxu0 %v2218
        %2872 = vmatpush1.bf16.msra.mxu0 %v2217
        %2873 = vmatprep.subr.bf16.mxu0 %v2202
        %2874 = vmatpush1.bf16.msra.mxu0 %v2201
        %2875 = vmatprep.subr.bf16.mxu0 %v2186
        %2876 = vmatpush1.bf16.msra.mxu0 %v2185
        %2877 = vmatprep.subr.bf16.mxu0 %v2170
        %2878 = vmatpush1.bf16.msra.mxu0 %v2169
        %2879 = vmatprep.subr.bf16.mxu0 %v2154
        %2880 = vmatpush1.bf16.msra.mxu0 %v2153
        %2881 = vmatprep.subr.bf16.mxu0 %v2138
        %2882 = vmatpush1.bf16.msra.mxu0 %v2137
        %2883 = vmatprep.subr.bf16.mxu0 %v2378
        %2884 = vmatpush2.bf16.msra.mxu0 %v2377
        %2885 = vmatprep.subr.bf16.mxu0 %v2362
        %2886 = vmatpush2.bf16.msra.mxu0 %v2361
        %2887 = vmatprep.subr.bf16.mxu0 %v2346
        %2888 = vmatpush2.bf16.msra.mxu0 %v2345
        %2889 = vmatprep.subr.bf16.mxu0 %v2330
        %2890 = vmatpush2.bf16.msra.mxu0 %v2329
        %2891 = vmatprep.subr.bf16.mxu0 %v2314
        %2892 = vmatpush2.bf16.msra.mxu0 %v2313
        %2893 = vmatprep.subr.bf16.mxu0 %v2298
        %2894 = vmatpush2.bf16.msra.mxu0 %v2297
        %2895 = vmatprep.subr.bf16.mxu0 %v2282
        %2896 = vmatpush2.bf16.msra.mxu0 %v2281
        %2897 = vmatprep.subr.bf16.mxu0 %v2266
        %2898 = vmatpush2.bf16.msra.mxu0 %v2265
        %2899 = vmatprep.mubr.bf16.mxu0 %v2411
        %2900 = vmatmul.mubr.bf16.gmra.mxu0 %v2410
        %v2901 = vpop.f32.mrf.mxu0
        %v2902 = vadd.f32 %v2861, %v2901
        %v2903 = vpop.f32.mrf.mxu0
        %v2904 = vadd.f32 %v2863, %v2903
        %v2905 = vpop.f32.mrf.mxu0
        %v2906 = vpop.f32.mrf.mxu0
        %2907 = vdwg.mxu0
        %2908 = vmatprep.subr.bf16.mxu0 %v1996
        %2909 = vmatpush1.bf16.msra.mxu0 %v1995
        %2910 = vmatprep.subr.bf16.mxu0 %v1980
        %2911 = vmatpush1.bf16.msra.mxu0 %v1979
        %2912 = vmatprep.subr.bf16.mxu0 %v1964
        %2913 = vmatpush1.bf16.msra.mxu0 %v1963
        %2914 = vmatprep.subr.bf16.mxu0 %v1948
        %2915 = vmatpush1.bf16.msra.mxu0 %v1947
        %2916 = vmatprep.subr.bf16.mxu0 %v1932
        %2917 = vmatpush1.bf16.msra.mxu0 %v1931
        %2918 = vmatprep.subr.bf16.mxu0 %v1916
        %2919 = vmatpush1.bf16.msra.mxu0 %v1915
        %2920 = vmatprep.subr.bf16.mxu0 %v1900
        %2921 = vmatpush1.bf16.msra.mxu0 %v1899
        %2922 = vmatprep.subr.bf16.mxu0 %v1884
        %2923 = vmatpush1.bf16.msra.mxu0 %v1883
        %2924 = vmatprep.subr.bf16.mxu0 %v2124
        %2925 = vmatpush2.bf16.msra.mxu0 %v2123
        %2926 = vmatprep.subr.bf16.mxu0 %v2108
        %2927 = vmatpush2.bf16.msra.mxu0 %v2107
        %2928 = vmatprep.subr.bf16.mxu0 %v2092
        %2929 = vmatpush2.bf16.msra.mxu0 %v2091
        %2930 = vmatprep.subr.bf16.mxu0 %v2076
        %2931 = vmatpush2.bf16.msra.mxu0 %v2075
        %2932 = vmatprep.subr.bf16.mxu0 %v2060
        %2933 = vmatpush2.bf16.msra.mxu0 %v2059
        %2934 = vmatprep.subr.bf16.mxu0 %v2044
        %2935 = vmatpush2.bf16.msra.mxu0 %v2043
        %2936 = vmatprep.subr.bf16.mxu0 %v2028
        %2937 = vmatpush2.bf16.msra.mxu0 %v2027
        %2938 = vmatprep.subr.bf16.mxu0 %v2012
        %2939 = vmatpush2.bf16.msra.mxu0 %v2011
        %2940 = vmatprep.mubr.bf16.mxu0 %v2409
        %2941 = vmatmul.mubr.bf16.gmra.mxu0 %v2402
        %v2942 = vpop.f32.mrf.mxu0
        %v2943 = vadd.f32 0.0, %v2942
        %v2944 = vpop.f32.mrf.mxu0
        %v2945 = vadd.f32 0.0, %v2944
        %v2946 = vpop.f32.mrf.mxu0
        %v2947 = vpop.f32.mrf.mxu0
        %2948 = vdwg.mxu0
        %2949 = vmatprep.subr.bf16.mxu0 %v2252
        %2950 = vmatpush1.bf16.msra.mxu0 %v2251
        %2951 = vmatprep.subr.bf16.mxu0 %v2236
        %2952 = vmatpush1.bf16.msra.mxu0 %v2235
        %2953 = vmatprep.subr.bf16.mxu0 %v2220
        %2954 = vmatpush1.bf16.msra.mxu0 %v2219
        %2955 = vmatprep.subr.bf16.mxu0 %v2204
        %2956 = vmatpush1.bf16.msra.mxu0 %v2203
        %2957 = vmatprep.subr.bf16.mxu0 %v2188
        %2958 = vmatpush1.bf16.msra.mxu0 %v2187
        %2959 = vmatprep.subr.bf16.mxu0 %v2172
        %2960 = vmatpush1.bf16.msra.mxu0 %v2171
        %2961 = vmatprep.subr.bf16.mxu0 %v2156
        %2962 = vmatpush1.bf16.msra.mxu0 %v2155
        %2963 = vmatprep.subr.bf16.mxu0 %v2140
        %2964 = vmatpush1.bf16.msra.mxu0 %v2139
        %2965 = vmatprep.subr.bf16.mxu0 %v2380
        %2966 = vmatpush2.bf16.msra.mxu0 %v2379
        %2967 = vmatprep.subr.bf16.mxu0 %v2364
        %2968 = vmatpush2.bf16.msra.mxu0 %v2363
        %2969 = vmatprep.subr.bf16.mxu0 %v2348
        %2970 = vmatpush2.bf16.msra.mxu0 %v2347
        %2971 = vmatprep.subr.bf16.mxu0 %v2332
        %2972 = vmatpush2.bf16.msra.mxu0 %v2331
        %2973 = vmatprep.subr.bf16.mxu0 %v2316
        %2974 = vmatpush2.bf16.msra.mxu0 %v2315
        %2975 = vmatprep.subr.bf16.mxu0 %v2300
        %2976 = vmatpush2.bf16.msra.mxu0 %v2299
        %2977 = vmatprep.subr.bf16.mxu0 %v2284
        %2978 = vmatpush2.bf16.msra.mxu0 %v2283
        %2979 = vmatprep.subr.bf16.mxu0 %v2268
        %2980 = vmatpush2.bf16.msra.mxu0 %v2267
        %2981 = vmatprep.mubr.bf16.mxu0 %v2411
        %2982 = vmatmul.mubr.bf16.gmra.mxu0 %v2410
        %v2983 = vpop.f32.mrf.mxu0
        %v2984 = vadd.f32 %v2943, %v2983
        %v2985 = vpop.f32.mrf.mxu0
        %v2986 = vadd.f32 %v2945, %v2985
        %v2987 = vpop.f32.mrf.mxu0
        %v2988 = vpop.f32.mrf.mxu0
        %2989 = vdwg.mxu0
        %2990 = vmatprep.subr.bf16.mxu0 %v1998
        %2991 = vmatpush1.bf16.msra.mxu0 %v1997
        %2992 = vmatprep.subr.bf16.mxu0 %v1982
        %2993 = vmatpush1.bf16.msra.mxu0 %v1981
        %2994 = vmatprep.subr.bf16.mxu0 %v1966
        %2995 = vmatpush1.bf16.msra.mxu0 %v1965
        %2996 = vmatprep.subr.bf16.mxu0 %v1950
        %2997 = vmatpush1.bf16.msra.mxu0 %v1949
        %2998 = vmatprep.subr.bf16.mxu0 %v1934
        %2999 = vmatpush1.bf16.msra.mxu0 %v1933
        %3000 = vmatprep.subr.bf16.mxu0 %v1918
        %3001 = vmatpush1.bf16.msra.mxu0 %v1917
        %3002 = vmatprep.subr.bf16.mxu0 %v1902
        %3003 = vmatpush1.bf16.msra.mxu0 %v1901
        %3004 = vmatprep.subr.bf16.mxu0 %v1886
        %3005 = vmatpush1.bf16.msra.mxu0 %v1885
        %3006 = vmatprep.subr.bf16.mxu0 %v2126
        %3007 = vmatpush2.bf16.msra.mxu0 %v2125
        %3008 = vmatprep.subr.bf16.mxu0 %v2110
        %3009 = vmatpush2.bf16.msra.mxu0 %v2109
        %3010 = vmatprep.subr.bf16.mxu0 %v2094
        %3011 = vmatpush2.bf16.msra.mxu0 %v2093
        %3012 = vmatprep.subr.bf16.mxu0 %v2078
        %3013 = vmatpush2.bf16.msra.mxu0 %v2077
        %3014 = vmatprep.subr.bf16.mxu0 %v2062
        %3015 = vmatpush2.bf16.msra.mxu0 %v2061
        %3016 = vmatprep.subr.bf16.mxu0 %v2046
        %3017 = vmatpush2.bf16.msra.mxu0 %v2045
        %3018 = vmatprep.subr.bf16.mxu0 %v2030
        %3019 = vmatpush2.bf16.msra.mxu0 %v2029
        %3020 = vmatprep.subr.bf16.mxu0 %v2014
        %3021 = vmatpush2.bf16.msra.mxu0 %v2013
        %3022 = vmatprep.mubr.bf16.mxu0 %v2409
        %3023 = vmatmul.mubr.bf16.gmra.mxu0 %v2402
        %v3024 = vpop.f32.mrf.mxu0
        %v3025 = vadd.f32 0.0, %v3024
        %v3026 = vpop.f32.mrf.mxu0
        %v3027 = vadd.f32 0.0, %v3026
        %v3028 = vpop.f32.mrf.mxu0
        %v3029 = vpop.f32.mrf.mxu0
        %3030 = vdwg.mxu0
        %3031 = vmatprep.subr.bf16.mxu0 %v2254
        %3032 = vmatpush1.bf16.msra.mxu0 %v2253
        %3033 = vmatprep.subr.bf16.mxu0 %v2238
        %3034 = vmatpush1.bf16.msra.mxu0 %v2237
        %3035 = vmatprep.subr.bf16.mxu0 %v2222
        %3036 = vmatpush1.bf16.msra.mxu0 %v2221
        %3037 = vmatprep.subr.bf16.mxu0 %v2206
        %3038 = vmatpush1.bf16.msra.mxu0 %v2205
        %3039 = vmatprep.subr.bf16.mxu0 %v2190
        %3040 = vmatpush1.bf16.msra.mxu0 %v2189
        %3041 = vmatprep.subr.bf16.mxu0 %v2174
        %3042 = vmatpush1.bf16.msra.mxu0 %v2173
        %3043 = vmatprep.subr.bf16.mxu0 %v2158
        %3044 = vmatpush1.bf16.msra.mxu0 %v2157
        %3045 = vmatprep.subr.bf16.mxu0 %v2142
        %3046 = vmatpush1.bf16.msra.mxu0 %v2141
        %3047 = vmatprep.subr.bf16.mxu0 %v2382
        %3048 = vmatpush2.bf16.msra.mxu0 %v2381
        %3049 = vmatprep.subr.bf16.mxu0 %v2366
        %3050 = vmatpush2.bf16.msra.mxu0 %v2365
        %3051 = vmatprep.subr.bf16.mxu0 %v2350
        %3052 = vmatpush2.bf16.msra.mxu0 %v2349
        %3053 = vmatprep.subr.bf16.mxu0 %v2334
        %3054 = vmatpush2.bf16.msra.mxu0 %v2333
        %3055 = vmatprep.subr.bf16.mxu0 %v2318
        %3056 = vmatpush2.bf16.msra.mxu0 %v2317
        %3057 = vmatprep.subr.bf16.mxu0 %v2302
        %3058 = vmatpush2.bf16.msra.mxu0 %v2301
        %3059 = vmatprep.subr.bf16.mxu0 %v2286
        %3060 = vmatpush2.bf16.msra.mxu0 %v2285
        %3061 = vmatprep.subr.bf16.mxu0 %v2270
        %3062 = vmatpush2.bf16.msra.mxu0 %v2269
        %3063 = vmatprep.mubr.bf16.mxu0 %v2411
        %3064 = vmatmul.mubr.bf16.gmra.mxu0 %v2410
        %v3065 = vpop.f32.mrf.mxu0
        %v3066 = vadd.f32 %v3025, %v3065
        %v3067 = vpop.f32.mrf.mxu0
        %v3068 = vadd.f32 %v3027, %v3067
        %v3069 = vpop.f32.mrf.mxu0
        %v3070 = vpop.f32.mrf.mxu0
        %3071 = vdwg.mxu0
        %v3088 = vcombine.low %v2492, %v2494
        %v3089 = vcombine.low %v2574, %v2576
        %v3091 = vunpack.c.l.s4 1983009808
        %v3092 = vunpack.c.0.s8 %v3091
        %v3093 = vlaneseq
        %v3094 = vshrl.u32 %v3093, 7
        %v3095 = vsub.s32 %v3092, %v3094
        %v3096 = vrot.slane %v3088, %v3095
        %v3098 = vunpack.c.l.s4 1983009808
        %v3099 = vunpack.c.0.s8 %v3098
        %v3100 = vlaneseq
        %v3101 = vshrl.u32 %v3100, 7
        %v3102 = vsub.s32 %v3099, %v3101
        %v3103 = vrot.slane %v3089, %v3102
        %v3104 = vcombine.low %v3096, %v3103
        %v3105 = vcombine.low %v2656, %v2658
        %v3106 = vcombine.low %v2738, %v2740
        %v3108 = vunpack.c.l.s4 1983009808
        %v3109 = vunpack.c.0.s8 %v3108
        %v3110 = vlaneseq
        %v3111 = vshrl.u32 %v3110, 7
        %v3112 = vsub.s32 %v3109, %v3111
        %v3113 = vrot.slane %v3105, %v3112
        %v3115 = vunpack.c.l.s4 1983009808
        %v3116 = vunpack.c.0.s8 %v3115
        %v3117 = vlaneseq
        %v3118 = vshrl.u32 %v3117, 7
        %v3119 = vsub.s32 %v3116, %v3118
        %v3120 = vrot.slane %v3106, %v3119
        %v3121 = vcombine.low %v3113, %v3120
        %v3122 = vcombine.low %v2820, %v2822
        %v3123 = vcombine.low %v2902, %v2904
        %v3125 = vunpack.c.l.s4 1983009808
        %v3126 = vunpack.c.0.s8 %v3125
        %v3127 = vlaneseq
        %v3128 = vshrl.u32 %v3127, 7
        %v3129 = vsub.s32 %v3126, %v3128
        %v3130 = vrot.slane %v3122, %v3129
        %v3132 = vunpack.c.l.s4 1983009808
        %v3133 = vunpack.c.0.s8 %v3132
        %v3134 = vlaneseq
        %v3135 = vshrl.u32 %v3134, 7
        %v3136 = vsub.s32 %v3133, %v3135
        %v3137 = vrot.slane %v3123, %v3136
        %v3138 = vcombine.low %v3130, %v3137
        %v3139 = vcombine.low %v2984, %v2986
        %v3140 = vcombine.low %v3066, %v3068
        %v3142 = vunpack.c.l.s4 1983009808
        %v3143 = vunpack.c.0.s8 %v3142
        %v3144 = vlaneseq
        %v3145 = vshrl.u32 %v3144, 7
        %v3146 = vsub.s32 %v3143, %v3145
        %v3147 = vrot.slane %v3139, %v3146
        %v3149 = vunpack.c.l.s4 1983009808
        %v3150 = vunpack.c.0.s8 %v3149
        %v3151 = vlaneseq
        %v3152 = vshrl.u32 %v3151, 7
        %v3153 = vsub.s32 %v3150, %v3152
        %v3154 = vrot.slane %v3140, %v3153
        %v3155 = vcombine.low %v3147, %v3154
        %v3160 = vadd.f32 %v2383, %v3104
        %v3161 = vadd.f32 %v2384, %v3121
        %v3162 = vadd.f32 %v2385, %v3138
        %v3163 = vadd.f32 %v2386, %v3155
        %3164 = vst [vmem:[#allocation3] sm:$0xff] %v3160
        %3165 = vst [vmem:[#allocation3 + $0x8] sm:$0xff] %v3161
        %3166 = vst [vmem:[#allocation3 + $0x10] sm:$0xff] %v3162
        %3167 = vst [vmem:[#allocation3 + $0x18] sm:$0xff] %v3163
        %p3168 = scmp.eq.s32.totalorder %s44, 3
        // Predicated region
        $region113: #{tpu_custom_call.1} parent=63 // pred_check
          %p3169 = pneg %p3168
        $region114: #{tpu_custom_call.1} parent=63 // pred_check_branch
          %3171 = sbr.rel (%p3169) target = $region116
        $region115: #{tpu_custom_call.1} parent=63 // pred_region
          %v3172 = vld [vmem:[#allocation3] sm:$0xff]
          %v3173 = vld [vmem:[#allocation3 + $0x8] sm:$0xff]
          %v3174 = vld [vmem:[#allocation3 + $0x10] sm:$0xff]
          %v3175 = vld [vmem:[#allocation3 + $0x18] sm:$0xff]
          %v3176 = vld [vmem:[%s590] sm:$0xff]
          %v3177 = vld [vmem:[%s590 + $0x8] sm:$0xff]
          %v3180 = vlaneseq
          %v3181 = vshrl.u32 %v3180, 7
          %v3182 = vsub.s32 0, %v3181
          %v3183 = vrot.slane %v3176, %v3182
          %v3184 = vlaneseq
          %v3185 = vshrl.u32 %v3184, 7
          %v3186 = vsub.s32 1, %v3185
          %v3187 = vrot.slane %v3176, %v3186
          %v3188 = vlaneseq
          %v3189 = vshrl.u32 %v3188, 7
          %v3190 = vsub.s32 2, %v3189
          %v3191 = vrot.slane %v3176, %v3190
          %v3192 = vlaneseq
          %v3193 = vshrl.u32 %v3192, 7
          %v3194 = vsub.s32 3, %v3193
          %v3195 = vrot.slane %v3176, %v3194
          %v3196 = vlaneseq
          %v3197 = vshrl.u32 %v3196, 7
          %v3198 = vsub.s32 4, %v3197
          %v3199 = vrot.slane %v3176, %v3198
          %v3200 = vlaneseq
          %v3201 = vshrl.u32 %v3200, 7
          %v3202 = vsub.s32 5, %v3201
          %v3203 = vrot.slane %v3176, %v3202
          %v3204 = vlaneseq
          %v3205 = vshrl.u32 %v3204, 7
          %v3206 = vsub.s32 6, %v3205
          %v3207 = vrot.slane %v3176, %v3206
          %v3208 = vlaneseq
          %v3209 = vshrl.u32 %v3208, 7
          %v3210 = vsub.s32 7, %v3209
          %v3211 = vrot.slane %v3176, %v3210
          %v3212 = vlaneseq
          %v3213 = vshrl.u32 %v3212, 7
          %v3214 = vsub.s32 0, %v3213
          %v3215 = vrot.slane %v3177, %v3214
          %v3216 = vlaneseq
          %v3217 = vshrl.u32 %v3216, 7
          %v3218 = vsub.s32 1, %v3217
          %v3219 = vrot.slane %v3177, %v3218
          %v3220 = vlaneseq
          %v3221 = vshrl.u32 %v3220, 7
          %v3222 = vsub.s32 2, %v3221
          %v3223 = vrot.slane %v3177, %v3222
          %v3224 = vlaneseq
          %v3225 = vshrl.u32 %v3224, 7
          %v3226 = vsub.s32 3, %v3225
          %v3227 = vrot.slane %v3177, %v3226
          %v3228 = vlaneseq
          %v3229 = vshrl.u32 %v3228, 7
          %v3230 = vsub.s32 4, %v3229
          %v3231 = vrot.slane %v3177, %v3230
          %v3232 = vlaneseq
          %v3233 = vshrl.u32 %v3232, 7
          %v3234 = vsub.s32 5, %v3233
          %v3235 = vrot.slane %v3177, %v3234
          %v3236 = vlaneseq
          %v3237 = vshrl.u32 %v3236, 7
          %v3238 = vsub.s32 6, %v3237
          %v3239 = vrot.slane %v3177, %v3238
          %v3240 = vlaneseq
          %v3241 = vshrl.u32 %v3240, 7
          %v3242 = vsub.s32 7, %v3241
          %v3243 = vrot.slane %v3177, %v3242
          %v3244 = vcombine.low %v3183, %v3187
          %v3245 = vcombine.low %v3191, %v3195
          %v3247 = vunpack.c.l.s4 1983009808
          %v3248 = vunpack.c.0.s8 %v3247
          %v3249 = vlaneseq
          %v3250 = vshrl.u32 %v3249, 7
          %v3251 = vsub.s32 %v3248, %v3250
          %v3252 = vrot.slane %v3244, %v3251
          %v3254 = vunpack.c.l.s4 1983009808
          %v3255 = vunpack.c.0.s8 %v3254
          %v3256 = vlaneseq
          %v3257 = vshrl.u32 %v3256, 7
          %v3258 = vsub.s32 %v3255, %v3257
          %v3259 = vrot.slane %v3245, %v3258
          %v3260 = vcombine.low %v3252, %v3259
          %v3261 = vcombine.low %v3199, %v3203
          %v3262 = vcombine.low %v3207, %v3211
          %v3264 = vunpack.c.l.s4 1983009808
          %v3265 = vunpack.c.0.s8 %v3264
          %v3266 = vlaneseq
          %v3267 = vshrl.u32 %v3266, 7
          %v3268 = vsub.s32 %v3265, %v3267
          %v3269 = vrot.slane %v3261, %v3268
          %v3271 = vunpack.c.l.s4 1983009808
          %v3272 = vunpack.c.0.s8 %v3271
          %v3273 = vlaneseq
          %v3274 = vshrl.u32 %v3273, 7
          %v3275 = vsub.s32 %v3272, %v3274
          %v3276 = vrot.slane %v3262, %v3275
          %v3277 = vcombine.low %v3269, %v3276
          %v3278 = vcombine.low %v3215, %v3219
          %v3279 = vcombine.low %v3223, %v3227
          %v3281 = vunpack.c.l.s4 1983009808
          %v3282 = vunpack.c.0.s8 %v3281
          %v3283 = vlaneseq
          %v3284 = vshrl.u32 %v3283, 7
          %v3285 = vsub.s32 %v3282, %v3284
          %v3286 = vrot.slane %v3278, %v3285
          %v3288 = vunpack.c.l.s4 1983009808
          %v3289 = vunpack.c.0.s8 %v3288
          %v3290 = vlaneseq
          %v3291 = vshrl.u32 %v3290, 7
          %v3292 = vsub.s32 %v3289, %v3291
          %v3293 = vrot.slane %v3279, %v3292
          %v3294 = vcombine.low %v3286, %v3293
          %v3295 = vcombine.low %v3231, %v3235
          %v3296 = vcombine.low %v3239, %v3243
          %v3298 = vunpack.c.l.s4 1983009808
          %v3299 = vunpack.c.0.s8 %v3298
          %v3300 = vlaneseq
          %v3301 = vshrl.u32 %v3300, 7
          %v3302 = vsub.s32 %v3299, %v3301
          %v3303 = vrot.slane %v3295, %v3302
          %v3305 = vunpack.c.l.s4 1983009808
          %v3306 = vunpack.c.0.s8 %v3305
          %v3307 = vlaneseq
          %v3308 = vshrl.u32 %v3307, 7
          %v3309 = vsub.s32 %v3306, %v3308
          %v3310 = vrot.slane %v3296, %v3309
          %v3311 = vcombine.low %v3303, %v3310
          %v3316 = vmul.f32 %v3172, %v3260
          %v3317 = vmul.f32 %v3173, %v3277
          %v3318 = vmul.f32 %v3174, %v3294
          %v3319 = vmul.f32 %v3175, %v3311
          %v3320 = vld [vmem:[%s599] sm:$0xff]
          %v3321 = vld [vmem:[%s599 + $0x8] sm:$0xff]
          %v3324 = vlaneseq
          %v3325 = vshrl.u32 %v3324, 7
          %v3326 = vsub.s32 0, %v3325
          %v3327 = vrot.slane %v3320, %v3326
          %v3328 = vlaneseq
          %v3329 = vshrl.u32 %v3328, 7
          %v3330 = vsub.s32 1, %v3329
          %v3331 = vrot.slane %v3320, %v3330
          %v3332 = vlaneseq
          %v3333 = vshrl.u32 %v3332, 7
          %v3334 = vsub.s32 2, %v3333
          %v3335 = vrot.slane %v3320, %v3334
          %v3336 = vlaneseq
          %v3337 = vshrl.u32 %v3336, 7
          %v3338 = vsub.s32 3, %v3337
          %v3339 = vrot.slane %v3320, %v3338
          %v3340 = vlaneseq
          %v3341 = vshrl.u32 %v3340, 7
          %v3342 = vsub.s32 4, %v3341
          %v3343 = vrot.slane %v3320, %v3342
          %v3344 = vlaneseq
          %v3345 = vshrl.u32 %v3344, 7
          %v3346 = vsub.s32 5, %v3345
          %v3347 = vrot.slane %v3320, %v3346
          %v3348 = vlaneseq
          %v3349 = vshrl.u32 %v3348, 7
          %v3350 = vsub.s32 6, %v3349
          %v3351 = vrot.slane %v3320, %v3350
          %v3352 = vlaneseq
          %v3353 = vshrl.u32 %v3352, 7
          %v3354 = vsub.s32 7, %v3353
          %v3355 = vrot.slane %v3320, %v3354
          %v3356 = vlaneseq
          %v3357 = vshrl.u32 %v3356, 7
          %v3358 = vsub.s32 0, %v3357
          %v3359 = vrot.slane %v3321, %v3358
          %v3360 = vlaneseq
          %v3361 = vshrl.u32 %v3360, 7
          %v3362 = vsub.s32 1, %v3361
          %v3363 = vrot.slane %v3321, %v3362
          %v3364 = vlaneseq
          %v3365 = vshrl.u32 %v3364, 7
          %v3366 = vsub.s32 2, %v3365
          %v3367 = vrot.slane %v3321, %v3366
          %v3368 = vlaneseq
          %v3369 = vshrl.u32 %v3368, 7
          %v3370 = vsub.s32 3, %v3369
          %v3371 = vrot.slane %v3321, %v3370
          %v3372 = vlaneseq
          %v3373 = vshrl.u32 %v3372, 7
          %v3374 = vsub.s32 4, %v3373
          %v3375 = vrot.slane %v3321, %v3374
          %v3376 = vlaneseq
          %v3377 = vshrl.u32 %v3376, 7
          %v3378 = vsub.s32 5, %v3377
          %v3379 = vrot.slane %v3321, %v3378
          %v3380 = vlaneseq
          %v3381 = vshrl.u32 %v3380, 7
          %v3382 = vsub.s32 6, %v3381
          %v3383 = vrot.slane %v3321, %v3382
          %v3384 = vlaneseq
          %v3385 = vshrl.u32 %v3384, 7
          %v3386 = vsub.s32 7, %v3385
          %v3387 = vrot.slane %v3321, %v3386
          %v3388 = vcombine.low %v3327, %v3331
          %v3389 = vcombine.low %v3335, %v3339
          %v3391 = vunpack.c.l.s4 1983009808
          %v3392 = vunpack.c.0.s8 %v3391
          %v3393 = vlaneseq
          %v3394 = vshrl.u32 %v3393, 7
          %v3395 = vsub.s32 %v3392, %v3394
          %v3396 = vrot.slane %v3388, %v3395
          %v3398 = vunpack.c.l.s4 1983009808
          %v3399 = vunpack.c.0.s8 %v3398
          %v3400 = vlaneseq
          %v3401 = vshrl.u32 %v3400, 7
          %v3402 = vsub.s32 %v3399, %v3401
          %v3403 = vrot.slane %v3389, %v3402
          %v3404 = vcombine.low %v3396, %v3403
          %v3405 = vcombine.low %v3343, %v3347
          %v3406 = vcombine.low %v3351, %v3355
          %v3408 = vunpack.c.l.s4 1983009808
          %v3409 = vunpack.c.0.s8 %v3408
          %v3410 = vlaneseq
          %v3411 = vshrl.u32 %v3410, 7
          %v3412 = vsub.s32 %v3409, %v3411
          %v3413 = vrot.slane %v3405, %v3412
          %v3415 = vunpack.c.l.s4 1983009808
          %v3416 = vunpack.c.0.s8 %v3415
          %v3417 = vlaneseq
          %v3418 = vshrl.u32 %v3417, 7
          %v3419 = vsub.s32 %v3416, %v3418
          %v3420 = vrot.slane %v3406, %v3419
          %v3421 = vcombine.low %v3413, %v3420
          %v3422 = vcombine.low %v3359, %v3363
          %v3423 = vcombine.low %v3367, %v3371
          %v3425 = vunpack.c.l.s4 1983009808
          %v3426 = vunpack.c.0.s8 %v3425
          %v3427 = vlaneseq
          %v3428 = vshrl.u32 %v3427, 7
          %v3429 = vsub.s32 %v3426, %v3428
          %v3430 = vrot.slane %v3422, %v3429
          %v3432 = vunpack.c.l.s4 1983009808
          %v3433 = vunpack.c.0.s8 %v3432
          %v3434 = vlaneseq
          %v3435 = vshrl.u32 %v3434, 7
          %v3436 = vsub.s32 %v3433, %v3435
          %v3437 = vrot.slane %v3423, %v3436
          %v3438 = vcombine.low %v3430, %v3437
          %v3439 = vcombine.low %v3375, %v3379
          %v3440 = vcombine.low %v3383, %v3387
          %v3442 = vunpack.c.l.s4 1983009808
          %v3443 = vunpack.c.0.s8 %v3442
          %v3444 = vlaneseq
          %v3445 = vshrl.u32 %v3444, 7
          %v3446 = vsub.s32 %v3443, %v3445
          %v3447 = vrot.slane %v3439, %v3446
          %v3449 = vunpack.c.l.s4 1983009808
          %v3450 = vunpack.c.0.s8 %v3449
          %v3451 = vlaneseq
          %v3452 = vshrl.u32 %v3451, 7
          %v3453 = vsub.s32 %v3450, %v3452
          %v3454 = vrot.slane %v3440, %v3453
          %v3455 = vcombine.low %v3447, %v3454
          %v3460 = vadd.f32 %v3316, %v3404
          %v3461 = vadd.f32 %v3317, %v3421
          %v3462 = vadd.f32 %v3318, %v3438
          %v3463 = vadd.f32 %v3319, %v3455
          %v3464 = vmax.f32 %v3460, 0.0
          %v3465 = vmax.f32 %v3461, 0.0
          %v3466 = vmax.f32 %v3462, 0.0
          %v3467 = vmax.f32 %v3463, 0.0
          %v3472 = vcombine.high %v3464, %v3464
          %v3474 = vunpack.c.l.s4 1983009808
          %v3475 = vunpack.c.0.s8 %v3474
          %v3476 = vlaneseq
          %v3477 = vshrl.u32 %v3476, 7
          %v3478 = vsub.s32 %v3475, %v3477
          %v3479 = vrot.slane %v3464, %v3478
          %v3481 = vunpack.c.l.s4 1983009808
          %v3482 = vunpack.c.0.s8 %v3481
          %v3483 = vlaneseq
          %v3484 = vshrl.u32 %v3483, 7
          %v3485 = vsub.s32 %v3482, %v3484
          %v3486 = vrot.slane %v3472, %v3485
          %v3487 = vcombine.high %v3479, %v3479
          %v3488 = vcombine.high %v3486, %v3486
          %v3489 = vcombine.high %v3465, %v3465
          %v3491 = vunpack.c.l.s4 1983009808
          %v3492 = vunpack.c.0.s8 %v3491
          %v3493 = vlaneseq
          %v3494 = vshrl.u32 %v3493, 7
          %v3495 = vsub.s32 %v3492, %v3494
          %v3496 = vrot.slane %v3465, %v3495
          %v3498 = vunpack.c.l.s4 1983009808
          %v3499 = vunpack.c.0.s8 %v3498
          %v3500 = vlaneseq
          %v3501 = vshrl.u32 %v3500, 7
          %v3502 = vsub.s32 %v3499, %v3501
          %v3503 = vrot.slane %v3489, %v3502
          %v3504 = vcombine.high %v3496, %v3496
          %v3505 = vcombine.high %v3503, %v3503
          %v3506 = vcombine.high %v3466, %v3466
          %v3508 = vunpack.c.l.s4 1983009808
          %v3509 = vunpack.c.0.s8 %v3508
          %v3510 = vlaneseq
          %v3511 = vshrl.u32 %v3510, 7
          %v3512 = vsub.s32 %v3509, %v3511
          %v3513 = vrot.slane %v3466, %v3512
          %v3515 = vunpack.c.l.s4 1983009808
          %v3516 = vunpack.c.0.s8 %v3515
          %v3517 = vlaneseq
          %v3518 = vshrl.u32 %v3517, 7
          %v3519 = vsub.s32 %v3516, %v3518
          %v3520 = vrot.slane %v3506, %v3519
          %v3521 = vcombine.high %v3513, %v3513
          %v3522 = vcombine.high %v3520, %v3520
          %v3523 = vcombine.high %v3467, %v3467
          %v3525 = vunpack.c.l.s4 1983009808
          %v3526 = vunpack.c.0.s8 %v3525
          %v3527 = vlaneseq
          %v3528 = vshrl.u32 %v3527, 7
          %v3529 = vsub.s32 %v3526, %v3528
          %v3530 = vrot.slane %v3467, %v3529
          %v3532 = vunpack.c.l.s4 1983009808
          %v3533 = vunpack.c.0.s8 %v3532
          %v3534 = vlaneseq
          %v3535 = vshrl.u32 %v3534, 7
          %v3536 = vsub.s32 %v3533, %v3535
          %v3537 = vrot.slane %v3523, %v3536
          %v3538 = vcombine.high %v3530, %v3530
          %v3539 = vcombine.high %v3537, %v3537
          %v3556 = vpack.c.bf16 %v3479, %v3479
          %v3557 = vpack.c.bf16 %v3487, %v3487
          %v3558 = vpack.c.bf16 %v3486, %v3486
          %v3559 = vpack.c.bf16 %v3488, %v3488
          %v3560 = vpack.c.bf16 %v3496, %v3496
          %v3561 = vpack.c.bf16 %v3504, %v3504
          %v3562 = vpack.c.bf16 %v3503, %v3503
          %v3563 = vpack.c.bf16 %v3505, %v3505
          %v3564 = vpack.c.bf16 %v3513, %v3513
          %v3565 = vpack.c.bf16 %v3521, %v3521
          %v3566 = vpack.c.bf16 %v3520, %v3520
          %v3567 = vpack.c.bf16 %v3522, %v3522
          %v3568 = vpack.c.bf16 %v3530, %v3530
          %v3569 = vpack.c.bf16 %v3538, %v3538
          %v3570 = vpack.c.bf16 %v3537, %v3537
          %v3571 = vpack.c.bf16 %v3539, %v3539
          %v3572 = vld [vmem:[%s608] sm:$0xff]
          %v3573 = vld [vmem:[%s608 + $0x8] sm:$0xff]
          %v3574 = vld [vmem:[%s608 + $0x10] sm:$0xff]
          %v3575 = vld [vmem:[%s608 + $0x18] sm:$0xff]
          %v3576 = vld [vmem:[%s608 + $0x20] sm:$0xff]
          %v3577 = vld [vmem:[%s608 + $0x28] sm:$0xff]
          %v3578 = vld [vmem:[%s608 + $0x30] sm:$0xff]
          %v3579 = vld [vmem:[%s608 + $0x38] sm:$0xff]
          %v3580 = vld [vmem:[%s608 + $0x40] sm:$0xff]
          %v3581 = vld [vmem:[%s608 + $0x48] sm:$0xff]
          %v3582 = vld [vmem:[%s608 + $0x50] sm:$0xff]
          %v3583 = vld [vmem:[%s608 + $0x58] sm:$0xff]
          %v3584 = vld [vmem:[%s608 + $0x60] sm:$0xff]
          %v3585 = vld [vmem:[%s608 + $0x68] sm:$0xff]
          %v3586 = vld [vmem:[%s608 + $0x70] sm:$0xff]
          %v3587 = vld [vmem:[%s608 + $0x78] sm:$0xff]
          %v3588 = vld [vmem:[%s608 + $0x80] sm:$0xff]
          %v3589 = vld [vmem:[%s608 + $0x88] sm:$0xff]
          %v3590 = vld [vmem:[%s608 + $0x90] sm:$0xff]
          %v3591 = vld [vmem:[%s608 + $0x98] sm:$0xff]
          %v3592 = vld [vmem:[%s608 + $0xa0] sm:$0xff]
          %v3593 = vld [vmem:[%s608 + $0xa8] sm:$0xff]
          %v3594 = vld [vmem:[%s608 + $0xb0] sm:$0xff]
          %v3595 = vld [vmem:[%s608 + $0xb8] sm:$0xff]
          %v3596 = vld [vmem:[%s608 + $0xc0] sm:$0xff]
          %v3597 = vld [vmem:[%s608 + $0xc8] sm:$0xff]
          %v3598 = vld [vmem:[%s608 + $0xd0] sm:$0xff]
          %v3599 = vld [vmem:[%s608 + $0xd8] sm:$0xff]
          %v3600 = vld [vmem:[%s608 + $0xe0] sm:$0xff]
          %v3601 = vld [vmem:[%s608 + $0xe8] sm:$0xff]
          %v3602 = vld [vmem:[%s608 + $0xf0] sm:$0xff]
          %v3603 = vld [vmem:[%s608 + $0xf8] sm:$0xff]
          %v3604 = vld [vmem:[%s608 + $0x100] sm:$0xff]
          %v3605 = vld [vmem:[%s608 + $0x108] sm:$0xff]
          %v3606 = vld [vmem:[%s608 + $0x110] sm:$0xff]
          %v3607 = vld [vmem:[%s608 + $0x118] sm:$0xff]
          %v3608 = vld [vmem:[%s608 + $0x120] sm:$0xff]
          %v3609 = vld [vmem:[%s608 + $0x128] sm:$0xff]
          %v3610 = vld [vmem:[%s608 + $0x130] sm:$0xff]
          %v3611 = vld [vmem:[%s608 + $0x138] sm:$0xff]
          %v3612 = vld [vmem:[%s608 + $0x140] sm:$0xff]
          %v3613 = vld [vmem:[%s608 + $0x148] sm:$0xff]
          %v3614 = vld [vmem:[%s608 + $0x150] sm:$0xff]
          %v3615 = vld [vmem:[%s608 + $0x158] sm:$0xff]
          %v3616 = vld [vmem:[%s608 + $0x160] sm:$0xff]
          %v3617 = vld [vmem:[%s608 + $0x168] sm:$0xff]
          %v3618 = vld [vmem:[%s608 + $0x170] sm:$0xff]
          %v3619 = vld [vmem:[%s608 + $0x178] sm:$0xff]
          %v3620 = vld [vmem:[%s608 + $0x180] sm:$0xff]
          %v3621 = vld [vmem:[%s608 + $0x188] sm:$0xff]
          %v3622 = vld [vmem:[%s608 + $0x190] sm:$0xff]
          %v3623 = vld [vmem:[%s608 + $0x198] sm:$0xff]
          %v3624 = vld [vmem:[%s608 + $0x1a0] sm:$0xff]
          %v3625 = vld [vmem:[%s608 + $0x1a8] sm:$0xff]
          %v3626 = vld [vmem:[%s608 + $0x1b0] sm:$0xff]
          %v3627 = vld [vmem:[%s608 + $0x1b8] sm:$0xff]
          %v3628 = vld [vmem:[%s608 + $0x1c0] sm:$0xff]
          %v3629 = vld [vmem:[%s608 + $0x1c8] sm:$0xff]
          %v3630 = vld [vmem:[%s608 + $0x1d0] sm:$0xff]
          %v3631 = vld [vmem:[%s608 + $0x1d8] sm:$0xff]
          %v3632 = vld [vmem:[%s608 + $0x1e0] sm:$0xff]
          %v3633 = vld [vmem:[%s608 + $0x1e8] sm:$0xff]
          %v3634 = vld [vmem:[%s608 + $0x1f0] sm:$0xff]
          %v3635 = vld [vmem:[%s608 + $0x1f8] sm:$0xff]
          %v3636 = vld [vmem:[%s608 + $0x200] sm:$0xff]
          %v3637 = vld [vmem:[%s608 + $0x208] sm:$0xff]
          %v3638 = vld [vmem:[%s608 + $0x210] sm:$0xff]
          %v3639 = vld [vmem:[%s608 + $0x218] sm:$0xff]
          %v3640 = vld [vmem:[%s608 + $0x220] sm:$0xff]
          %v3641 = vld [vmem:[%s608 + $0x228] sm:$0xff]
          %v3642 = vld [vmem:[%s608 + $0x230] sm:$0xff]
          %v3643 = vld [vmem:[%s608 + $0x238] sm:$0xff]
          %v3644 = vld [vmem:[%s608 + $0x240] sm:$0xff]
          %v3645 = vld [vmem:[%s608 + $0x248] sm:$0xff]
          %v3646 = vld [vmem:[%s608 + $0x250] sm:$0xff]
          %v3647 = vld [vmem:[%s608 + $0x258] sm:$0xff]
          %v3648 = vld [vmem:[%s608 + $0x260] sm:$0xff]
          %v3649 = vld [vmem:[%s608 + $0x268] sm:$0xff]
          %v3650 = vld [vmem:[%s608 + $0x270] sm:$0xff]
          %v3651 = vld [vmem:[%s608 + $0x278] sm:$0xff]
          %v3652 = vld [vmem:[%s608 + $0x280] sm:$0xff]
          %v3653 = vld [vmem:[%s608 + $0x288] sm:$0xff]
          %v3654 = vld [vmem:[%s608 + $0x290] sm:$0xff]
          %v3655 = vld [vmem:[%s608 + $0x298] sm:$0xff]
          %v3656 = vld [vmem:[%s608 + $0x2a0] sm:$0xff]
          %v3657 = vld [vmem:[%s608 + $0x2a8] sm:$0xff]
          %v3658 = vld [vmem:[%s608 + $0x2b0] sm:$0xff]
          %v3659 = vld [vmem:[%s608 + $0x2b8] sm:$0xff]
          %v3660 = vld [vmem:[%s608 + $0x2c0] sm:$0xff]
          %v3661 = vld [vmem:[%s608 + $0x2c8] sm:$0xff]
          %v3662 = vld [vmem:[%s608 + $0x2d0] sm:$0xff]
          %v3663 = vld [vmem:[%s608 + $0x2d8] sm:$0xff]
          %v3664 = vld [vmem:[%s608 + $0x2e0] sm:$0xff]
          %v3665 = vld [vmem:[%s608 + $0x2e8] sm:$0xff]
          %v3666 = vld [vmem:[%s608 + $0x2f0] sm:$0xff]
          %v3667 = vld [vmem:[%s608 + $0x2f8] sm:$0xff]
          %v3668 = vld [vmem:[%s608 + $0x300] sm:$0xff]
          %v3669 = vld [vmem:[%s608 + $0x308] sm:$0xff]
          %v3670 = vld [vmem:[%s608 + $0x310] sm:$0xff]
          %v3671 = vld [vmem:[%s608 + $0x318] sm:$0xff]
          %v3672 = vld [vmem:[%s608 + $0x320] sm:$0xff]
          %v3673 = vld [vmem:[%s608 + $0x328] sm:$0xff]
          %v3674 = vld [vmem:[%s608 + $0x330] sm:$0xff]
          %v3675 = vld [vmem:[%s608 + $0x338] sm:$0xff]
          %v3676 = vld [vmem:[%s608 + $0x340] sm:$0xff]
          %v3677 = vld [vmem:[%s608 + $0x348] sm:$0xff]
          %v3678 = vld [vmem:[%s608 + $0x350] sm:$0xff]
          %v3679 = vld [vmem:[%s608 + $0x358] sm:$0xff]
          %v3680 = vld [vmem:[%s608 + $0x360] sm:$0xff]
          %v3681 = vld [vmem:[%s608 + $0x368] sm:$0xff]
          %v3682 = vld [vmem:[%s608 + $0x370] sm:$0xff]
          %v3683 = vld [vmem:[%s608 + $0x378] sm:$0xff]
          %v3684 = vld [vmem:[%s608 + $0x380] sm:$0xff]
          %v3685 = vld [vmem:[%s608 + $0x388] sm:$0xff]
          %v3686 = vld [vmem:[%s608 + $0x390] sm:$0xff]
          %v3687 = vld [vmem:[%s608 + $0x398] sm:$0xff]
          %v3688 = vld [vmem:[%s608 + $0x3a0] sm:$0xff]
          %v3689 = vld [vmem:[%s608 + $0x3a8] sm:$0xff]
          %v3690 = vld [vmem:[%s608 + $0x3b0] sm:$0xff]
          %v3691 = vld [vmem:[%s608 + $0x3b8] sm:$0xff]
          %v3692 = vld [vmem:[%s608 + $0x3c0] sm:$0xff]
          %v3693 = vld [vmem:[%s608 + $0x3c8] sm:$0xff]
          %v3694 = vld [vmem:[%s608 + $0x3d0] sm:$0xff]
          %v3695 = vld [vmem:[%s608 + $0x3d8] sm:$0xff]
          %v3696 = vld [vmem:[%s608 + $0x3e0] sm:$0xff]
          %v3697 = vld [vmem:[%s608 + $0x3e8] sm:$0xff]
          %v3698 = vld [vmem:[%s608 + $0x3f0] sm:$0xff]
          %v3699 = vld [vmem:[%s608 + $0x3f8] sm:$0xff]
          %v3700 = vld [vmem:[%s608 + $0x400] sm:$0xff]
          %v3701 = vld [vmem:[%s608 + $0x408] sm:$0xff]
          %v3702 = vld [vmem:[%s608 + $0x410] sm:$0xff]
          %v3703 = vld [vmem:[%s608 + $0x418] sm:$0xff]
          %v3704 = vld [vmem:[%s608 + $0x420] sm:$0xff]
          %v3705 = vld [vmem:[%s608 + $0x428] sm:$0xff]
          %v3706 = vld [vmem:[%s608 + $0x430] sm:$0xff]
          %v3707 = vld [vmem:[%s608 + $0x438] sm:$0xff]
          %v3708 = vld [vmem:[%s608 + $0x440] sm:$0xff]
          %v3709 = vld [vmem:[%s608 + $0x448] sm:$0xff]
          %v3710 = vld [vmem:[%s608 + $0x450] sm:$0xff]
          %v3711 = vld [vmem:[%s608 + $0x458] sm:$0xff]
          %v3712 = vld [vmem:[%s608 + $0x460] sm:$0xff]
          %v3713 = vld [vmem:[%s608 + $0x468] sm:$0xff]
          %v3714 = vld [vmem:[%s608 + $0x470] sm:$0xff]
          %v3715 = vld [vmem:[%s608 + $0x478] sm:$0xff]
          %v3716 = vld [vmem:[%s608 + $0x480] sm:$0xff]
          %v3717 = vld [vmem:[%s608 + $0x488] sm:$0xff]
          %v3718 = vld [vmem:[%s608 + $0x490] sm:$0xff]
          %v3719 = vld [vmem:[%s608 + $0x498] sm:$0xff]
          %v3720 = vld [vmem:[%s608 + $0x4a0] sm:$0xff]
          %v3721 = vld [vmem:[%s608 + $0x4a8] sm:$0xff]
          %v3722 = vld [vmem:[%s608 + $0x4b0] sm:$0xff]
          %v3723 = vld [vmem:[%s608 + $0x4b8] sm:$0xff]
          %v3724 = vld [vmem:[%s608 + $0x4c0] sm:$0xff]
          %v3725 = vld [vmem:[%s608 + $0x4c8] sm:$0xff]
          %v3726 = vld [vmem:[%s608 + $0x4d0] sm:$0xff]
          %v3727 = vld [vmem:[%s608 + $0x4d8] sm:$0xff]
          %v3728 = vld [vmem:[%s608 + $0x4e0] sm:$0xff]
          %v3729 = vld [vmem:[%s608 + $0x4e8] sm:$0xff]
          %v3730 = vld [vmem:[%s608 + $0x4f0] sm:$0xff]
          %v3731 = vld [vmem:[%s608 + $0x4f8] sm:$0xff]
          %v3732 = vld [vmem:[%s608 + $0x500] sm:$0xff]
          %v3733 = vld [vmem:[%s608 + $0x508] sm:$0xff]
          %v3734 = vld [vmem:[%s608 + $0x510] sm:$0xff]
          %v3735 = vld [vmem:[%s608 + $0x518] sm:$0xff]
          %v3736 = vld [vmem:[%s608 + $0x520] sm:$0xff]
          %v3737 = vld [vmem:[%s608 + $0x528] sm:$0xff]
          %v3738 = vld [vmem:[%s608 + $0x530] sm:$0xff]
          %v3739 = vld [vmem:[%s608 + $0x538] sm:$0xff]
          %v3740 = vld [vmem:[%s608 + $0x540] sm:$0xff]
          %v3741 = vld [vmem:[%s608 + $0x548] sm:$0xff]
          %v3742 = vld [vmem:[%s608 + $0x550] sm:$0xff]
          %v3743 = vld [vmem:[%s608 + $0x558] sm:$0xff]
          %v3744 = vld [vmem:[%s608 + $0x560] sm:$0xff]
          %v3745 = vld [vmem:[%s608 + $0x568] sm:$0xff]
          %v3746 = vld [vmem:[%s608 + $0x570] sm:$0xff]
          %v3747 = vld [vmem:[%s608 + $0x578] sm:$0xff]
          %v3748 = vld [vmem:[%s608 + $0x580] sm:$0xff]
          %v3749 = vld [vmem:[%s608 + $0x588] sm:$0xff]
          %v3750 = vld [vmem:[%s608 + $0x590] sm:$0xff]
          %v3751 = vld [vmem:[%s608 + $0x598] sm:$0xff]
          %v3752 = vld [vmem:[%s608 + $0x5a0] sm:$0xff]
          %v3753 = vld [vmem:[%s608 + $0x5a8] sm:$0xff]
          %v3754 = vld [vmem:[%s608 + $0x5b0] sm:$0xff]
          %v3755 = vld [vmem:[%s608 + $0x5b8] sm:$0xff]
          %v3756 = vld [vmem:[%s608 + $0x5c0] sm:$0xff]
          %v3757 = vld [vmem:[%s608 + $0x5c8] sm:$0xff]
          %v3758 = vld [vmem:[%s608 + $0x5d0] sm:$0xff]
          %v3759 = vld [vmem:[%s608 + $0x5d8] sm:$0xff]
          %v3760 = vld [vmem:[%s608 + $0x5e0] sm:$0xff]
          %v3761 = vld [vmem:[%s608 + $0x5e8] sm:$0xff]
          %v3762 = vld [vmem:[%s608 + $0x5f0] sm:$0xff]
          %v3763 = vld [vmem:[%s608 + $0x5f8] sm:$0xff]
          %v3764 = vld [vmem:[%s608 + $0x600] sm:$0xff]
          %v3765 = vld [vmem:[%s608 + $0x608] sm:$0xff]
          %v3766 = vld [vmem:[%s608 + $0x610] sm:$0xff]
          %v3767 = vld [vmem:[%s608 + $0x618] sm:$0xff]
          %v3768 = vld [vmem:[%s608 + $0x620] sm:$0xff]
          %v3769 = vld [vmem:[%s608 + $0x628] sm:$0xff]
          %v3770 = vld [vmem:[%s608 + $0x630] sm:$0xff]
          %v3771 = vld [vmem:[%s608 + $0x638] sm:$0xff]
          %v3772 = vld [vmem:[%s608 + $0x640] sm:$0xff]
          %v3773 = vld [vmem:[%s608 + $0x648] sm:$0xff]
          %v3774 = vld [vmem:[%s608 + $0x650] sm:$0xff]
          %v3775 = vld [vmem:[%s608 + $0x658] sm:$0xff]
          %v3776 = vld [vmem:[%s608 + $0x660] sm:$0xff]
          %v3777 = vld [vmem:[%s608 + $0x668] sm:$0xff]
          %v3778 = vld [vmem:[%s608 + $0x670] sm:$0xff]
          %v3779 = vld [vmem:[%s608 + $0x678] sm:$0xff]
          %v3780 = vld [vmem:[%s608 + $0x680] sm:$0xff]
          %v3781 = vld [vmem:[%s608 + $0x688] sm:$0xff]
          %v3782 = vld [vmem:[%s608 + $0x690] sm:$0xff]
          %v3783 = vld [vmem:[%s608 + $0x698] sm:$0xff]
          %v3784 = vld [vmem:[%s608 + $0x6a0] sm:$0xff]
          %v3785 = vld [vmem:[%s608 + $0x6a8] sm:$0xff]
          %v3786 = vld [vmem:[%s608 + $0x6b0] sm:$0xff]
          %v3787 = vld [vmem:[%s608 + $0x6b8] sm:$0xff]
          %v3788 = vld [vmem:[%s608 + $0x6c0] sm:$0xff]
          %v3789 = vld [vmem:[%s608 + $0x6c8] sm:$0xff]
          %v3790 = vld [vmem:[%s608 + $0x6d0] sm:$0xff]
          %v3791 = vld [vmem:[%s608 + $0x6d8] sm:$0xff]
          %v3792 = vld [vmem:[%s608 + $0x6e0] sm:$0xff]
          %v3793 = vld [vmem:[%s608 + $0x6e8] sm:$0xff]
          %v3794 = vld [vmem:[%s608 + $0x6f0] sm:$0xff]
          %v3795 = vld [vmem:[%s608 + $0x6f8] sm:$0xff]
          %v3796 = vld [vmem:[%s608 + $0x700] sm:$0xff]
          %v3797 = vld [vmem:[%s608 + $0x708] sm:$0xff]
          %v3798 = vld [vmem:[%s608 + $0x710] sm:$0xff]
          %v3799 = vld [vmem:[%s608 + $0x718] sm:$0xff]
          %v3800 = vld [vmem:[%s608 + $0x720] sm:$0xff]
          %v3801 = vld [vmem:[%s608 + $0x728] sm:$0xff]
          %v3802 = vld [vmem:[%s608 + $0x730] sm:$0xff]
          %v3803 = vld [vmem:[%s608 + $0x738] sm:$0xff]
          %v3804 = vld [vmem:[%s608 + $0x740] sm:$0xff]
          %v3805 = vld [vmem:[%s608 + $0x748] sm:$0xff]
          %v3806 = vld [vmem:[%s608 + $0x750] sm:$0xff]
          %v3807 = vld [vmem:[%s608 + $0x758] sm:$0xff]
          %v3808 = vld [vmem:[%s608 + $0x760] sm:$0xff]
          %v3809 = vld [vmem:[%s608 + $0x768] sm:$0xff]
          %v3810 = vld [vmem:[%s608 + $0x770] sm:$0xff]
          %v3811 = vld [vmem:[%s608 + $0x778] sm:$0xff]
          %v3812 = vld [vmem:[%s608 + $0x780] sm:$0xff]
          %v3813 = vld [vmem:[%s608 + $0x788] sm:$0xff]
          %v3814 = vld [vmem:[%s608 + $0x790] sm:$0xff]
          %v3815 = vld [vmem:[%s608 + $0x798] sm:$0xff]
          %v3816 = vld [vmem:[%s608 + $0x7a0] sm:$0xff]
          %v3817 = vld [vmem:[%s608 + $0x7a8] sm:$0xff]
          %v3818 = vld [vmem:[%s608 + $0x7b0] sm:$0xff]
          %v3819 = vld [vmem:[%s608 + $0x7b8] sm:$0xff]
          %v3820 = vld [vmem:[%s608 + $0x7c0] sm:$0xff]
          %v3821 = vld [vmem:[%s608 + $0x7c8] sm:$0xff]
          %v3822 = vld [vmem:[%s608 + $0x7d0] sm:$0xff]
          %v3823 = vld [vmem:[%s608 + $0x7d8] sm:$0xff]
          %v3824 = vld [vmem:[%s608 + $0x7e0] sm:$0xff]
          %v3825 = vld [vmem:[%s608 + $0x7e8] sm:$0xff]
          %v3826 = vld [vmem:[%s608 + $0x7f0] sm:$0xff]
          %v3827 = vld [vmem:[%s608 + $0x7f8] sm:$0xff]
          %v3828 = vunpack.c.l.s8.bf16 %v3572
          %v3829 = vunpack.c.l.s8.bf16 %v3573
          %v3830 = vunpack.c.l.s8.bf16 %v3574
          %v3831 = vunpack.c.l.s8.bf16 %v3575
          %v3832 = vunpack.c.h.s8.bf16 %v3572
          %v3833 = vunpack.c.h.s8.bf16 %v3573
          %v3834 = vunpack.c.h.s8.bf16 %v3574
          %v3835 = vunpack.c.h.s8.bf16 %v3575
          %v3836 = vunpack.c.l.s8.bf16 %v3576
          %v3837 = vunpack.c.l.s8.bf16 %v3577
          %v3838 = vunpack.c.l.s8.bf16 %v3578
          %v3839 = vunpack.c.l.s8.bf16 %v3579
          %v3840 = vunpack.c.h.s8.bf16 %v3576
          %v3841 = vunpack.c.h.s8.bf16 %v3577
          %v3842 = vunpack.c.h.s8.bf16 %v3578
          %v3843 = vunpack.c.h.s8.bf16 %v3579
          %v3844 = vunpack.c.l.s8.bf16 %v3580
          %v3845 = vunpack.c.l.s8.bf16 %v3581
          %v3846 = vunpack.c.l.s8.bf16 %v3582
          %v3847 = vunpack.c.l.s8.bf16 %v3583
          %v3848 = vunpack.c.h.s8.bf16 %v3580
          %v3849 = vunpack.c.h.s8.bf16 %v3581
          %v3850 = vunpack.c.h.s8.bf16 %v3582
          %v3851 = vunpack.c.h.s8.bf16 %v3583
          %v3852 = vunpack.c.l.s8.bf16 %v3584
          %v3853 = vunpack.c.l.s8.bf16 %v3585
          %v3854 = vunpack.c.l.s8.bf16 %v3586
          %v3855 = vunpack.c.l.s8.bf16 %v3587
          %v3856 = vunpack.c.h.s8.bf16 %v3584
          %v3857 = vunpack.c.h.s8.bf16 %v3585
          %v3858 = vunpack.c.h.s8.bf16 %v3586
          %v3859 = vunpack.c.h.s8.bf16 %v3587
          %v3860 = vunpack.c.l.s8.bf16 %v3588
          %v3861 = vunpack.c.l.s8.bf16 %v3589
          %v3862 = vunpack.c.l.s8.bf16 %v3590
          %v3863 = vunpack.c.l.s8.bf16 %v3591
          %v3864 = vunpack.c.h.s8.bf16 %v3588
          %v3865 = vunpack.c.h.s8.bf16 %v3589
          %v3866 = vunpack.c.h.s8.bf16 %v3590
          %v3867 = vunpack.c.h.s8.bf16 %v3591
          %v3868 = vunpack.c.l.s8.bf16 %v3592
          %v3869 = vunpack.c.l.s8.bf16 %v3593
          %v3870 = vunpack.c.l.s8.bf16 %v3594
          %v3871 = vunpack.c.l.s8.bf16 %v3595
          %v3872 = vunpack.c.h.s8.bf16 %v3592
          %v3873 = vunpack.c.h.s8.bf16 %v3593
          %v3874 = vunpack.c.h.s8.bf16 %v3594
          %v3875 = vunpack.c.h.s8.bf16 %v3595
          %v3876 = vunpack.c.l.s8.bf16 %v3596
          %v3877 = vunpack.c.l.s8.bf16 %v3597
          %v3878 = vunpack.c.l.s8.bf16 %v3598
          %v3879 = vunpack.c.l.s8.bf16 %v3599
          %v3880 = vunpack.c.h.s8.bf16 %v3596
          %v3881 = vunpack.c.h.s8.bf16 %v3597
          %v3882 = vunpack.c.h.s8.bf16 %v3598
          %v3883 = vunpack.c.h.s8.bf16 %v3599
          %v3884 = vunpack.c.l.s8.bf16 %v3600
          %v3885 = vunpack.c.l.s8.bf16 %v3601
          %v3886 = vunpack.c.l.s8.bf16 %v3602
          %v3887 = vunpack.c.l.s8.bf16 %v3603
          %v3888 = vunpack.c.h.s8.bf16 %v3600
          %v3889 = vunpack.c.h.s8.bf16 %v3601
          %v3890 = vunpack.c.h.s8.bf16 %v3602
          %v3891 = vunpack.c.h.s8.bf16 %v3603
          %v3892 = vunpack.c.l.s8.bf16 %v3604
          %v3893 = vunpack.c.l.s8.bf16 %v3605
          %v3894 = vunpack.c.l.s8.bf16 %v3606
          %v3895 = vunpack.c.l.s8.bf16 %v3607
          %v3896 = vunpack.c.h.s8.bf16 %v3604
          %v3897 = vunpack.c.h.s8.bf16 %v3605
          %v3898 = vunpack.c.h.s8.bf16 %v3606
          %v3899 = vunpack.c.h.s8.bf16 %v3607
          %v3900 = vunpack.c.l.s8.bf16 %v3608
          %v3901 = vunpack.c.l.s8.bf16 %v3609
          %v3902 = vunpack.c.l.s8.bf16 %v3610
          %v3903 = vunpack.c.l.s8.bf16 %v3611
          %v3904 = vunpack.c.h.s8.bf16 %v3608
          %v3905 = vunpack.c.h.s8.bf16 %v3609
          %v3906 = vunpack.c.h.s8.bf16 %v3610
          %v3907 = vunpack.c.h.s8.bf16 %v3611
          %v3908 = vunpack.c.l.s8.bf16 %v3612
          %v3909 = vunpack.c.l.s8.bf16 %v3613
          %v3910 = vunpack.c.l.s8.bf16 %v3614
          %v3911 = vunpack.c.l.s8.bf16 %v3615
          %v3912 = vunpack.c.h.s8.bf16 %v3612
          %v3913 = vunpack.c.h.s8.bf16 %v3613
          %v3914 = vunpack.c.h.s8.bf16 %v3614
          %v3915 = vunpack.c.h.s8.bf16 %v3615
          %v3916 = vunpack.c.l.s8.bf16 %v3616
          %v3917 = vunpack.c.l.s8.bf16 %v3617
          %v3918 = vunpack.c.l.s8.bf16 %v3618
          %v3919 = vunpack.c.l.s8.bf16 %v3619
          %v3920 = vunpack.c.h.s8.bf16 %v3616
          %v3921 = vunpack.c.h.s8.bf16 %v3617
          %v3922 = vunpack.c.h.s8.bf16 %v3618
          %v3923 = vunpack.c.h.s8.bf16 %v3619
          %v3924 = vunpack.c.l.s8.bf16 %v3620
          %v3925 = vunpack.c.l.s8.bf16 %v3621
          %v3926 = vunpack.c.l.s8.bf16 %v3622
          %v3927 = vunpack.c.l.s8.bf16 %v3623
          %v3928 = vunpack.c.h.s8.bf16 %v3620
          %v3929 = vunpack.c.h.s8.bf16 %v3621
          %v3930 = vunpack.c.h.s8.bf16 %v3622
          %v3931 = vunpack.c.h.s8.bf16 %v3623
          %v3932 = vunpack.c.l.s8.bf16 %v3624
          %v3933 = vunpack.c.l.s8.bf16 %v3625
          %v3934 = vunpack.c.l.s8.bf16 %v3626
          %v3935 = vunpack.c.l.s8.bf16 %v3627
          %v3936 = vunpack.c.h.s8.bf16 %v3624
          %v3937 = vunpack.c.h.s8.bf16 %v3625
          %v3938 = vunpack.c.h.s8.bf16 %v3626
          %v3939 = vunpack.c.h.s8.bf16 %v3627
          %v3940 = vunpack.c.l.s8.bf16 %v3628
          %v3941 = vunpack.c.l.s8.bf16 %v3629
          %v3942 = vunpack.c.l.s8.bf16 %v3630
          %v3943 = vunpack.c.l.s8.bf16 %v3631
          %v3944 = vunpack.c.h.s8.bf16 %v3628
          %v3945 = vunpack.c.h.s8.bf16 %v3629
          %v3946 = vunpack.c.h.s8.bf16 %v3630
          %v3947 = vunpack.c.h.s8.bf16 %v3631
          %v3948 = vunpack.c.l.s8.bf16 %v3632
          %v3949 = vunpack.c.l.s8.bf16 %v3633
          %v3950 = vunpack.c.l.s8.bf16 %v3634
          %v3951 = vunpack.c.l.s8.bf16 %v3635
          %v3952 = vunpack.c.h.s8.bf16 %v3632
          %v3953 = vunpack.c.h.s8.bf16 %v3633
          %v3954 = vunpack.c.h.s8.bf16 %v3634
          %v3955 = vunpack.c.h.s8.bf16 %v3635
          %v3956 = vunpack.c.l.s8.bf16 %v3636
          %v3957 = vunpack.c.l.s8.bf16 %v3637
          %v3958 = vunpack.c.l.s8.bf16 %v3638
          %v3959 = vunpack.c.l.s8.bf16 %v3639
          %v3960 = vunpack.c.h.s8.bf16 %v3636
          %v3961 = vunpack.c.h.s8.bf16 %v3637
          %v3962 = vunpack.c.h.s8.bf16 %v3638
          %v3963 = vunpack.c.h.s8.bf16 %v3639
          %v3964 = vunpack.c.l.s8.bf16 %v3640
          %v3965 = vunpack.c.l.s8.bf16 %v3641
          %v3966 = vunpack.c.l.s8.bf16 %v3642
          %v3967 = vunpack.c.l.s8.bf16 %v3643
          %v3968 = vunpack.c.h.s8.bf16 %v3640
          %v3969 = vunpack.c.h.s8.bf16 %v3641
          %v3970 = vunpack.c.h.s8.bf16 %v3642
          %v3971 = vunpack.c.h.s8.bf16 %v3643
          %v3972 = vunpack.c.l.s8.bf16 %v3644
          %v3973 = vunpack.c.l.s8.bf16 %v3645
          %v3974 = vunpack.c.l.s8.bf16 %v3646
          %v3975 = vunpack.c.l.s8.bf16 %v3647
          %v3976 = vunpack.c.h.s8.bf16 %v3644
          %v3977 = vunpack.c.h.s8.bf16 %v3645
          %v3978 = vunpack.c.h.s8.bf16 %v3646
          %v3979 = vunpack.c.h.s8.bf16 %v3647
          %v3980 = vunpack.c.l.s8.bf16 %v3648
          %v3981 = vunpack.c.l.s8.bf16 %v3649
          %v3982 = vunpack.c.l.s8.bf16 %v3650
          %v3983 = vunpack.c.l.s8.bf16 %v3651
          %v3984 = vunpack.c.h.s8.bf16 %v3648
          %v3985 = vunpack.c.h.s8.bf16 %v3649
          %v3986 = vunpack.c.h.s8.bf16 %v3650
          %v3987 = vunpack.c.h.s8.bf16 %v3651
          %v3988 = vunpack.c.l.s8.bf16 %v3652
          %v3989 = vunpack.c.l.s8.bf16 %v3653
          %v3990 = vunpack.c.l.s8.bf16 %v3654
          %v3991 = vunpack.c.l.s8.bf16 %v3655
          %v3992 = vunpack.c.h.s8.bf16 %v3652
          %v3993 = vunpack.c.h.s8.bf16 %v3653
          %v3994 = vunpack.c.h.s8.bf16 %v3654
          %v3995 = vunpack.c.h.s8.bf16 %v3655
          %v3996 = vunpack.c.l.s8.bf16 %v3656
          %v3997 = vunpack.c.l.s8.bf16 %v3657
          %v3998 = vunpack.c.l.s8.bf16 %v3658
          %v3999 = vunpack.c.l.s8.bf16 %v3659
          %v4000 = vunpack.c.h.s8.bf16 %v3656
          %v4001 = vunpack.c.h.s8.bf16 %v3657
          %v4002 = vunpack.c.h.s8.bf16 %v3658
          %v4003 = vunpack.c.h.s8.bf16 %v3659
          %v4004 = vunpack.c.l.s8.bf16 %v3660
          %v4005 = vunpack.c.l.s8.bf16 %v3661
          %v4006 = vunpack.c.l.s8.bf16 %v3662
          %v4007 = vunpack.c.l.s8.bf16 %v3663
          %v4008 = vunpack.c.h.s8.bf16 %v3660
          %v4009 = vunpack.c.h.s8.bf16 %v3661
          %v4010 = vunpack.c.h.s8.bf16 %v3662
          %v4011 = vunpack.c.h.s8.bf16 %v3663
          %v4012 = vunpack.c.l.s8.bf16 %v3664
          %v4013 = vunpack.c.l.s8.bf16 %v3665
          %v4014 = vunpack.c.l.s8.bf16 %v3666
          %v4015 = vunpack.c.l.s8.bf16 %v3667
          %v4016 = vunpack.c.h.s8.bf16 %v3664
          %v4017 = vunpack.c.h.s8.bf16 %v3665
          %v4018 = vunpack.c.h.s8.bf16 %v3666
          %v4019 = vunpack.c.h.s8.bf16 %v3667
          %v4020 = vunpack.c.l.s8.bf16 %v3668
          %v4021 = vunpack.c.l.s8.bf16 %v3669
          %v4022 = vunpack.c.l.s8.bf16 %v3670
          %v4023 = vunpack.c.l.s8.bf16 %v3671
          %v4024 = vunpack.c.h.s8.bf16 %v3668
          %v4025 = vunpack.c.h.s8.bf16 %v3669
          %v4026 = vunpack.c.h.s8.bf16 %v3670
          %v4027 = vunpack.c.h.s8.bf16 %v3671
          %v4028 = vunpack.c.l.s8.bf16 %v3672
          %v4029 = vunpack.c.l.s8.bf16 %v3673
          %v4030 = vunpack.c.l.s8.bf16 %v3674
          %v4031 = vunpack.c.l.s8.bf16 %v3675
          %v4032 = vunpack.c.h.s8.bf16 %v3672
          %v4033 = vunpack.c.h.s8.bf16 %v3673
          %v4034 = vunpack.c.h.s8.bf16 %v3674
          %v4035 = vunpack.c.h.s8.bf16 %v3675
          %v4036 = vunpack.c.l.s8.bf16 %v3676
          %v4037 = vunpack.c.l.s8.bf16 %v3677
          %v4038 = vunpack.c.l.s8.bf16 %v3678
          %v4039 = vunpack.c.l.s8.bf16 %v3679
          %v4040 = vunpack.c.h.s8.bf16 %v3676
          %v4041 = vunpack.c.h.s8.bf16 %v3677
          %v4042 = vunpack.c.h.s8.bf16 %v3678
          %v4043 = vunpack.c.h.s8.bf16 %v3679
          %v4044 = vunpack.c.l.s8.bf16 %v3680
          %v4045 = vunpack.c.l.s8.bf16 %v3681
          %v4046 = vunpack.c.l.s8.bf16 %v3682
          %v4047 = vunpack.c.l.s8.bf16 %v3683
          %v4048 = vunpack.c.h.s8.bf16 %v3680
          %v4049 = vunpack.c.h.s8.bf16 %v3681
          %v4050 = vunpack.c.h.s8.bf16 %v3682
          %v4051 = vunpack.c.h.s8.bf16 %v3683
          %v4052 = vunpack.c.l.s8.bf16 %v3684
          %v4053 = vunpack.c.l.s8.bf16 %v3685
          %v4054 = vunpack.c.l.s8.bf16 %v3686
          %v4055 = vunpack.c.l.s8.bf16 %v3687
          %v4056 = vunpack.c.h.s8.bf16 %v3684
          %v4057 = vunpack.c.h.s8.bf16 %v3685
          %v4058 = vunpack.c.h.s8.bf16 %v3686
          %v4059 = vunpack.c.h.s8.bf16 %v3687
          %v4060 = vunpack.c.l.s8.bf16 %v3688
          %v4061 = vunpack.c.l.s8.bf16 %v3689
          %v4062 = vunpack.c.l.s8.bf16 %v3690
          %v4063 = vunpack.c.l.s8.bf16 %v3691
          %v4064 = vunpack.c.h.s8.bf16 %v3688
          %v4065 = vunpack.c.h.s8.bf16 %v3689
          %v4066 = vunpack.c.h.s8.bf16 %v3690
          %v4067 = vunpack.c.h.s8.bf16 %v3691
          %v4068 = vunpack.c.l.s8.bf16 %v3692
          %v4069 = vunpack.c.l.s8.bf16 %v3693
          %v4070 = vunpack.c.l.s8.bf16 %v3694
          %v4071 = vunpack.c.l.s8.bf16 %v3695
          %v4072 = vunpack.c.h.s8.bf16 %v3692
          %v4073 = vunpack.c.h.s8.bf16 %v3693
          %v4074 = vunpack.c.h.s8.bf16 %v3694
          %v4075 = vunpack.c.h.s8.bf16 %v3695
          %v4076 = vunpack.c.l.s8.bf16 %v3696
          %v4077 = vunpack.c.l.s8.bf16 %v3697
          %v4078 = vunpack.c.l.s8.bf16 %v3698
          %v4079 = vunpack.c.l.s8.bf16 %v3699
          %v4080 = vunpack.c.h.s8.bf16 %v3696
          %v4081 = vunpack.c.h.s8.bf16 %v3697
          %v4082 = vunpack.c.h.s8.bf16 %v3698
          %v4083 = vunpack.c.h.s8.bf16 %v3699
          %v4084 = vunpack.c.l.s8.bf16 %v3700
          %v4085 = vunpack.c.l.s8.bf16 %v3701
          %v4086 = vunpack.c.l.s8.bf16 %v3702
          %v4087 = vunpack.c.l.s8.bf16 %v3703
          %v4088 = vunpack.c.h.s8.bf16 %v3700
          %v4089 = vunpack.c.h.s8.bf16 %v3701
          %v4090 = vunpack.c.h.s8.bf16 %v3702
          %v4091 = vunpack.c.h.s8.bf16 %v3703
          %v4092 = vunpack.c.l.s8.bf16 %v3704
          %v4093 = vunpack.c.l.s8.bf16 %v3705
          %v4094 = vunpack.c.l.s8.bf16 %v3706
          %v4095 = vunpack.c.l.s8.bf16 %v3707
          %v4096 = vunpack.c.h.s8.bf16 %v3704
          %v4097 = vunpack.c.h.s8.bf16 %v3705
          %v4098 = vunpack.c.h.s8.bf16 %v3706
          %v4099 = vunpack.c.h.s8.bf16 %v3707
          %v4100 = vunpack.c.l.s8.bf16 %v3708
          %v4101 = vunpack.c.l.s8.bf16 %v3709
          %v4102 = vunpack.c.l.s8.bf16 %v3710
          %v4103 = vunpack.c.l.s8.bf16 %v3711
          %v4104 = vunpack.c.h.s8.bf16 %v3708
          %v4105 = vunpack.c.h.s8.bf16 %v3709
          %v4106 = vunpack.c.h.s8.bf16 %v3710
          %v4107 = vunpack.c.h.s8.bf16 %v3711
          %v4108 = vunpack.c.l.s8.bf16 %v3712
          %v4109 = vunpack.c.l.s8.bf16 %v3713
          %v4110 = vunpack.c.l.s8.bf16 %v3714
          %v4111 = vunpack.c.l.s8.bf16 %v3715
          %v4112 = vunpack.c.h.s8.bf16 %v3712
          %v4113 = vunpack.c.h.s8.bf16 %v3713
          %v4114 = vunpack.c.h.s8.bf16 %v3714
          %v4115 = vunpack.c.h.s8.bf16 %v3715
          %v4116 = vunpack.c.l.s8.bf16 %v3716
          %v4117 = vunpack.c.l.s8.bf16 %v3717
          %v4118 = vunpack.c.l.s8.bf16 %v3718
          %v4119 = vunpack.c.l.s8.bf16 %v3719
          %v4120 = vunpack.c.h.s8.bf16 %v3716
          %v4121 = vunpack.c.h.s8.bf16 %v3717
          %v4122 = vunpack.c.h.s8.bf16 %v3718
          %v4123 = vunpack.c.h.s8.bf16 %v3719
          %v4124 = vunpack.c.l.s8.bf16 %v3720
          %v4125 = vunpack.c.l.s8.bf16 %v3721
          %v4126 = vunpack.c.l.s8.bf16 %v3722
          %v4127 = vunpack.c.l.s8.bf16 %v3723
          %v4128 = vunpack.c.h.s8.bf16 %v3720
          %v4129 = vunpack.c.h.s8.bf16 %v3721
          %v4130 = vunpack.c.h.s8.bf16 %v3722
          %v4131 = vunpack.c.h.s8.bf16 %v3723
          %v4132 = vunpack.c.l.s8.bf16 %v3724
          %v4133 = vunpack.c.l.s8.bf16 %v3725
          %v4134 = vunpack.c.l.s8.bf16 %v3726
          %v4135 = vunpack.c.l.s8.bf16 %v3727
          %v4136 = vunpack.c.h.s8.bf16 %v3724
          %v4137 = vunpack.c.h.s8.bf16 %v3725
          %v4138 = vunpack.c.h.s8.bf16 %v3726
          %v4139 = vunpack.c.h.s8.bf16 %v3727
          %v4140 = vunpack.c.l.s8.bf16 %v3728
          %v4141 = vunpack.c.l.s8.bf16 %v3729
          %v4142 = vunpack.c.l.s8.bf16 %v3730
          %v4143 = vunpack.c.l.s8.bf16 %v3731
          %v4144 = vunpack.c.h.s8.bf16 %v3728
          %v4145 = vunpack.c.h.s8.bf16 %v3729
          %v4146 = vunpack.c.h.s8.bf16 %v3730
          %v4147 = vunpack.c.h.s8.bf16 %v3731
          %v4148 = vunpack.c.l.s8.bf16 %v3732
          %v4149 = vunpack.c.l.s8.bf16 %v3733
          %v4150 = vunpack.c.l.s8.bf16 %v3734
          %v4151 = vunpack.c.l.s8.bf16 %v3735
          %v4152 = vunpack.c.h.s8.bf16 %v3732
          %v4153 = vunpack.c.h.s8.bf16 %v3733
          %v4154 = vunpack.c.h.s8.bf16 %v3734
          %v4155 = vunpack.c.h.s8.bf16 %v3735
          %v4156 = vunpack.c.l.s8.bf16 %v3736
          %v4157 = vunpack.c.l.s8.bf16 %v3737
          %v4158 = vunpack.c.l.s8.bf16 %v3738
          %v4159 = vunpack.c.l.s8.bf16 %v3739
          %v4160 = vunpack.c.h.s8.bf16 %v3736
          %v4161 = vunpack.c.h.s8.bf16 %v3737
          %v4162 = vunpack.c.h.s8.bf16 %v3738
          %v4163 = vunpack.c.h.s8.bf16 %v3739
          %v4164 = vunpack.c.l.s8.bf16 %v3740
          %v4165 = vunpack.c.l.s8.bf16 %v3741
          %v4166 = vunpack.c.l.s8.bf16 %v3742
          %v4167 = vunpack.c.l.s8.bf16 %v3743
          %v4168 = vunpack.c.h.s8.bf16 %v3740
          %v4169 = vunpack.c.h.s8.bf16 %v3741
          %v4170 = vunpack.c.h.s8.bf16 %v3742
          %v4171 = vunpack.c.h.s8.bf16 %v3743
          %v4172 = vunpack.c.l.s8.bf16 %v3744
          %v4173 = vunpack.c.l.s8.bf16 %v3745
          %v4174 = vunpack.c.l.s8.bf16 %v3746
          %v4175 = vunpack.c.l.s8.bf16 %v3747
          %v4176 = vunpack.c.h.s8.bf16 %v3744
          %v4177 = vunpack.c.h.s8.bf16 %v3745
          %v4178 = vunpack.c.h.s8.bf16 %v3746
          %v4179 = vunpack.c.h.s8.bf16 %v3747
          %v4180 = vunpack.c.l.s8.bf16 %v3748
          %v4181 = vunpack.c.l.s8.bf16 %v3749
          %v4182 = vunpack.c.l.s8.bf16 %v3750
          %v4183 = vunpack.c.l.s8.bf16 %v3751
          %v4184 = vunpack.c.h.s8.bf16 %v3748
          %v4185 = vunpack.c.h.s8.bf16 %v3749
          %v4186 = vunpack.c.h.s8.bf16 %v3750
          %v4187 = vunpack.c.h.s8.bf16 %v3751
          %v4188 = vunpack.c.l.s8.bf16 %v3752
          %v4189 = vunpack.c.l.s8.bf16 %v3753
          %v4190 = vunpack.c.l.s8.bf16 %v3754
          %v4191 = vunpack.c.l.s8.bf16 %v3755
          %v4192 = vunpack.c.h.s8.bf16 %v3752
          %v4193 = vunpack.c.h.s8.bf16 %v3753
          %v4194 = vunpack.c.h.s8.bf16 %v3754
          %v4195 = vunpack.c.h.s8.bf16 %v3755
          %v4196 = vunpack.c.l.s8.bf16 %v3756
          %v4197 = vunpack.c.l.s8.bf16 %v3757
          %v4198 = vunpack.c.l.s8.bf16 %v3758
          %v4199 = vunpack.c.l.s8.bf16 %v3759
          %v4200 = vunpack.c.h.s8.bf16 %v3756
          %v4201 = vunpack.c.h.s8.bf16 %v3757
          %v4202 = vunpack.c.h.s8.bf16 %v3758
          %v4203 = vunpack.c.h.s8.bf16 %v3759
          %v4204 = vunpack.c.l.s8.bf16 %v3760
          %v4205 = vunpack.c.l.s8.bf16 %v3761
          %v4206 = vunpack.c.l.s8.bf16 %v3762
          %v4207 = vunpack.c.l.s8.bf16 %v3763
          %v4208 = vunpack.c.h.s8.bf16 %v3760
          %v4209 = vunpack.c.h.s8.bf16 %v3761
          %v4210 = vunpack.c.h.s8.bf16 %v3762
          %v4211 = vunpack.c.h.s8.bf16 %v3763
          %v4212 = vunpack.c.l.s8.bf16 %v3764
          %v4213 = vunpack.c.l.s8.bf16 %v3765
          %v4214 = vunpack.c.l.s8.bf16 %v3766
          %v4215 = vunpack.c.l.s8.bf16 %v3767
          %v4216 = vunpack.c.h.s8.bf16 %v3764
          %v4217 = vunpack.c.h.s8.bf16 %v3765
          %v4218 = vunpack.c.h.s8.bf16 %v3766
          %v4219 = vunpack.c.h.s8.bf16 %v3767
          %v4220 = vunpack.c.l.s8.bf16 %v3768
          %v4221 = vunpack.c.l.s8.bf16 %v3769
          %v4222 = vunpack.c.l.s8.bf16 %v3770
          %v4223 = vunpack.c.l.s8.bf16 %v3771
          %v4224 = vunpack.c.h.s8.bf16 %v3768
          %v4225 = vunpack.c.h.s8.bf16 %v3769
          %v4226 = vunpack.c.h.s8.bf16 %v3770
          %v4227 = vunpack.c.h.s8.bf16 %v3771
          %v4228 = vunpack.c.l.s8.bf16 %v3772
          %v4229 = vunpack.c.l.s8.bf16 %v3773
          %v4230 = vunpack.c.l.s8.bf16 %v3774
          %v4231 = vunpack.c.l.s8.bf16 %v3775
          %v4232 = vunpack.c.h.s8.bf16 %v3772
          %v4233 = vunpack.c.h.s8.bf16 %v3773
          %v4234 = vunpack.c.h.s8.bf16 %v3774
          %v4235 = vunpack.c.h.s8.bf16 %v3775
          %v4236 = vunpack.c.l.s8.bf16 %v3776
          %v4237 = vunpack.c.l.s8.bf16 %v3777
          %v4238 = vunpack.c.l.s8.bf16 %v3778
          %v4239 = vunpack.c.l.s8.bf16 %v3779
          %v4240 = vunpack.c.h.s8.bf16 %v3776
          %v4241 = vunpack.c.h.s8.bf16 %v3777
          %v4242 = vunpack.c.h.s8.bf16 %v3778
          %v4243 = vunpack.c.h.s8.bf16 %v3779
          %v4244 = vunpack.c.l.s8.bf16 %v3780
          %v4245 = vunpack.c.l.s8.bf16 %v3781
          %v4246 = vunpack.c.l.s8.bf16 %v3782
          %v4247 = vunpack.c.l.s8.bf16 %v3783
          %v4248 = vunpack.c.h.s8.bf16 %v3780
          %v4249 = vunpack.c.h.s8.bf16 %v3781
          %v4250 = vunpack.c.h.s8.bf16 %v3782
          %v4251 = vunpack.c.h.s8.bf16 %v3783
          %v4252 = vunpack.c.l.s8.bf16 %v3784
          %v4253 = vunpack.c.l.s8.bf16 %v3785
          %v4254 = vunpack.c.l.s8.bf16 %v3786
          %v4255 = vunpack.c.l.s8.bf16 %v3787
          %v4256 = vunpack.c.h.s8.bf16 %v3784
          %v4257 = vunpack.c.h.s8.bf16 %v3785
          %v4258 = vunpack.c.h.s8.bf16 %v3786
          %v4259 = vunpack.c.h.s8.bf16 %v3787
          %v4260 = vunpack.c.l.s8.bf16 %v3788
          %v4261 = vunpack.c.l.s8.bf16 %v3789
          %v4262 = vunpack.c.l.s8.bf16 %v3790
          %v4263 = vunpack.c.l.s8.bf16 %v3791
          %v4264 = vunpack.c.h.s8.bf16 %v3788
          %v4265 = vunpack.c.h.s8.bf16 %v3789
          %v4266 = vunpack.c.h.s8.bf16 %v3790
          %v4267 = vunpack.c.h.s8.bf16 %v3791
          %v4268 = vunpack.c.l.s8.bf16 %v3792
          %v4269 = vunpack.c.l.s8.bf16 %v3793
          %v4270 = vunpack.c.l.s8.bf16 %v3794
          %v4271 = vunpack.c.l.s8.bf16 %v3795
          %v4272 = vunpack.c.h.s8.bf16 %v3792
          %v4273 = vunpack.c.h.s8.bf16 %v3793
          %v4274 = vunpack.c.h.s8.bf16 %v3794
          %v4275 = vunpack.c.h.s8.bf16 %v3795
          %v4276 = vunpack.c.l.s8.bf16 %v3796
          %v4277 = vunpack.c.l.s8.bf16 %v3797
          %v4278 = vunpack.c.l.s8.bf16 %v3798
          %v4279 = vunpack.c.l.s8.bf16 %v3799
          %v4280 = vunpack.c.h.s8.bf16 %v3796
          %v4281 = vunpack.c.h.s8.bf16 %v3797
          %v4282 = vunpack.c.h.s8.bf16 %v3798
          %v4283 = vunpack.c.h.s8.bf16 %v3799
          %v4284 = vunpack.c.l.s8.bf16 %v3800
          %v4285 = vunpack.c.l.s8.bf16 %v3801
          %v4286 = vunpack.c.l.s8.bf16 %v3802
          %v4287 = vunpack.c.l.s8.bf16 %v3803
          %v4288 = vunpack.c.h.s8.bf16 %v3800
          %v4289 = vunpack.c.h.s8.bf16 %v3801
          %v4290 = vunpack.c.h.s8.bf16 %v3802
          %v4291 = vunpack.c.h.s8.bf16 %v3803
          %v4292 = vunpack.c.l.s8.bf16 %v3804
          %v4293 = vunpack.c.l.s8.bf16 %v3805
          %v4294 = vunpack.c.l.s8.bf16 %v3806
          %v4295 = vunpack.c.l.s8.bf16 %v3807
          %v4296 = vunpack.c.h.s8.bf16 %v3804
          %v4297 = vunpack.c.h.s8.bf16 %v3805
          %v4298 = vunpack.c.h.s8.bf16 %v3806
          %v4299 = vunpack.c.h.s8.bf16 %v3807
          %v4300 = vunpack.c.l.s8.bf16 %v3808
          %v4301 = vunpack.c.l.s8.bf16 %v3809
          %v4302 = vunpack.c.l.s8.bf16 %v3810
          %v4303 = vunpack.c.l.s8.bf16 %v3811
          %v4304 = vunpack.c.h.s8.bf16 %v3808
          %v4305 = vunpack.c.h.s8.bf16 %v3809
          %v4306 = vunpack.c.h.s8.bf16 %v3810
          %v4307 = vunpack.c.h.s8.bf16 %v3811
          %v4308 = vunpack.c.l.s8.bf16 %v3812
          %v4309 = vunpack.c.l.s8.bf16 %v3813
          %v4310 = vunpack.c.l.s8.bf16 %v3814
          %v4311 = vunpack.c.l.s8.bf16 %v3815
          %v4312 = vunpack.c.h.s8.bf16 %v3812
          %v4313 = vunpack.c.h.s8.bf16 %v3813
          %v4314 = vunpack.c.h.s8.bf16 %v3814
          %v4315 = vunpack.c.h.s8.bf16 %v3815
          %v4316 = vunpack.c.l.s8.bf16 %v3816
          %v4317 = vunpack.c.l.s8.bf16 %v3817
          %v4318 = vunpack.c.l.s8.bf16 %v3818
          %v4319 = vunpack.c.l.s8.bf16 %v3819
          %v4320 = vunpack.c.h.s8.bf16 %v3816
          %v4321 = vunpack.c.h.s8.bf16 %v3817
          %v4322 = vunpack.c.h.s8.bf16 %v3818
          %v4323 = vunpack.c.h.s8.bf16 %v3819
          %v4324 = vunpack.c.l.s8.bf16 %v3820
          %v4325 = vunpack.c.l.s8.bf16 %v3821
          %v4326 = vunpack.c.l.s8.bf16 %v3822
          %v4327 = vunpack.c.l.s8.bf16 %v3823
          %v4328 = vunpack.c.h.s8.bf16 %v3820
          %v4329 = vunpack.c.h.s8.bf16 %v3821
          %v4330 = vunpack.c.h.s8.bf16 %v3822
          %v4331 = vunpack.c.h.s8.bf16 %v3823
          %v4332 = vunpack.c.l.s8.bf16 %v3824
          %v4333 = vunpack.c.l.s8.bf16 %v3825
          %v4334 = vunpack.c.l.s8.bf16 %v3826
          %v4335 = vunpack.c.l.s8.bf16 %v3827
          %v4336 = vunpack.c.h.s8.bf16 %v3824
          %v4337 = vunpack.c.h.s8.bf16 %v3825
          %v4338 = vunpack.c.h.s8.bf16 %v3826
          %v4339 = vunpack.c.h.s8.bf16 %v3827
          %4340 = vmatprep.subr.bf16.mxu0 %v3857
          %4341 = vmatpush1.bf16.msra.mxu0 %v3856
          %4342 = vmatprep.subr.bf16.mxu0 %v3853
          %4343 = vmatpush1.bf16.msra.mxu0 %v3852
          %4344 = vmatprep.subr.bf16.mxu0 %v3849
          %4345 = vmatpush1.bf16.msra.mxu0 %v3848
          %4346 = vmatprep.subr.bf16.mxu0 %v3845
          %4347 = vmatpush1.bf16.msra.mxu0 %v3844
          %4348 = vmatprep.subr.bf16.mxu0 %v3841
          %4349 = vmatpush1.bf16.msra.mxu0 %v3840
          %4350 = vmatprep.subr.bf16.mxu0 %v3837
          %4351 = vmatpush1.bf16.msra.mxu0 %v3836
          %4352 = vmatprep.subr.bf16.mxu0 %v3833
          %4353 = vmatpush1.bf16.msra.mxu0 %v3832
          %4354 = vmatprep.subr.bf16.mxu0 %v3829
          %4355 = vmatpush1.bf16.msra.mxu0 %v3828
          %4356 = vmatprep.subr.bf16.mxu0 %v3889
          %4357 = vmatpush2.bf16.msra.mxu0 %v3888
          %4358 = vmatprep.subr.bf16.mxu0 %v3885
          %4359 = vmatpush2.bf16.msra.mxu0 %v3884
          %4360 = vmatprep.subr.bf16.mxu0 %v3881
          %4361 = vmatpush2.bf16.msra.mxu0 %v3880
          %4362 = vmatprep.subr.bf16.mxu0 %v3877
          %4363 = vmatpush2.bf16.msra.mxu0 %v3876
          %4364 = vmatprep.subr.bf16.mxu0 %v3873
          %4365 = vmatpush2.bf16.msra.mxu0 %v3872
          %4366 = vmatprep.subr.bf16.mxu0 %v3869
          %4367 = vmatpush2.bf16.msra.mxu0 %v3868
          %4368 = vmatprep.subr.bf16.mxu0 %v3865
          %4369 = vmatpush2.bf16.msra.mxu0 %v3864
          %4370 = vmatprep.subr.bf16.mxu0 %v3861
          %4371 = vmatpush2.bf16.msra.mxu0 %v3860
          %4372 = vmatprep.mubr.bf16.mxu0 %v3557
          %4373 = vmatmul.mubr.bf16.gmra.mxu0 %v3556
          %v4374 = vpop.f32.mrf.mxu0
          %v4375 = vadd.f32 0.0, %v4374
          %v4376 = vpop.f32.mrf.mxu0
          %v4377 = vadd.f32 0.0, %v4376
          %v4378 = vpop.f32.mrf.mxu0
          %v4379 = vpop.f32.mrf.mxu0
          %4380 = vdwg.mxu0
          %4381 = vmatprep.subr.bf16.mxu0 %v3921
          %4382 = vmatpush1.bf16.msra.mxu0 %v3920
          %4383 = vmatprep.subr.bf16.mxu0 %v3917
          %4384 = vmatpush1.bf16.msra.mxu0 %v3916
          %4385 = vmatprep.subr.bf16.mxu0 %v3913
          %4386 = vmatpush1.bf16.msra.mxu0 %v3912
          %4387 = vmatprep.subr.bf16.mxu0 %v3909
          %4388 = vmatpush1.bf16.msra.mxu0 %v3908
          %4389 = vmatprep.subr.bf16.mxu0 %v3905
          %4390 = vmatpush1.bf16.msra.mxu0 %v3904
          %4391 = vmatprep.subr.bf16.mxu0 %v3901
          %4392 = vmatpush1.bf16.msra.mxu0 %v3900
          %4393 = vmatprep.subr.bf16.mxu0 %v3897
          %4394 = vmatpush1.bf16.msra.mxu0 %v3896
          %4395 = vmatprep.subr.bf16.mxu0 %v3893
          %4396 = vmatpush1.bf16.msra.mxu0 %v3892
          %4397 = vmatprep.subr.bf16.mxu0 %v3953
          %4398 = vmatpush2.bf16.msra.mxu0 %v3952
          %4399 = vmatprep.subr.bf16.mxu0 %v3949
          %4400 = vmatpush2.bf16.msra.mxu0 %v3948
          %4401 = vmatprep.subr.bf16.mxu0 %v3945
          %4402 = vmatpush2.bf16.msra.mxu0 %v3944
          %4403 = vmatprep.subr.bf16.mxu0 %v3941
          %4404 = vmatpush2.bf16.msra.mxu0 %v3940
          %4405 = vmatprep.subr.bf16.mxu0 %v3937
          %4406 = vmatpush2.bf16.msra.mxu0 %v3936
          %4407 = vmatprep.subr.bf16.mxu0 %v3933
          %4408 = vmatpush2.bf16.msra.mxu0 %v3932
          %4409 = vmatprep.subr.bf16.mxu0 %v3929
          %4410 = vmatpush2.bf16.msra.mxu0 %v3928
          %4411 = vmatprep.subr.bf16.mxu0 %v3925
          %4412 = vmatpush2.bf16.msra.mxu0 %v3924
          %4413 = vmatprep.mubr.bf16.mxu0 %v3559
          %4414 = vmatmul.mubr.bf16.gmra.mxu0 %v3558
          %v4415 = vpop.f32.mrf.mxu0
          %v4416 = vadd.f32 %v4375, %v4415
          %v4417 = vpop.f32.mrf.mxu0
          %v4418 = vadd.f32 %v4377, %v4417
          %v4419 = vpop.f32.mrf.mxu0
          %v4420 = vpop.f32.mrf.mxu0
          %4421 = vdwg.mxu0
          %4422 = vmatprep.subr.bf16.mxu0 %v3985
          %4423 = vmatpush1.bf16.msra.mxu0 %v3984
          %4424 = vmatprep.subr.bf16.mxu0 %v3981
          %4425 = vmatpush1.bf16.msra.mxu0 %v3980
          %4426 = vmatprep.subr.bf16.mxu0 %v3977
          %4427 = vmatpush1.bf16.msra.mxu0 %v3976
          %4428 = vmatprep.subr.bf16.mxu0 %v3973
          %4429 = vmatpush1.bf16.msra.mxu0 %v3972
          %4430 = vmatprep.subr.bf16.mxu0 %v3969
          %4431 = vmatpush1.bf16.msra.mxu0 %v3968
          %4432 = vmatprep.subr.bf16.mxu0 %v3965
          %4433 = vmatpush1.bf16.msra.mxu0 %v3964
          %4434 = vmatprep.subr.bf16.mxu0 %v3961
          %4435 = vmatpush1.bf16.msra.mxu0 %v3960
          %4436 = vmatprep.subr.bf16.mxu0 %v3957
          %4437 = vmatpush1.bf16.msra.mxu0 %v3956
          %4438 = vmatprep.subr.bf16.mxu0 %v4017
          %4439 = vmatpush2.bf16.msra.mxu0 %v4016
          %4440 = vmatprep.subr.bf16.mxu0 %v4013
          %4441 = vmatpush2.bf16.msra.mxu0 %v4012
          %4442 = vmatprep.subr.bf16.mxu0 %v4009
          %4443 = vmatpush2.bf16.msra.mxu0 %v4008
          %4444 = vmatprep.subr.bf16.mxu0 %v4005
          %4445 = vmatpush2.bf16.msra.mxu0 %v4004
          %4446 = vmatprep.subr.bf16.mxu0 %v4001
          %4447 = vmatpush2.bf16.msra.mxu0 %v4000
          %4448 = vmatprep.subr.bf16.mxu0 %v3997
          %4449 = vmatpush2.bf16.msra.mxu0 %v3996
          %4450 = vmatprep.subr.bf16.mxu0 %v3993
          %4451 = vmatpush2.bf16.msra.mxu0 %v3992
          %4452 = vmatprep.subr.bf16.mxu0 %v3989
          %4453 = vmatpush2.bf16.msra.mxu0 %v3988
          %4454 = vmatprep.mubr.bf16.mxu0 %v3561
          %4455 = vmatmul.mubr.bf16.gmra.mxu0 %v3560
          %v4456 = vpop.f32.mrf.mxu0
          %v4457 = vadd.f32 %v4416, %v4456
          %v4458 = vpop.f32.mrf.mxu0
          %v4459 = vadd.f32 %v4418, %v4458
          %v4460 = vpop.f32.mrf.mxu0
          %v4461 = vpop.f32.mrf.mxu0
          %4462 = vdwg.mxu0
          %4463 = vmatprep.subr.bf16.mxu0 %v4049
          %4464 = vmatpush1.bf16.msra.mxu0 %v4048
          %4465 = vmatprep.subr.bf16.mxu0 %v4045
          %4466 = vmatpush1.bf16.msra.mxu0 %v4044
          %4467 = vmatprep.subr.bf16.mxu0 %v4041
          %4468 = vmatpush1.bf16.msra.mxu0 %v4040
          %4469 = vmatprep.subr.bf16.mxu0 %v4037
          %4470 = vmatpush1.bf16.msra.mxu0 %v4036
          %4471 = vmatprep.subr.bf16.mxu0 %v4033
          %4472 = vmatpush1.bf16.msra.mxu0 %v4032
          %4473 = vmatprep.subr.bf16.mxu0 %v4029
          %4474 = vmatpush1.bf16.msra.mxu0 %v4028
          %4475 = vmatprep.subr.bf16.mxu0 %v4025
          %4476 = vmatpush1.bf16.msra.mxu0 %v4024
          %4477 = vmatprep.subr.bf16.mxu0 %v4021
          %4478 = vmatpush1.bf16.msra.mxu0 %v4020
          %4479 = vmatprep.subr.bf16.mxu0 %v4081
          %4480 = vmatpush2.bf16.msra.mxu0 %v4080
          %4481 = vmatprep.subr.bf16.mxu0 %v4077
          %4482 = vmatpush2.bf16.msra.mxu0 %v4076
          %4483 = vmatprep.subr.bf16.mxu0 %v4073
          %4484 = vmatpush2.bf16.msra.mxu0 %v4072
          %4485 = vmatprep.subr.bf16.mxu0 %v4069
          %4486 = vmatpush2.bf16.msra.mxu0 %v4068
          %4487 = vmatprep.subr.bf16.mxu0 %v4065
          %4488 = vmatpush2.bf16.msra.mxu0 %v4064
          %4489 = vmatprep.subr.bf16.mxu0 %v4061
          %4490 = vmatpush2.bf16.msra.mxu0 %v4060
          %4491 = vmatprep.subr.bf16.mxu0 %v4057
          %4492 = vmatpush2.bf16.msra.mxu0 %v4056
          %4493 = vmatprep.subr.bf16.mxu0 %v4053
          %4494 = vmatpush2.bf16.msra.mxu0 %v4052
          %4495 = vmatprep.mubr.bf16.mxu0 %v3563
          %4496 = vmatmul.mubr.bf16.gmra.mxu0 %v3562
          %v4497 = vpop.f32.mrf.mxu0
          %v4498 = vadd.f32 %v4457, %v4497
          %v4499 = vpop.f32.mrf.mxu0
          %v4500 = vadd.f32 %v4459, %v4499
          %v4501 = vpop.f32.mrf.mxu0
          %v4502 = vpop.f32.mrf.mxu0
          %4503 = vdwg.mxu0
          %4504 = vmatprep.subr.bf16.mxu0 %v4113
          %4505 = vmatpush1.bf16.msra.mxu0 %v4112
          %4506 = vmatprep.subr.bf16.mxu0 %v4109
          %4507 = vmatpush1.bf16.msra.mxu0 %v4108
          %4508 = vmatprep.subr.bf16.mxu0 %v4105
          %4509 = vmatpush1.bf16.msra.mxu0 %v4104
          %4510 = vmatprep.subr.bf16.mxu0 %v4101
          %4511 = vmatpush1.bf16.msra.mxu0 %v4100
          %4512 = vmatprep.subr.bf16.mxu0 %v4097
          %4513 = vmatpush1.bf16.msra.mxu0 %v4096
          %4514 = vmatprep.subr.bf16.mxu0 %v4093
          %4515 = vmatpush1.bf16.msra.mxu0 %v4092
          %4516 = vmatprep.subr.bf16.mxu0 %v4089
          %4517 = vmatpush1.bf16.msra.mxu0 %v4088
          %4518 = vmatprep.subr.bf16.mxu0 %v4085
          %4519 = vmatpush1.bf16.msra.mxu0 %v4084
          %4520 = vmatprep.subr.bf16.mxu0 %v4145
          %4521 = vmatpush2.bf16.msra.mxu0 %v4144
          %4522 = vmatprep.subr.bf16.mxu0 %v4141
          %4523 = vmatpush2.bf16.msra.mxu0 %v4140
          %4524 = vmatprep.subr.bf16.mxu0 %v4137
          %4525 = vmatpush2.bf16.msra.mxu0 %v4136
          %4526 = vmatprep.subr.bf16.mxu0 %v4133
          %4527 = vmatpush2.bf16.msra.mxu0 %v4132
          %4528 = vmatprep.subr.bf16.mxu0 %v4129
          %4529 = vmatpush2.bf16.msra.mxu0 %v4128
          %4530 = vmatprep.subr.bf16.mxu0 %v4125
          %4531 = vmatpush2.bf16.msra.mxu0 %v4124
          %4532 = vmatprep.subr.bf16.mxu0 %v4121
          %4533 = vmatpush2.bf16.msra.mxu0 %v4120
          %4534 = vmatprep.subr.bf16.mxu0 %v4117
          %4535 = vmatpush2.bf16.msra.mxu0 %v4116
          %4536 = vmatprep.mubr.bf16.mxu0 %v3565
          %4537 = vmatmul.mubr.bf16.gmra.mxu0 %v3564
          %v4538 = vpop.f32.mrf.mxu0
          %v4539 = vadd.f32 %v4498, %v4538
          %v4540 = vpop.f32.mrf.mxu0
          %v4541 = vadd.f32 %v4500, %v4540
          %v4542 = vpop.f32.mrf.mxu0
          %v4543 = vpop.f32.mrf.mxu0
          %4544 = vdwg.mxu0
          %4545 = vmatprep.subr.bf16.mxu0 %v4177
          %4546 = vmatpush1.bf16.msra.mxu0 %v4176
          %4547 = vmatprep.subr.bf16.mxu0 %v4173
          %4548 = vmatpush1.bf16.msra.mxu0 %v4172
          %4549 = vmatprep.subr.bf16.mxu0 %v4169
          %4550 = vmatpush1.bf16.msra.mxu0 %v4168
          %4551 = vmatprep.subr.bf16.mxu0 %v4165
          %4552 = vmatpush1.bf16.msra.mxu0 %v4164
          %4553 = vmatprep.subr.bf16.mxu0 %v4161
          %4554 = vmatpush1.bf16.msra.mxu0 %v4160
          %4555 = vmatprep.subr.bf16.mxu0 %v4157
          %4556 = vmatpush1.bf16.msra.mxu0 %v4156
          %4557 = vmatprep.subr.bf16.mxu0 %v4153
          %4558 = vmatpush1.bf16.msra.mxu0 %v4152
          %4559 = vmatprep.subr.bf16.mxu0 %v4149
          %4560 = vmatpush1.bf16.msra.mxu0 %v4148
          %4561 = vmatprep.subr.bf16.mxu0 %v4209
          %4562 = vmatpush2.bf16.msra.mxu0 %v4208
          %4563 = vmatprep.subr.bf16.mxu0 %v4205
          %4564 = vmatpush2.bf16.msra.mxu0 %v4204
          %4565 = vmatprep.subr.bf16.mxu0 %v4201
          %4566 = vmatpush2.bf16.msra.mxu0 %v4200
          %4567 = vmatprep.subr.bf16.mxu0 %v4197
          %4568 = vmatpush2.bf16.msra.mxu0 %v4196
          %4569 = vmatprep.subr.bf16.mxu0 %v4193
          %4570 = vmatpush2.bf16.msra.mxu0 %v4192
          %4571 = vmatprep.subr.bf16.mxu0 %v4189
          %4572 = vmatpush2.bf16.msra.mxu0 %v4188
          %4573 = vmatprep.subr.bf16.mxu0 %v4185
          %4574 = vmatpush2.bf16.msra.mxu0 %v4184
          %4575 = vmatprep.subr.bf16.mxu0 %v4181
          %4576 = vmatpush2.bf16.msra.mxu0 %v4180
          %4577 = vmatprep.mubr.bf16.mxu0 %v3567
          %4578 = vmatmul.mubr.bf16.gmra.mxu0 %v3566
          %v4579 = vpop.f32.mrf.mxu0
          %v4580 = vadd.f32 %v4539, %v4579
          %v4581 = vpop.f32.mrf.mxu0
          %v4582 = vadd.f32 %v4541, %v4581
          %v4583 = vpop.f32.mrf.mxu0
          %v4584 = vpop.f32.mrf.mxu0
          %4585 = vdwg.mxu0
          %4586 = vmatprep.subr.bf16.mxu0 %v4241
          %4587 = vmatpush1.bf16.msra.mxu0 %v4240
          %4588 = vmatprep.subr.bf16.mxu0 %v4237
          %4589 = vmatpush1.bf16.msra.mxu0 %v4236
          %4590 = vmatprep.subr.bf16.mxu0 %v4233
          %4591 = vmatpush1.bf16.msra.mxu0 %v4232
          %4592 = vmatprep.subr.bf16.mxu0 %v4229
          %4593 = vmatpush1.bf16.msra.mxu0 %v4228
          %4594 = vmatprep.subr.bf16.mxu0 %v4225
          %4595 = vmatpush1.bf16.msra.mxu0 %v4224
          %4596 = vmatprep.subr.bf16.mxu0 %v4221
          %4597 = vmatpush1.bf16.msra.mxu0 %v4220
          %4598 = vmatprep.subr.bf16.mxu0 %v4217
          %4599 = vmatpush1.bf16.msra.mxu0 %v4216
          %4600 = vmatprep.subr.bf16.mxu0 %v4213
          %4601 = vmatpush1.bf16.msra.mxu0 %v4212
          %4602 = vmatprep.subr.bf16.mxu0 %v4273
          %4603 = vmatpush2.bf16.msra.mxu0 %v4272
          %4604 = vmatprep.subr.bf16.mxu0 %v4269
          %4605 = vmatpush2.bf16.msra.mxu0 %v4268
          %4606 = vmatprep.subr.bf16.mxu0 %v4265
          %4607 = vmatpush2.bf16.msra.mxu0 %v4264
          %4608 = vmatprep.subr.bf16.mxu0 %v4261
          %4609 = vmatpush2.bf16.msra.mxu0 %v4260
          %4610 = vmatprep.subr.bf16.mxu0 %v4257
          %4611 = vmatpush2.bf16.msra.mxu0 %v4256
          %4612 = vmatprep.subr.bf16.mxu0 %v4253
          %4613 = vmatpush2.bf16.msra.mxu0 %v4252
          %4614 = vmatprep.subr.bf16.mxu0 %v4249
          %4615 = vmatpush2.bf16.msra.mxu0 %v4248
          %4616 = vmatprep.subr.bf16.mxu0 %v4245
          %4617 = vmatpush2.bf16.msra.mxu0 %v4244
          %4618 = vmatprep.mubr.bf16.mxu0 %v3569
          %4619 = vmatmul.mubr.bf16.gmra.mxu0 %v3568
          %v4620 = vpop.f32.mrf.mxu0
          %v4621 = vadd.f32 %v4580, %v4620
          %v4622 = vpop.f32.mrf.mxu0
          %v4623 = vadd.f32 %v4582, %v4622
          %v4624 = vpop.f32.mrf.mxu0
          %v4625 = vpop.f32.mrf.mxu0
          %4626 = vdwg.mxu0
          %4627 = vmatprep.subr.bf16.mxu0 %v4305
          %4628 = vmatpush1.bf16.msra.mxu0 %v4304
          %4629 = vmatprep.subr.bf16.mxu0 %v4301
          %4630 = vmatpush1.bf16.msra.mxu0 %v4300
          %4631 = vmatprep.subr.bf16.mxu0 %v4297
          %4632 = vmatpush1.bf16.msra.mxu0 %v4296
          %4633 = vmatprep.subr.bf16.mxu0 %v4293
          %4634 = vmatpush1.bf16.msra.mxu0 %v4292
          %4635 = vmatprep.subr.bf16.mxu0 %v4289
          %4636 = vmatpush1.bf16.msra.mxu0 %v4288
          %4637 = vmatprep.subr.bf16.mxu0 %v4285
          %4638 = vmatpush1.bf16.msra.mxu0 %v4284
          %4639 = vmatprep.subr.bf16.mxu0 %v4281
          %4640 = vmatpush1.bf16.msra.mxu0 %v4280
          %4641 = vmatprep.subr.bf16.mxu0 %v4277
          %4642 = vmatpush1.bf16.msra.mxu0 %v4276
          %4643 = vmatprep.subr.bf16.mxu0 %v4337
          %4644 = vmatpush2.bf16.msra.mxu0 %v4336
          %4645 = vmatprep.subr.bf16.mxu0 %v4333
          %4646 = vmatpush2.bf16.msra.mxu0 %v4332
          %4647 = vmatprep.subr.bf16.mxu0 %v4329
          %4648 = vmatpush2.bf16.msra.mxu0 %v4328
          %4649 = vmatprep.subr.bf16.mxu0 %v4325
          %4650 = vmatpush2.bf16.msra.mxu0 %v4324
          %4651 = vmatprep.subr.bf16.mxu0 %v4321
          %4652 = vmatpush2.bf16.msra.mxu0 %v4320
          %4653 = vmatprep.subr.bf16.mxu0 %v4317
          %4654 = vmatpush2.bf16.msra.mxu0 %v4316
          %4655 = vmatprep.subr.bf16.mxu0 %v4313
          %4656 = vmatpush2.bf16.msra.mxu0 %v4312
          %4657 = vmatprep.subr.bf16.mxu0 %v4309
          %4658 = vmatpush2.bf16.msra.mxu0 %v4308
          %4659 = vmatprep.mubr.bf16.mxu0 %v3571
          %4660 = vmatmul.mubr.bf16.gmra.mxu0 %v3570
          %v4661 = vpop.f32.mrf.mxu0
          %v4662 = vadd.f32 %v4621, %v4661
          %v4663 = vpop.f32.mrf.mxu0
          %v4664 = vadd.f32 %v4623, %v4663
          %v4665 = vpop.f32.mrf.mxu0
          %v4666 = vpop.f32.mrf.mxu0
          %4667 = vdwg.mxu0
          %4668 = vmatprep.subr.bf16.mxu0 %v3859
          %4669 = vmatpush1.bf16.msra.mxu0 %v3858
          %4670 = vmatprep.subr.bf16.mxu0 %v3855
          %4671 = vmatpush1.bf16.msra.mxu0 %v3854
          %4672 = vmatprep.subr.bf16.mxu0 %v3851
          %4673 = vmatpush1.bf16.msra.mxu0 %v3850
          %4674 = vmatprep.subr.bf16.mxu0 %v3847
          %4675 = vmatpush1.bf16.msra.mxu0 %v3846
          %4676 = vmatprep.subr.bf16.mxu0 %v3843
          %4677 = vmatpush1.bf16.msra.mxu0 %v3842
          %4678 = vmatprep.subr.bf16.mxu0 %v3839
          %4679 = vmatpush1.bf16.msra.mxu0 %v3838
          %4680 = vmatprep.subr.bf16.mxu0 %v3835
          %4681 = vmatpush1.bf16.msra.mxu0 %v3834
          %4682 = vmatprep.subr.bf16.mxu0 %v3831
          %4683 = vmatpush1.bf16.msra.mxu0 %v3830
          %4684 = vmatprep.subr.bf16.mxu0 %v3891
          %4685 = vmatpush2.bf16.msra.mxu0 %v3890
          %4686 = vmatprep.subr.bf16.mxu0 %v3887
          %4687 = vmatpush2.bf16.msra.mxu0 %v3886
          %4688 = vmatprep.subr.bf16.mxu0 %v3883
          %4689 = vmatpush2.bf16.msra.mxu0 %v3882
          %4690 = vmatprep.subr.bf16.mxu0 %v3879
          %4691 = vmatpush2.bf16.msra.mxu0 %v3878
          %4692 = vmatprep.subr.bf16.mxu0 %v3875
          %4693 = vmatpush2.bf16.msra.mxu0 %v3874
          %4694 = vmatprep.subr.bf16.mxu0 %v3871
          %4695 = vmatpush2.bf16.msra.mxu0 %v3870
          %4696 = vmatprep.subr.bf16.mxu0 %v3867
          %4697 = vmatpush2.bf16.msra.mxu0 %v3866
          %4698 = vmatprep.subr.bf16.mxu0 %v3863
          %4699 = vmatpush2.bf16.msra.mxu0 %v3862
          %4700 = vmatprep.mubr.bf16.mxu0 %v3557
          %4701 = vmatmul.mubr.bf16.gmra.mxu0 %v3556
          %v4702 = vpop.f32.mrf.mxu0
          %v4703 = vadd.f32 0.0, %v4702
          %v4704 = vpop.f32.mrf.mxu0
          %v4705 = vadd.f32 0.0, %v4704
          %v4706 = vpop.f32.mrf.mxu0
          %v4707 = vpop.f32.mrf.mxu0
          %4708 = vdwg.mxu0
          %4709 = vmatprep.subr.bf16.mxu0 %v3923
          %4710 = vmatpush1.bf16.msra.mxu0 %v3922
          %4711 = vmatprep.subr.bf16.mxu0 %v3919
          %4712 = vmatpush1.bf16.msra.mxu0 %v3918
          %4713 = vmatprep.subr.bf16.mxu0 %v3915
          %4714 = vmatpush1.bf16.msra.mxu0 %v3914
          %4715 = vmatprep.subr.bf16.mxu0 %v3911
          %4716 = vmatpush1.bf16.msra.mxu0 %v3910
          %4717 = vmatprep.subr.bf16.mxu0 %v3907
          %4718 = vmatpush1.bf16.msra.mxu0 %v3906
          %4719 = vmatprep.subr.bf16.mxu0 %v3903
          %4720 = vmatpush1.bf16.msra.mxu0 %v3902
          %4721 = vmatprep.subr.bf16.mxu0 %v3899
          %4722 = vmatpush1.bf16.msra.mxu0 %v3898
          %4723 = vmatprep.subr.bf16.mxu0 %v3895
          %4724 = vmatpush1.bf16.msra.mxu0 %v3894
          %4725 = vmatprep.subr.bf16.mxu0 %v3955
          %4726 = vmatpush2.bf16.msra.mxu0 %v3954
          %4727 = vmatprep.subr.bf16.mxu0 %v3951
          %4728 = vmatpush2.bf16.msra.mxu0 %v3950
          %4729 = vmatprep.subr.bf16.mxu0 %v3947
          %4730 = vmatpush2.bf16.msra.mxu0 %v3946
          %4731 = vmatprep.subr.bf16.mxu0 %v3943
          %4732 = vmatpush2.bf16.msra.mxu0 %v3942
          %4733 = vmatprep.subr.bf16.mxu0 %v3939
          %4734 = vmatpush2.bf16.msra.mxu0 %v3938
          %4735 = vmatprep.subr.bf16.mxu0 %v3935
          %4736 = vmatpush2.bf16.msra.mxu0 %v3934
          %4737 = vmatprep.subr.bf16.mxu0 %v3931
          %4738 = vmatpush2.bf16.msra.mxu0 %v3930
          %4739 = vmatprep.subr.bf16.mxu0 %v3927
          %4740 = vmatpush2.bf16.msra.mxu0 %v3926
          %4741 = vmatprep.mubr.bf16.mxu0 %v3559
          %4742 = vmatmul.mubr.bf16.gmra.mxu0 %v3558
          %v4743 = vpop.f32.mrf.mxu0
          %v4744 = vadd.f32 %v4703, %v4743
          %v4745 = vpop.f32.mrf.mxu0
          %v4746 = vadd.f32 %v4705, %v4745
          %v4747 = vpop.f32.mrf.mxu0
          %v4748 = vpop.f32.mrf.mxu0
          %4749 = vdwg.mxu0
          %4750 = vmatprep.subr.bf16.mxu0 %v3987
          %4751 = vmatpush1.bf16.msra.mxu0 %v3986
          %4752 = vmatprep.subr.bf16.mxu0 %v3983
          %4753 = vmatpush1.bf16.msra.mxu0 %v3982
          %4754 = vmatprep.subr.bf16.mxu0 %v3979
          %4755 = vmatpush1.bf16.msra.mxu0 %v3978
          %4756 = vmatprep.subr.bf16.mxu0 %v3975
          %4757 = vmatpush1.bf16.msra.mxu0 %v3974
          %4758 = vmatprep.subr.bf16.mxu0 %v3971
          %4759 = vmatpush1.bf16.msra.mxu0 %v3970
          %4760 = vmatprep.subr.bf16.mxu0 %v3967
          %4761 = vmatpush1.bf16.msra.mxu0 %v3966
          %4762 = vmatprep.subr.bf16.mxu0 %v3963
          %4763 = vmatpush1.bf16.msra.mxu0 %v3962
          %4764 = vmatprep.subr.bf16.mxu0 %v3959
          %4765 = vmatpush1.bf16.msra.mxu0 %v3958
          %4766 = vmatprep.subr.bf16.mxu0 %v4019
          %4767 = vmatpush2.bf16.msra.mxu0 %v4018
          %4768 = vmatprep.subr.bf16.mxu0 %v4015
          %4769 = vmatpush2.bf16.msra.mxu0 %v4014
          %4770 = vmatprep.subr.bf16.mxu0 %v4011
          %4771 = vmatpush2.bf16.msra.mxu0 %v4010
          %4772 = vmatprep.subr.bf16.mxu0 %v4007
          %4773 = vmatpush2.bf16.msra.mxu0 %v4006
          %4774 = vmatprep.subr.bf16.mxu0 %v4003
          %4775 = vmatpush2.bf16.msra.mxu0 %v4002
          %4776 = vmatprep.subr.bf16.mxu0 %v3999
          %4777 = vmatpush2.bf16.msra.mxu0 %v3998
          %4778 = vmatprep.subr.bf16.mxu0 %v3995
          %4779 = vmatpush2.bf16.msra.mxu0 %v3994
          %4780 = vmatprep.subr.bf16.mxu0 %v3991
          %4781 = vmatpush2.bf16.msra.mxu0 %v3990
          %4782 = vmatprep.mubr.bf16.mxu0 %v3561
          %4783 = vmatmul.mubr.bf16.gmra.mxu0 %v3560
          %v4784 = vpop.f32.mrf.mxu0
          %v4785 = vadd.f32 %v4744, %v4784
          %v4786 = vpop.f32.mrf.mxu0
          %v4787 = vadd.f32 %v4746, %v4786
          %v4788 = vpop.f32.mrf.mxu0
          %v4789 = vpop.f32.mrf.mxu0
          %4790 = vdwg.mxu0
          %4791 = vmatprep.subr.bf16.mxu0 %v4051
          %4792 = vmatpush1.bf16.msra.mxu0 %v4050
          %4793 = vmatprep.subr.bf16.mxu0 %v4047
          %4794 = vmatpush1.bf16.msra.mxu0 %v4046
          %4795 = vmatprep.subr.bf16.mxu0 %v4043
          %4796 = vmatpush1.bf16.msra.mxu0 %v4042
          %4797 = vmatprep.subr.bf16.mxu0 %v4039
          %4798 = vmatpush1.bf16.msra.mxu0 %v4038
          %4799 = vmatprep.subr.bf16.mxu0 %v4035
          %4800 = vmatpush1.bf16.msra.mxu0 %v4034
          %4801 = vmatprep.subr.bf16.mxu0 %v4031
          %4802 = vmatpush1.bf16.msra.mxu0 %v4030
          %4803 = vmatprep.subr.bf16.mxu0 %v4027
          %4804 = vmatpush1.bf16.msra.mxu0 %v4026
          %4805 = vmatprep.subr.bf16.mxu0 %v4023
          %4806 = vmatpush1.bf16.msra.mxu0 %v4022
          %4807 = vmatprep.subr.bf16.mxu0 %v4083
          %4808 = vmatpush2.bf16.msra.mxu0 %v4082
          %4809 = vmatprep.subr.bf16.mxu0 %v4079
          %4810 = vmatpush2.bf16.msra.mxu0 %v4078
          %4811 = vmatprep.subr.bf16.mxu0 %v4075
          %4812 = vmatpush2.bf16.msra.mxu0 %v4074
          %4813 = vmatprep.subr.bf16.mxu0 %v4071
          %4814 = vmatpush2.bf16.msra.mxu0 %v4070
          %4815 = vmatprep.subr.bf16.mxu0 %v4067
          %4816 = vmatpush2.bf16.msra.mxu0 %v4066
          %4817 = vmatprep.subr.bf16.mxu0 %v4063
          %4818 = vmatpush2.bf16.msra.mxu0 %v4062
          %4819 = vmatprep.subr.bf16.mxu0 %v4059
          %4820 = vmatpush2.bf16.msra.mxu0 %v4058
          %4821 = vmatprep.subr.bf16.mxu0 %v4055
          %4822 = vmatpush2.bf16.msra.mxu0 %v4054
          %4823 = vmatprep.mubr.bf16.mxu0 %v3563
          %4824 = vmatmul.mubr.bf16.gmra.mxu0 %v3562
          %v4825 = vpop.f32.mrf.mxu0
          %v4826 = vadd.f32 %v4785, %v4825
          %v4827 = vpop.f32.mrf.mxu0
          %v4828 = vadd.f32 %v4787, %v4827
          %v4829 = vpop.f32.mrf.mxu0
          %v4830 = vpop.f32.mrf.mxu0
          %4831 = vdwg.mxu0
          %4832 = vmatprep.subr.bf16.mxu0 %v4115
          %4833 = vmatpush1.bf16.msra.mxu0 %v4114
          %4834 = vmatprep.subr.bf16.mxu0 %v4111
          %4835 = vmatpush1.bf16.msra.mxu0 %v4110
          %4836 = vmatprep.subr.bf16.mxu0 %v4107
          %4837 = vmatpush1.bf16.msra.mxu0 %v4106
          %4838 = vmatprep.subr.bf16.mxu0 %v4103
          %4839 = vmatpush1.bf16.msra.mxu0 %v4102
          %4840 = vmatprep.subr.bf16.mxu0 %v4099
          %4841 = vmatpush1.bf16.msra.mxu0 %v4098
          %4842 = vmatprep.subr.bf16.mxu0 %v4095
          %4843 = vmatpush1.bf16.msra.mxu0 %v4094
          %4844 = vmatprep.subr.bf16.mxu0 %v4091
          %4845 = vmatpush1.bf16.msra.mxu0 %v4090
          %4846 = vmatprep.subr.bf16.mxu0 %v4087
          %4847 = vmatpush1.bf16.msra.mxu0 %v4086
          %4848 = vmatprep.subr.bf16.mxu0 %v4147
          %4849 = vmatpush2.bf16.msra.mxu0 %v4146
          %4850 = vmatprep.subr.bf16.mxu0 %v4143
          %4851 = vmatpush2.bf16.msra.mxu0 %v4142
          %4852 = vmatprep.subr.bf16.mxu0 %v4139
          %4853 = vmatpush2.bf16.msra.mxu0 %v4138
          %4854 = vmatprep.subr.bf16.mxu0 %v4135
          %4855 = vmatpush2.bf16.msra.mxu0 %v4134
          %4856 = vmatprep.subr.bf16.mxu0 %v4131
          %4857 = vmatpush2.bf16.msra.mxu0 %v4130
          %4858 = vmatprep.subr.bf16.mxu0 %v4127
          %4859 = vmatpush2.bf16.msra.mxu0 %v4126
          %4860 = vmatprep.subr.bf16.mxu0 %v4123
          %4861 = vmatpush2.bf16.msra.mxu0 %v4122
          %4862 = vmatprep.subr.bf16.mxu0 %v4119
          %4863 = vmatpush2.bf16.msra.mxu0 %v4118
          %4864 = vmatprep.mubr.bf16.mxu0 %v3565
          %4865 = vmatmul.mubr.bf16.gmra.mxu0 %v3564
          %v4866 = vpop.f32.mrf.mxu0
          %v4867 = vadd.f32 %v4826, %v4866
          %v4868 = vpop.f32.mrf.mxu0
          %v4869 = vadd.f32 %v4828, %v4868
          %v4870 = vpop.f32.mrf.mxu0
          %v4871 = vpop.f32.mrf.mxu0
          %4872 = vdwg.mxu0
          %4873 = vmatprep.subr.bf16.mxu0 %v4179
          %4874 = vmatpush1.bf16.msra.mxu0 %v4178
          %4875 = vmatprep.subr.bf16.mxu0 %v4175
          %4876 = vmatpush1.bf16.msra.mxu0 %v4174
          %4877 = vmatprep.subr.bf16.mxu0 %v4171
          %4878 = vmatpush1.bf16.msra.mxu0 %v4170
          %4879 = vmatprep.subr.bf16.mxu0 %v4167
          %4880 = vmatpush1.bf16.msra.mxu0 %v4166
          %4881 = vmatprep.subr.bf16.mxu0 %v4163
          %4882 = vmatpush1.bf16.msra.mxu0 %v4162
          %4883 = vmatprep.subr.bf16.mxu0 %v4159
          %4884 = vmatpush1.bf16.msra.mxu0 %v4158
          %4885 = vmatprep.subr.bf16.mxu0 %v4155
          %4886 = vmatpush1.bf16.msra.mxu0 %v4154
          %4887 = vmatprep.subr.bf16.mxu0 %v4151
          %4888 = vmatpush1.bf16.msra.mxu0 %v4150
          %4889 = vmatprep.subr.bf16.mxu0 %v4211
          %4890 = vmatpush2.bf16.msra.mxu0 %v4210
          %4891 = vmatprep.subr.bf16.mxu0 %v4207
          %4892 = vmatpush2.bf16.msra.mxu0 %v4206
          %4893 = vmatprep.subr.bf16.mxu0 %v4203
          %4894 = vmatpush2.bf16.msra.mxu0 %v4202
          %4895 = vmatprep.subr.bf16.mxu0 %v4199
          %4896 = vmatpush2.bf16.msra.mxu0 %v4198
          %4897 = vmatprep.subr.bf16.mxu0 %v4195
          %4898 = vmatpush2.bf16.msra.mxu0 %v4194
          %4899 = vmatprep.subr.bf16.mxu0 %v4191
          %4900 = vmatpush2.bf16.msra.mxu0 %v4190
          %4901 = vmatprep.subr.bf16.mxu0 %v4187
          %4902 = vmatpush2.bf16.msra.mxu0 %v4186
          %4903 = vmatprep.subr.bf16.mxu0 %v4183
          %4904 = vmatpush2.bf16.msra.mxu0 %v4182
          %4905 = vmatprep.mubr.bf16.mxu0 %v3567
          %4906 = vmatmul.mubr.bf16.gmra.mxu0 %v3566
          %v4907 = vpop.f32.mrf.mxu0
          %v4908 = vadd.f32 %v4867, %v4907
          %v4909 = vpop.f32.mrf.mxu0
          %v4910 = vadd.f32 %v4869, %v4909
          %v4911 = vpop.f32.mrf.mxu0
          %v4912 = vpop.f32.mrf.mxu0
          %4913 = vdwg.mxu0
          %4914 = vmatprep.subr.bf16.mxu0 %v4243
          %4915 = vmatpush1.bf16.msra.mxu0 %v4242
          %4916 = vmatprep.subr.bf16.mxu0 %v4239
          %4917 = vmatpush1.bf16.msra.mxu0 %v4238
          %4918 = vmatprep.subr.bf16.mxu0 %v4235
          %4919 = vmatpush1.bf16.msra.mxu0 %v4234
          %4920 = vmatprep.subr.bf16.mxu0 %v4231
          %4921 = vmatpush1.bf16.msra.mxu0 %v4230
          %4922 = vmatprep.subr.bf16.mxu0 %v4227
          %4923 = vmatpush1.bf16.msra.mxu0 %v4226
          %4924 = vmatprep.subr.bf16.mxu0 %v4223
          %4925 = vmatpush1.bf16.msra.mxu0 %v4222
          %4926 = vmatprep.subr.bf16.mxu0 %v4219
          %4927 = vmatpush1.bf16.msra.mxu0 %v4218
          %4928 = vmatprep.subr.bf16.mxu0 %v4215
          %4929 = vmatpush1.bf16.msra.mxu0 %v4214
          %4930 = vmatprep.subr.bf16.mxu0 %v4275
          %4931 = vmatpush2.bf16.msra.mxu0 %v4274
          %4932 = vmatprep.subr.bf16.mxu0 %v4271
          %4933 = vmatpush2.bf16.msra.mxu0 %v4270
          %4934 = vmatprep.subr.bf16.mxu0 %v4267
          %4935 = vmatpush2.bf16.msra.mxu0 %v4266
          %4936 = vmatprep.subr.bf16.mxu0 %v4263
          %4937 = vmatpush2.bf16.msra.mxu0 %v4262
          %4938 = vmatprep.subr.bf16.mxu0 %v4259
          %4939 = vmatpush2.bf16.msra.mxu0 %v4258
          %4940 = vmatprep.subr.bf16.mxu0 %v4255
          %4941 = vmatpush2.bf16.msra.mxu0 %v4254
          %4942 = vmatprep.subr.bf16.mxu0 %v4251
          %4943 = vmatpush2.bf16.msra.mxu0 %v4250
          %4944 = vmatprep.subr.bf16.mxu0 %v4247
          %4945 = vmatpush2.bf16.msra.mxu0 %v4246
          %4946 = vmatprep.mubr.bf16.mxu0 %v3569
          %4947 = vmatmul.mubr.bf16.gmra.mxu0 %v3568
          %v4948 = vpop.f32.mrf.mxu0
          %v4949 = vadd.f32 %v4908, %v4948
          %v4950 = vpop.f32.mrf.mxu0
          %v4951 = vadd.f32 %v4910, %v4950
          %v4952 = vpop.f32.mrf.mxu0
          %v4953 = vpop.f32.mrf.mxu0
          %4954 = vdwg.mxu0
          %4955 = vmatprep.subr.bf16.mxu0 %v4307
          %4956 = vmatpush1.bf16.msra.mxu0 %v4306
          %4957 = vmatprep.subr.bf16.mxu0 %v4303
          %4958 = vmatpush1.bf16.msra.mxu0 %v4302
          %4959 = vmatprep.subr.bf16.mxu0 %v4299
          %4960 = vmatpush1.bf16.msra.mxu0 %v4298
          %4961 = vmatprep.subr.bf16.mxu0 %v4295
          %4962 = vmatpush1.bf16.msra.mxu0 %v4294
          %4963 = vmatprep.subr.bf16.mxu0 %v4291
          %4964 = vmatpush1.bf16.msra.mxu0 %v4290
          %4965 = vmatprep.subr.bf16.mxu0 %v4287
          %4966 = vmatpush1.bf16.msra.mxu0 %v4286
          %4967 = vmatprep.subr.bf16.mxu0 %v4283
          %4968 = vmatpush1.bf16.msra.mxu0 %v4282
          %4969 = vmatprep.subr.bf16.mxu0 %v4279
          %4970 = vmatpush1.bf16.msra.mxu0 %v4278
          %4971 = vmatprep.subr.bf16.mxu0 %v4339
          %4972 = vmatpush2.bf16.msra.mxu0 %v4338
          %4973 = vmatprep.subr.bf16.mxu0 %v4335
          %4974 = vmatpush2.bf16.msra.mxu0 %v4334
          %4975 = vmatprep.subr.bf16.mxu0 %v4331
          %4976 = vmatpush2.bf16.msra.mxu0 %v4330
          %4977 = vmatprep.subr.bf16.mxu0 %v4327
          %4978 = vmatpush2.bf16.msra.mxu0 %v4326
          %4979 = vmatprep.subr.bf16.mxu0 %v4323
          %4980 = vmatpush2.bf16.msra.mxu0 %v4322
          %4981 = vmatprep.subr.bf16.mxu0 %v4319
          %4982 = vmatpush2.bf16.msra.mxu0 %v4318
          %4983 = vmatprep.subr.bf16.mxu0 %v4315
          %4984 = vmatpush2.bf16.msra.mxu0 %v4314
          %4985 = vmatprep.subr.bf16.mxu0 %v4311
          %4986 = vmatpush2.bf16.msra.mxu0 %v4310
          %4987 = vmatprep.mubr.bf16.mxu0 %v3571
          %4988 = vmatmul.mubr.bf16.gmra.mxu0 %v3570
          %v4989 = vpop.f32.mrf.mxu0
          %v4990 = vadd.f32 %v4949, %v4989
          %v4991 = vpop.f32.mrf.mxu0
          %v4992 = vadd.f32 %v4951, %v4991
          %v4993 = vpop.f32.mrf.mxu0
          %v4994 = vpop.f32.mrf.mxu0
          %4995 = vdwg.mxu0
          %v4996 = vld [vmem:[%s617] sm:$0xf]
          %v4998 = vlaneseq
          %v4999 = vshrl.u32 %v4998, 7
          %v5000 = vsub.s32 0, %v4999
          %v5001 = vrot.slane %v4996, %v5000
          %v5002 = vlaneseq
          %v5003 = vshrl.u32 %v5002, 7
          %v5004 = vsub.s32 1, %v5003
          %v5005 = vrot.slane %v4996, %v5004
          %v5006 = vlaneseq
          %v5007 = vshrl.u32 %v5006, 7
          %v5008 = vsub.s32 2, %v5007
          %v5009 = vrot.slane %v4996, %v5008
          %v5010 = vlaneseq
          %v5011 = vshrl.u32 %v5010, 7
          %v5012 = vsub.s32 3, %v5011
          %v5013 = vrot.slane %v4996, %v5012
          %v5018 = vmul.f32 %v4662, %v5001
          %v5019 = vmul.f32 %v4664, %v5005
          %v5020 = vmul.f32 %v4990, %v5009
          %v5021 = vmul.f32 %v4992, %v5013
          %v5022 = vld [vmem:[%s626] sm:$0xf]
          %v5024 = vlaneseq
          %v5025 = vshrl.u32 %v5024, 7
          %v5026 = vsub.s32 0, %v5025
          %v5027 = vrot.slane %v5022, %v5026
          %v5028 = vlaneseq
          %v5029 = vshrl.u32 %v5028, 7
          %v5030 = vsub.s32 1, %v5029
          %v5031 = vrot.slane %v5022, %v5030
          %v5032 = vlaneseq
          %v5033 = vshrl.u32 %v5032, 7
          %v5034 = vsub.s32 2, %v5033
          %v5035 = vrot.slane %v5022, %v5034
          %v5036 = vlaneseq
          %v5037 = vshrl.u32 %v5036, 7
          %v5038 = vsub.s32 3, %v5037
          %v5039 = vrot.slane %v5022, %v5038
          %v5044 = vadd.f32 %v5018, %v5027
          %v5045 = vadd.f32 %v5019, %v5031
          %v5046 = vadd.f32 %v5020, %v5035
          %v5047 = vadd.f32 %v5021, %v5039
          %v5048 = vpack.c.bf16 %v5044, %v5044
          %v5049 = vpack.c.bf16 %v5045, %v5045
          %v5050 = vpack.c.bf16 %v5046, %v5046
          %v5051 = vpack.c.bf16 %v5047, %v5047
          %v5052 = vld [vmem:[%s635] sm:$0xf]
          %v5053 = vld [vmem:[%s635 + $0x4] sm:$0xf]
          %v5054 = vld [vmem:[%s635 + $0x8] sm:$0xf]
          %v5055 = vld [vmem:[%s635 + $0xc] sm:$0xf]
          %v5056 = vld [vmem:[%s635 + $0x10] sm:$0xf]
          %v5057 = vld [vmem:[%s635 + $0x14] sm:$0xf]
          %v5058 = vld [vmem:[%s635 + $0x18] sm:$0xf]
          %v5059 = vld [vmem:[%s635 + $0x1c] sm:$0xf]
          %v5060 = vld [vmem:[%s635 + $0x20] sm:$0xf]
          %v5061 = vld [vmem:[%s635 + $0x24] sm:$0xf]
          %v5062 = vld [vmem:[%s635 + $0x28] sm:$0xf]
          %v5063 = vld [vmem:[%s635 + $0x2c] sm:$0xf]
          %v5064 = vld [vmem:[%s635 + $0x30] sm:$0xf]
          %v5065 = vld [vmem:[%s635 + $0x34] sm:$0xf]
          %v5066 = vld [vmem:[%s635 + $0x38] sm:$0xf]
          %v5067 = vld [vmem:[%s635 + $0x3c] sm:$0xf]
          %v5068 = vld [vmem:[%s635 + $0x40] sm:$0xf]
          %v5069 = vld [vmem:[%s635 + $0x44] sm:$0xf]
          %v5070 = vld [vmem:[%s635 + $0x48] sm:$0xf]
          %v5071 = vld [vmem:[%s635 + $0x4c] sm:$0xf]
          %v5072 = vld [vmem:[%s635 + $0x50] sm:$0xf]
          %v5073 = vld [vmem:[%s635 + $0x54] sm:$0xf]
          %v5074 = vld [vmem:[%s635 + $0x58] sm:$0xf]
          %v5075 = vld [vmem:[%s635 + $0x5c] sm:$0xf]
          %v5076 = vld [vmem:[%s635 + $0x60] sm:$0xf]
          %v5077 = vld [vmem:[%s635 + $0x64] sm:$0xf]
          %v5078 = vld [vmem:[%s635 + $0x68] sm:$0xf]
          %v5079 = vld [vmem:[%s635 + $0x6c] sm:$0xf]
          %v5080 = vld [vmem:[%s635 + $0x70] sm:$0xf]
          %v5081 = vld [vmem:[%s635 + $0x74] sm:$0xf]
          %v5082 = vld [vmem:[%s635 + $0x78] sm:$0xf]
          %v5083 = vld [vmem:[%s635 + $0x7c] sm:$0xf]
          %v5084 = vld [vmem:[%s635 + $0x80] sm:$0xf]
          %v5085 = vld [vmem:[%s635 + $0x84] sm:$0xf]
          %v5086 = vld [vmem:[%s635 + $0x88] sm:$0xf]
          %v5087 = vld [vmem:[%s635 + $0x8c] sm:$0xf]
          %v5088 = vld [vmem:[%s635 + $0x90] sm:$0xf]
          %v5089 = vld [vmem:[%s635 + $0x94] sm:$0xf]
          %v5090 = vld [vmem:[%s635 + $0x98] sm:$0xf]
          %v5091 = vld [vmem:[%s635 + $0x9c] sm:$0xf]
          %v5092 = vld [vmem:[%s635 + $0xa0] sm:$0xf]
          %v5093 = vld [vmem:[%s635 + $0xa4] sm:$0xf]
          %v5094 = vld [vmem:[%s635 + $0xa8] sm:$0xf]
          %v5095 = vld [vmem:[%s635 + $0xac] sm:$0xf]
          %v5096 = vld [vmem:[%s635 + $0xb0] sm:$0xf]
          %v5097 = vld [vmem:[%s635 + $0xb4] sm:$0xf]
          %v5098 = vld [vmem:[%s635 + $0xb8] sm:$0xf]
          %v5099 = vld [vmem:[%s635 + $0xbc] sm:$0xf]
          %v5100 = vld [vmem:[%s635 + $0xc0] sm:$0xf]
          %v5101 = vld [vmem:[%s635 + $0xc4] sm:$0xf]
          %v5102 = vld [vmem:[%s635 + $0xc8] sm:$0xf]
          %v5103 = vld [vmem:[%s635 + $0xcc] sm:$0xf]
          %v5104 = vld [vmem:[%s635 + $0xd0] sm:$0xf]
          %v5105 = vld [vmem:[%s635 + $0xd4] sm:$0xf]
          %v5106 = vld [vmem:[%s635 + $0xd8] sm:$0xf]
          %v5107 = vld [vmem:[%s635 + $0xdc] sm:$0xf]
          %v5108 = vld [vmem:[%s635 + $0xe0] sm:$0xf]
          %v5109 = vld [vmem:[%s635 + $0xe4] sm:$0xf]
          %v5110 = vld [vmem:[%s635 + $0xe8] sm:$0xf]
          %v5111 = vld [vmem:[%s635 + $0xec] sm:$0xf]
          %v5112 = vld [vmem:[%s635 + $0xf0] sm:$0xf]
          %v5113 = vld [vmem:[%s635 + $0xf4] sm:$0xf]
          %v5114 = vld [vmem:[%s635 + $0xf8] sm:$0xf]
          %v5115 = vld [vmem:[%s635 + $0xfc] sm:$0xf]
          %v5116 = vld [vmem:[%s643] sm:$0x1]
          %v5118 = vlaneseq
          %v5119 = vshrl.u32 %v5118, 7
          %v5120 = vsub.s32 0, %v5119
          %v5121 = vrot.slane %v5116, %v5120
          %v5187 = vunpack.c.l.b16 %v5052
          %v5188 = vunpack.c.l.b16 %v5053
          %v5189 = vunpack.c.l.b16 %v5054
          %v5190 = vunpack.c.l.b16 %v5055
          %v5191 = vunpack.c.l.b16 %v5056
          %v5192 = vunpack.c.l.b16 %v5057
          %v5193 = vunpack.c.l.b16 %v5058
          %v5194 = vunpack.c.l.b16 %v5059
          %v5195 = vunpack.c.l.b16 %v5060
          %v5196 = vunpack.c.l.b16 %v5061
          %v5197 = vunpack.c.l.b16 %v5062
          %v5198 = vunpack.c.l.b16 %v5063
          %v5199 = vunpack.c.l.b16 %v5064
          %v5200 = vunpack.c.l.b16 %v5065
          %v5201 = vunpack.c.l.b16 %v5066
          %v5202 = vunpack.c.l.b16 %v5067
          %v5203 = vunpack.c.l.b16 %v5068
          %v5204 = vunpack.c.l.b16 %v5069
          %v5205 = vunpack.c.l.b16 %v5070
          %v5206 = vunpack.c.l.b16 %v5071
          %v5207 = vunpack.c.l.b16 %v5072
          %v5208 = vunpack.c.l.b16 %v5073
          %v5209 = vunpack.c.l.b16 %v5074
          %v5210 = vunpack.c.l.b16 %v5075
          %v5211 = vunpack.c.l.b16 %v5076
          %v5212 = vunpack.c.l.b16 %v5077
          %v5213 = vunpack.c.l.b16 %v5078
          %v5214 = vunpack.c.l.b16 %v5079
          %v5215 = vunpack.c.l.b16 %v5080
          %v5216 = vunpack.c.l.b16 %v5081
          %v5217 = vunpack.c.l.b16 %v5082
          %v5218 = vunpack.c.l.b16 %v5083
          %v5219 = vunpack.c.l.b16 %v5084
          %v5220 = vunpack.c.l.b16 %v5085
          %v5221 = vunpack.c.l.b16 %v5086
          %v5222 = vunpack.c.l.b16 %v5087
          %v5223 = vunpack.c.l.b16 %v5088
          %v5224 = vunpack.c.l.b16 %v5089
          %v5225 = vunpack.c.l.b16 %v5090
          %v5226 = vunpack.c.l.b16 %v5091
          %v5227 = vunpack.c.l.b16 %v5092
          %v5228 = vunpack.c.l.b16 %v5093
          %v5229 = vunpack.c.l.b16 %v5094
          %v5230 = vunpack.c.l.b16 %v5095
          %v5231 = vunpack.c.l.b16 %v5096
          %v5232 = vunpack.c.l.b16 %v5097
          %v5233 = vunpack.c.l.b16 %v5098
          %v5234 = vunpack.c.l.b16 %v5099
          %v5235 = vunpack.c.l.b16 %v5100
          %v5236 = vunpack.c.l.b16 %v5101
          %v5237 = vunpack.c.l.b16 %v5102
          %v5238 = vunpack.c.l.b16 %v5103
          %v5239 = vunpack.c.l.b16 %v5104
          %v5240 = vunpack.c.l.b16 %v5105
          %v5241 = vunpack.c.l.b16 %v5106
          %v5242 = vunpack.c.l.b16 %v5107
          %v5243 = vunpack.c.l.b16 %v5108
          %v5244 = vunpack.c.l.b16 %v5109
          %v5245 = vunpack.c.l.b16 %v5110
          %v5246 = vunpack.c.l.b16 %v5111
          %v5247 = vunpack.c.l.b16 %v5112
          %v5248 = vunpack.c.l.b16 %v5113
          %v5249 = vunpack.c.l.b16 %v5114
          %v5250 = vunpack.c.l.b16 %v5115
          %v5251 = vpack.c.b16 %v5188, %v5187
          %v5252 = vpack.c.b16 %v5190, %v5189
          %v5253 = vpack.c.b16 %v5192, %v5191
          %v5254 = vpack.c.b16 %v5194, %v5193
          %v5255 = vpack.c.b16 %v5196, %v5195
          %v5256 = vpack.c.b16 %v5198, %v5197
          %v5257 = vpack.c.b16 %v5200, %v5199
          %v5258 = vpack.c.b16 %v5202, %v5201
          %v5259 = vpack.c.b16 %v5204, %v5203
          %v5260 = vpack.c.b16 %v5206, %v5205
          %v5261 = vpack.c.b16 %v5208, %v5207
          %v5262 = vpack.c.b16 %v5210, %v5209
          %v5263 = vpack.c.b16 %v5212, %v5211
          %v5264 = vpack.c.b16 %v5214, %v5213
          %v5265 = vpack.c.b16 %v5216, %v5215
          %v5266 = vpack.c.b16 %v5218, %v5217
          %v5267 = vpack.c.b16 %v5220, %v5219
          %v5268 = vpack.c.b16 %v5222, %v5221
          %v5269 = vpack.c.b16 %v5224, %v5223
          %v5270 = vpack.c.b16 %v5226, %v5225
          %v5271 = vpack.c.b16 %v5228, %v5227
          %v5272 = vpack.c.b16 %v5230, %v5229
          %v5273 = vpack.c.b16 %v5232, %v5231
          %v5274 = vpack.c.b16 %v5234, %v5233
          %v5275 = vpack.c.b16 %v5236, %v5235
          %v5276 = vpack.c.b16 %v5238, %v5237
          %v5277 = vpack.c.b16 %v5240, %v5239
          %v5278 = vpack.c.b16 %v5242, %v5241
          %v5279 = vpack.c.b16 %v5244, %v5243
          %v5280 = vpack.c.b16 %v5246, %v5245
          %v5281 = vpack.c.b16 %v5248, %v5247
          %v5282 = vpack.c.b16 %v5250, %v5249
          %5315 = vmatprep.subr.bf16.mxu0 0
          %5316 = vmatpush1.bf16.msra.mxu0 %v5258
          %5317 = vmatprep.subr.bf16.mxu0 0
          %5318 = vmatpush1.bf16.msra.mxu0 %v5257
          %5319 = vmatprep.subr.bf16.mxu0 0
          %5320 = vmatpush1.bf16.msra.mxu0 %v5256
          %5321 = vmatprep.subr.bf16.mxu0 0
          %5322 = vmatpush1.bf16.msra.mxu0 %v5255
          %5323 = vmatprep.subr.bf16.mxu0 0
          %5324 = vmatpush1.bf16.msra.mxu0 %v5254
          %5325 = vmatprep.subr.bf16.mxu0 0
          %5326 = vmatpush1.bf16.msra.mxu0 %v5253
          %5327 = vmatprep.subr.bf16.mxu0 0
          %5328 = vmatpush1.bf16.msra.mxu0 %v5252
          %5329 = vmatprep.subr.bf16.mxu0 0
          %5330 = vmatpush1.bf16.msra.mxu0 %v5251
          %5331 = vmatprep.subr.bf16.mxu0 0
          %5332 = vmatpush2.bf16.msra.mxu0 %v5266
          %5333 = vmatprep.subr.bf16.mxu0 0
          %5334 = vmatpush2.bf16.msra.mxu0 %v5265
          %5335 = vmatprep.subr.bf16.mxu0 0
          %5336 = vmatpush2.bf16.msra.mxu0 %v5264
          %5337 = vmatprep.subr.bf16.mxu0 0
          %5338 = vmatpush2.bf16.msra.mxu0 %v5263
          %5339 = vmatprep.subr.bf16.mxu0 0
          %5340 = vmatpush2.bf16.msra.mxu0 %v5262
          %5341 = vmatprep.subr.bf16.mxu0 0
          %5342 = vmatpush2.bf16.msra.mxu0 %v5261
          %5343 = vmatprep.subr.bf16.mxu0 0
          %5344 = vmatpush2.bf16.msra.mxu0 %v5260
          %5345 = vmatprep.subr.bf16.mxu0 0
          %5346 = vmatpush2.bf16.msra.mxu0 %v5259
          %5347 = vmatprep.mubr.bf16.mxu0 %v5049
          %5348 = vmatmul.mubr.bf16.gmra.mxu0 %v5048
          %v5349 = vpop.f32.mrf.mxu0
          %v5350 = vadd.f32 %v5121, %v5349
          %v5351 = vpop.f32.mrf.mxu0
          %v5352 = vpop.f32.mrf.mxu0
          %v5353 = vpop.f32.mrf.mxu0
          %5354 = vdwg.mxu0
          %5355 = vmatprep.subr.bf16.mxu0 0
          %5356 = vmatpush1.bf16.msra.mxu0 %v5274
          %5357 = vmatprep.subr.bf16.mxu0 0
          %5358 = vmatpush1.bf16.msra.mxu0 %v5273
          %5359 = vmatprep.subr.bf16.mxu0 0
          %5360 = vmatpush1.bf16.msra.mxu0 %v5272
          %5361 = vmatprep.subr.bf16.mxu0 0
          %5362 = vmatpush1.bf16.msra.mxu0 %v5271
          %5363 = vmatprep.subr.bf16.mxu0 0
          %5364 = vmatpush1.bf16.msra.mxu0 %v5270
          %5365 = vmatprep.subr.bf16.mxu0 0
          %5366 = vmatpush1.bf16.msra.mxu0 %v5269
          %5367 = vmatprep.subr.bf16.mxu0 0
          %5368 = vmatpush1.bf16.msra.mxu0 %v5268
          %5369 = vmatprep.subr.bf16.mxu0 0
          %5370 = vmatpush1.bf16.msra.mxu0 %v5267
          %5371 = vmatprep.subr.bf16.mxu0 0
          %5372 = vmatpush2.bf16.msra.mxu0 %v5282
          %5373 = vmatprep.subr.bf16.mxu0 0
          %5374 = vmatpush2.bf16.msra.mxu0 %v5281
          %5375 = vmatprep.subr.bf16.mxu0 0
          %5376 = vmatpush2.bf16.msra.mxu0 %v5280
          %5377 = vmatprep.subr.bf16.mxu0 0
          %5378 = vmatpush2.bf16.msra.mxu0 %v5279
          %5379 = vmatprep.subr.bf16.mxu0 0
          %5380 = vmatpush2.bf16.msra.mxu0 %v5278
          %5381 = vmatprep.subr.bf16.mxu0 0
          %5382 = vmatpush2.bf16.msra.mxu0 %v5277
          %5383 = vmatprep.subr.bf16.mxu0 0
          %5384 = vmatpush2.bf16.msra.mxu0 %v5276
          %5385 = vmatprep.subr.bf16.mxu0 0
          %5386 = vmatpush2.bf16.msra.mxu0 %v5275
          %5387 = vmatprep.mubr.bf16.mxu0 %v5051
          %5388 = vmatmul.mubr.bf16.gmra.mxu0 %v5050
          %v5389 = vpop.f32.mrf.mxu0
          %v5390 = vadd.f32 %v5350, %v5389
          %v5391 = vpop.f32.mrf.mxu0
          %v5392 = vpop.f32.mrf.mxu0
          %v5393 = vpop.f32.mrf.mxu0
          %5394 = vdwg.mxu0
          %v5395 = vmul.f32 %v5390, 1.442695
          %v5396 = vpow.pop %v5395
          %v5397 = vadd.f32 %v5396, 1.0
          %5398 = vst [vmem:[%s715] sm:$0x3] %v5397
        $region116: #{tpu_custom_call.1} parent=63 // pred_fallthru
          _
        %s5399 = sand.u32 %s332, 1
        %s5400 = scalar_lea.sflag [#allocation6], %s5399
        %s5401 = sand.u32 %s332, 1
        %s5402 = smul.addr %s5401, 2
        %s5403 = scalar_lea.vmem [#allocation22], %s5402
        // Predicated region
        $region117: #{tpu_custom_call.1} parent=63 // pred_check
          %p5404 = pneg %p342
        $region118: #{tpu_custom_call.1} parent=63 // pred_check_branch
          %5406 = sbr.rel (%p5404) target = $region120
        $region119: #{tpu_custom_call.1} parent=63 // pred_region
          %s5408 = ssub.s32 32, 32
          %5409 = vsyncadd %s5400, %s5408
          %s5410 = smul.addr %s43, 32
          %s5411 = scalar_lea.hbm %s11, %s5410
          %s5413 = sshll.u32 %s5403, 4
          %s5414 = int_to_ptr.vmem [resolvable:$true] %s5413
          %5416 = dma.vmem_to_hbm [thread:$0]  %s5414, 32, %s5411, %s5400
        $region120: #{tpu_custom_call.1} parent=63 // pred_fallthru
          _
      $region64: #{tpu_custom_call.1} parent=5 // pred_fallthru
        _
      %p5417 = scmp.le.s32.totalorder 2, %s34
      // Predicated region
      $region121: #{tpu_custom_call.1} parent=5 // pred_check
        %p5418 = pneg %p5417
      $region122: #{tpu_custom_call.1} parent=5 // pred_check_branch
        %5420 = sbr.rel (%p5418) target = $region124
      $region123: #{tpu_custom_call.1} parent=5 // pred_region
        %s5421 = ssub.s32 %s34, 2
        // Predicated region
        $region125: #{tpu_custom_call.1} parent=123 // pred_check
          %p5422 = pneg %p348
        $region126: #{tpu_custom_call.1} parent=123 // pred_check_branch
          %5424 = sbr.rel (%p5422) target = $region128
        $region127: #{tpu_custom_call.1} parent=123 // pred_region
          %s5425 = sand.u32 %s333, 1
          %s5426 = scalar_lea.sflag [#allocation6], %s5425
          %s5427 = sand.u32 %s333, 1
          %s5428 = smul.addr %s5427, 2
          %s5429 = scalar_lea.vmem [#allocation22], %s5428
          %5430 = dma.done %s5426, 32
        $region128: #{tpu_custom_call.1} parent=123 // pred_fallthru
          _
      $region124: #{tpu_custom_call.1} parent=5 // pred_fallthru
        _
    $region6: #{tpu_custom_call.1} parent=1 // loop_footer
      %s38 = sadd.s32 1, %s34
    $region7: #{tpu_custom_call.1} parent=1 // loop_footer_branch
      %33 = sbr.rel target = $region3
    $region8: #{tpu_custom_call.1} parent=1 // loop_exit
      _
    %5431 = vsyncpa [#allocation5], 1
    %s5432 = scalar_lea.sflag [#allocation5], 1
    %5433 = vsyncpa %s5432, 1
    %5434 = vsyncpa [#allocation8], 1
    %5435 = vsyncpa [#allocation11], 1
    %s5436 = scalar_lea.sflag [#allocation11], 1
    %5437 = vsyncpa %s5436, 1
    %5438 = vsyncpa [#allocation14], 1
    %s5439 = scalar_lea.sflag [#allocation14], 1
    %5440 = vsyncpa %s5439, 1
    %5441 = vsyncpa [#allocation17], 1
    %s5442 = scalar_lea.sflag [#allocation17], 1
    %5443 = vsyncpa %s5442, 1
    %5444 = vsyncpa [#allocation20], 1
    %s5445 = scalar_lea.sflag [#allocation20], 1
    %5446 = vsyncpa %s5445, 1
    %5447 = vsyncpa [#allocation6], 1
    %s5448 = scalar_lea.sflag [#allocation6], 1
    %5449 = vsyncpa %s5448, 1

</llo_original>
